<compile_context>
chip_gen: v7x
topology: tpu7x:2x2x1
jax: 0.10.0
libtpu: 0.0.40
codegen_flags: <defaults>
</compile_context>

<pallas_src>
import jax
import jax.numpy as jnp
from jax.experimental import pallas as pl
from jax.experimental.pallas import tpu as pltpu

_NEG_BIG = -1e30        # bias fill for padded vocab columns (exp() underflows to 0)
_GATHER_B_TILE = 8      # gather kernel unrolls GATHER_B_TILE * C DMAs per step


def _round_up(x, m):
    return ((x + m - 1) // m) * m


# --------------------------------------------------------------------------
# Stage 1: in-kernel embedding gather + mean (batched DMAs, wait once).
# --------------------------------------------------------------------------
def _make_gather_mean_kernel(c_ctx, b_tile):
    inv_c = 1.0 / float(c_ctx)

    def kernel(ctx_ref,        # SMEM  (B_pad*C,) int32   -- scalar prefetch
               emb_hbm,        # ANY   (V+1, D_pad) f32   -- stays in HBM
               xmean_ref,      # out   (B_TILE, D_pad) bf16
               land_ref,       # scratch (B_TILE*C, D_pad) f32  landing buffer
               sems):          # scratch DMA semaphores (B_TILE*C,)
        bi = pl.program_id(0)
        base = bi * (b_tile * c_ctx)

        # Issue ALL row-gather DMAs first (latencies overlap), then wait once.
        copies = []
        for bl in range(b_tile):
            for c in range(c_ctx):
                idx = ctx_ref[base + bl * c_ctx + c]
                r = c * b_tile + bl        # c-major: rows of one context slot contiguous
                cp = pltpu.make_async_copy(
                    emb_hbm.at[pl.ds(idx, 1), :],
                    land_ref.at[pl.ds(r, 1), :],
                    sems.at[r])
                cp.start()
                copies.append(cp)
        for cp in copies:
            cp.wait()

        # Vectorized mean over the C context slots (f32), cast once to bf16.
        acc = land_ref[0:b_tile, :]
        for c in range(1, c_ctx):
            acc = acc + land_ref[c * b_tile:(c + 1) * b_tile, :]
        xmean_ref[...] = (acc * inv_c).astype(xmean_ref.dtype)

    return kernel


# --------------------------------------------------------------------------
# Stage 2: streaming matmul (bf16 on MXU, f32 acc) + online log-sum-exp.
# --------------------------------------------------------------------------
def _main_kernel(xmean_ref,    # VMEM (B_TILE, D_pad) bf16
                 w_ref,        # VMEM (D_pad, TN)     bf16
                 bias_ref,     # VMEM (1, TN)         f32
                 logits_ref,   # out  (B_TILE, TN)    f32
                 lse_ref,      # out  (B_TILE, 1)     f32
                 m_ref,        # scratch (B_TILE, 1)  f32 running max
                 l_ref):       # scratch (B_TILE, 1)  f32 running sum-exp
    vi = pl.program_id(1)

    @pl.when(vi == 0)
    def _init():
        m_ref[...] = jnp.full(m_ref.shape, -jnp.inf, dtype=jnp.float32)
        l_ref[...] = jnp.zeros(l_ref.shape, dtype=jnp.float32)

    logits = jnp.dot(xmean_ref[...], w_ref[...],
                     preferred_element_type=jnp.float32) + bias_ref[...]
    logits_ref[...] = logits

    m_prev = m_ref[...]
    m_new = jnp.maximum(m_prev, jnp.max(logits, axis=1, keepdims=True))
    l_ref[...] = (l_ref[...] * jnp.exp(m_prev - m_new)
                  + jnp.sum(jnp.exp(logits - m_new), axis=1, keepdims=True))
    m_ref[...] = m_new

    @pl.when(vi == pl.num_programs(1) - 1)
    def _finish():
        lse_ref[...] = m_ref[...] + jnp.log(l_ref[...])


# --------------------------------------------------------------------------
# Wrapper
# --------------------------------------------------------------------------
def word2vec_forward(context, emb_table, weight, bias, *, b_tile=None, v_tile=2048):
    """CBOW forward.

    context:   (B, C) int32, indices in [0, corpus_size]; corpus_size == padding_idx
    emb_table: (corpus_size + 1, D) f32, padding row zeroed
    weight:    (corpus_size, D) f32   (PyTorch nn.Linear layout: (out, in))
    bias:      (corpus_size,)  f32
    returns:   (B, corpus_size) f32 log-probabilities
    """
    B, C = context.shape
    D = emb_table.shape[1]
    V = weight.shape[0]
    padding_idx = emb_table.shape[0] - 1          # == corpus_size (zero row)

    D_pad = _round_up(D, 128)

    # ---- Tile selection -------------------------------------------------
    if b_tile is None:
        # Large B tiles amortize re-streaming the weight from HBM; keep >=2
        # B tiles so v7x can shard the "parallel" axis over its 2 TensorCores.
        b_tile = 8 if B <= 16 else min(128, _round_up((B + 1) // 2, 8))
    b_tile = max(8, _round_up(b_tile, 8))
    B_pad = _round_up(B, b_tile)

    TN = min(_round_up(v_tile, 128), _round_up(V, 128))

    def _vmem_bytes(tn):
        return (2 * D_pad * tn * 2          # weight tile, double-buffered, bf16
                + 2 * b_tile * tn * 4       # logits out tile, double-buffered, f32
                + 2 * tn * 4                # bias tile
                + 2 * b_tile * D_pad * 2    # xmean in tile
                + 4 * b_tile * 4)           # lse out + m/l scratch

    # Stay within ~40 MiB so the same tiles also fit v7x's 64 MiB VMEM.
    while TN > 128 and _vmem_bytes(TN) > 40 * 1024 * 1024:
        TN -= 128
    V_pad = _round_up(V, TN)
    # No vocab tile may be entirely padding (padded cols carry -1e30 bias and
    # an all-padding tile would blow up the online LSE).  Holds by construction.
    assert V_pad - V < TN

    # ---- plain-JAX glue: dtype casts + geometry padding only (no gather). ---
    emb_p = jnp.pad(emb_table.astype(jnp.float32),
                    ((0, 0), (0, D_pad - D)))                              # (V+1, D_pad) f32
    w_t_p = jnp.pad(weight.astype(jnp.float32).T,
                    ((0, D_pad - D), (0, V_pad - V))).astype(jnp.bfloat16)  # (D_pad, V_pad)
    bias_p = jnp.pad(bias.astype(jnp.float32), (0, V_pad - V),
                     constant_values=_NEG_BIG).reshape(1, V_pad)
    ctx_p = jnp.pad(context.astype(jnp.int32), ((0, B_pad - B), (0, 0)),
                    constant_values=padding_idx)
    ctx_flat = ctx_p.reshape(-1)                  # 1-D SMEM scalar-prefetch operand

    # ---- Stage 1: gather + mean -> xmean (B_pad, D_pad) bf16 ---------------
    gb = _GATHER_B_TILE
    xmean = pl.pallas_call(
        _make_gather_mean_kernel(C, gb),
        out_shape=jax.ShapeDtypeStruct((B_pad, D_pad), jnp.bfloat16),
        grid_spec=pltpu.PrefetchScalarGridSpec(
            num_scalar_prefetch=1,
            grid=(B_pad // gb,),
            in_specs=[pl.BlockSpec(memory_space=pl.ANY)],                  # emb table (HBM)
            out_specs=pl.BlockSpec((gb, D_pad), lambda bi, ctx: (bi, 0)),
            scratch_shapes=[
                pltpu.VMEM((gb * C, D_pad), jnp.float32),                  # landing buffer
                pltpu.SemaphoreType.DMA((gb * C,)),
            ],
        ),
        compiler_params=pltpu.CompilerParams(
            dimension_semantics=("parallel",)),
        cost_estimate=pl.CostEstimate(
            flops=B_pad * C * D_pad,
            transcendentals=0,
            bytes_accessed=B_pad * C * D_pad * 4 + B_pad * D_pad * 2),
    )(ctx_flat, emb_p)

    # ---- Stage 2: streaming logits + online LSE ----------------------------
    grid = (B_pad // b_tile, V_pad // TN)
    vmem_limit = int(min(48 * 1024 * 1024,
                         max(32 * 1024 * 1024, 1.5 * _vmem_bytes(TN))))

    logits_full, lse = pl.pallas_call(
        _main_kernel,
        out_shape=(
            jax.ShapeDtypeStruct((B_pad, V_pad), jnp.float32),
            jax.ShapeDtypeStruct((B_pad, 1), jnp.float32),
        ),
        grid=grid,
        in_specs=(
            pl.BlockSpec((b_tile, D_pad), lambda bi, vi: (bi, 0)),         # xmean
            pl.BlockSpec((D_pad, TN), lambda bi, vi: (0, vi)),             # weight tile
            pl.BlockSpec((1, TN), lambda bi, vi: (0, vi)),                 # bias tile
        ),
        out_specs=(
            pl.BlockSpec((b_tile, TN), lambda bi, vi: (bi, vi)),           # logits
            pl.BlockSpec((b_tile, 1), lambda bi, vi: (bi, 0)),             # lse
        ),
        scratch_shapes=[
            pltpu.VMEM((b_tile, 1), jnp.float32),                          # running max
            pltpu.VMEM((b_tile, 1), jnp.float32),                          # running sum-exp
        ],
        compiler_params=pltpu.CompilerParams(
            dimension_semantics=("parallel", "arbitrary"),
            vmem_limit_bytes=vmem_limit),
        cost_estimate=pl.CostEstimate(
            flops=2 * B_pad * D_pad * V_pad,
            transcendentals=B_pad * V_pad,
            bytes_accessed=((B_pad // b_tile) * D_pad * V_pad * 2
                            + B_pad * V_pad * 4 + B_pad * D_pad * 2
                            + V_pad * 4 + B_pad * 4)),
    )(xmean, w_t_p, bias_p)

    # ---- Stage 3: log_softmax finalize + un-pad (fused by XLA) -------------
    return logits_full[:B, :V] - lse[:B]


def init_params(key, corpus_size, em_dimensions):
    """Parameter init mirroring PyTorch defaults (shapes/distributions)."""
    k_emb, k_w, k_b = jax.random.split(key, 3)
    emb = jax.random.normal(k_emb, (corpus_size + 1, em_dimensions), jnp.float32)
    emb = emb.at[corpus_size].set(0.0)                 # padding_idx row zeroed
    bound = 1.0 / (em_dimensions ** 0.5)
    w = jax.random.uniform(k_w, (corpus_size, em_dimensions), jnp.float32,
                           minval=-bound, maxval=bound)   # (out, in) like PyTorch
    b = jax.random.uniform(k_b, (corpus_size,), jnp.float32,
                           minval=-bound, maxval=bound)
    return emb, w, b


def reference_forward(context, emb_table, weight, bias):
    x = jnp.take(emb_table, context, axis=0)       # (B, C, D)
    x = jnp.mean(x, axis=1)                        # (B, D)
    logits = x @ weight.T + bias                   # (B, V)
    return jax.nn.log_softmax(logits, axis=1)


if __name__ == "__main__":
    corpus_size = 1000     # vocab V  (pads to 1024 -> 1 vocab tile)
    em_dimensions = 96     # D        (pads to 128)
    B, C = 12, 5           # batch (pads to 16 -> 2 B tiles of 8), context window

    key = jax.random.PRNGKey(0)
    k_params, k_ctx = jax.random.split(key)
    emb_table, w, b = init_params(k_params, corpus_size, em_dimensions)

    # Context indices in [0, corpus_size]; corpus_size is the padding index.
    context = jax.random.randint(k_ctx, (B, C), 0, corpus_size + 1, dtype=jnp.int32)

    out = word2vec_forward(context, emb_table, w, b)
    out = jax.block_until_ready(out)

    assert out.shape == (B, corpus_size)
    # Rows of a log-softmax must exponentiate-sum to 1.
    row_sums = jnp.sum(jnp.exp(out), axis=1)
    assert bool(jnp.all(jnp.abs(row_sums - 1.0) < 1e-3)), row_sums
    # Match the f32 reference within bf16-matmul tolerance.
    ref = reference_forward(context, emb_table, w, b)
    max_err = float(jnp.max(jnp.abs(out - ref)))
    assert max_err < 3e-2, max_err

    print("KERNEL_OK")
</pallas_src>

<mosaic_0001>
module attributes {stable_mosaic.version = 11 : i64} {
  func.func @kernel(%arg0: i32, %arg1: memref<80xi32, #tpu.memory_space<smem>>, %arg2: memref<1001x128xf32, #tpu.memory_space<any>>, %arg3: memref<8x128xbf16, #tpu.memory_space<vmem>>, %arg4: memref<40x128xf32, #tpu.memory_space<vmem>>, %arg5: memref<40x!tpu.dma_semaphore, #tpu.memory_space<semaphore_mem>>) attributes {dimension_semantics = [#tpu.dimension_semantics<parallel>], iteration_bounds = array<i64: 2>, scalar_prefetch = 1 : i64, scratch_operands = 2 : i64, tpu.core_type = #tpu.core_type<tc>, window_params = [{}, {transform_indices = @transform_1, window_bounds = array<i64: 8, 128>}]} {
    %c40_i32 = arith.constant 40 : i32
    %0 = arith.muli %arg0, %c40_i32 : i32
    %c0_i32 = arith.constant 0 : i32
    %1 = arith.addi %0, %c0_i32 : i32
    %c0_i32_0 = arith.constant 0 : i32
    %2 = arith.addi %1, %c0_i32_0 : i32
    %3 = arith.index_cast %2 : i32 to index
    %4 = memref.load %arg1[%3] : memref<80xi32, #tpu.memory_space<smem>>
    %c0_i32_1 = arith.constant 0 : i32
    %c0_i32_2 = arith.constant 0 : i32
    %5 = tpu.memref_slice %arg2[%4, %c0_i32_2] : memref<1001x128xf32, #tpu.memory_space<any>> -> memref<1x128xf32, #tpu.memory_space<any>>
    %c0_i32_3 = arith.constant 0 : i32
    %c0_i32_4 = arith.constant 0 : i32
    %6 = tpu.memref_slice %arg4[%c0_i32_3, %c0_i32_4] : memref<40x128xf32, #tpu.memory_space<vmem>> -> memref<1x128xf32, #tpu.memory_space<vmem>>
    %7 = tpu.memref_slice %arg5[%c0_i32_1] : memref<40x!tpu.dma_semaphore, #tpu.memory_space<semaphore_mem>> -> memref<1x!tpu.dma_semaphore, #tpu.memory_space<semaphore_mem>>
    %8 = tpu.memref_squeeze %7 : memref<1x!tpu.dma_semaphore, #tpu.memory_space<semaphore_mem>> -> memref<!tpu.dma_semaphore, #tpu.memory_space<semaphore_mem>>
    tpu.enqueue_dma source(%5 : memref<1x128xf32, #tpu.memory_space<any>>) target(%6 : memref<1x128xf32, #tpu.memory_space<vmem>>) target_semaphore(%8 : memref<!tpu.dma_semaphore, #tpu.memory_space<semaphore_mem>>)
    %c0_i32_5 = arith.constant 0 : i32
    %9 = arith.addi %0, %c0_i32_5 : i32
    %c1_i32 = arith.constant 1 : i32
    %10 = arith.addi %9, %c1_i32 : i32
    %11 = arith.index_cast %10 : i32 to index
    %12 = memref.load %arg1[%11] : memref<80xi32, #tpu.memory_space<smem>>
    %c8_i32 = arith.constant 8 : i32
    %c0_i32_6 = arith.constant 0 : i32
    %13 = tpu.memref_slice %arg2[%12, %c0_i32_6] : memref<1001x128xf32, #tpu.memory_space<any>> -> memref<1x128xf32, #tpu.memory_space<any>>
    %c8_i32_7 = arith.constant 8 : i32
    %c0_i32_8 = arith.constant 0 : i32
    %14 = tpu.memref_slice %arg4[%c8_i32_7, %c0_i32_8] : memref<40x128xf32, #tpu.memory_space<vmem>> -> memref<1x128xf32, #tpu.memory_space<vmem>>
    %15 = tpu.memref_slice %arg5[%c8_i32] : memref<40x!tpu.dma_semaphore, #tpu.memory_space<semaphore_mem>> -> memref<1x!tpu.dma_semaphore, #tpu.memory_space<semaphore_mem>>
    %16 = tpu.memref_squeeze %15 : memref<1x!tpu.dma_semaphore, #tpu.memory_space<semaphore_mem>> -> memref<!tpu.dma_semaphore, #tpu.memory_space<semaphore_mem>>
    tpu.enqueue_dma source(%13 : memref<1x128xf32, #tpu.memory_space<any>>) target(%14 : memref<1x128xf32, #tpu.memory_space<vmem>>) target_semaphore(%16 : memref<!tpu.dma_semaphore, #tpu.memory_space<semaphore_mem>>)
    %c0_i32_9 = arith.constant 0 : i32
    %17 = arith.addi %0, %c0_i32_9 : i32
    %c2_i32 = arith.constant 2 : i32
    %18 = arith.addi %17, %c2_i32 : i32
    %19 = arith.index_cast %18 : i32 to index
    %20 = memref.load %arg1[%19] : memref<80xi32, #tpu.memory_space<smem>>
    %c16_i32 = arith.constant 16 : i32
    %c0_i32_10 = arith.constant 0 : i32
    %21 = tpu.memref_slice %arg2[%20, %c0_i32_10] : memref<1001x128xf32, #tpu.memory_space<any>> -> memref<1x128xf32, #tpu.memory_space<any>>
    %c16_i32_11 = arith.constant 16 : i32
    %c0_i32_12 = arith.constant 0 : i32
    %22 = tpu.memref_slice %arg4[%c16_i32_11, %c0_i32_12] : memref<40x128xf32, #tpu.memory_space<vmem>> -> memref<1x128xf32, #tpu.memory_space<vmem>>
    %23 = tpu.memref_slice %arg5[%c16_i32] : memref<40x!tpu.dma_semaphore, #tpu.memory_space<semaphore_mem>> -> memref<1x!tpu.dma_semaphore, #tpu.memory_space<semaphore_mem>>
    %24 = tpu.memref_squeeze %23 : memref<1x!tpu.dma_semaphore, #tpu.memory_space<semaphore_mem>> -> memref<!tpu.dma_semaphore, #tpu.memory_space<semaphore_mem>>
    tpu.enqueue_dma source(%21 : memref<1x128xf32, #tpu.memory_space<any>>) target(%22 : memref<1x128xf32, #tpu.memory_space<vmem>>) target_semaphore(%24 : memref<!tpu.dma_semaphore, #tpu.memory_space<semaphore_mem>>)
    %c0_i32_13 = arith.constant 0 : i32
    %25 = arith.addi %0, %c0_i32_13 : i32
    %c3_i32 = arith.constant 3 : i32
    %26 = arith.addi %25, %c3_i32 : i32
    %27 = arith.index_cast %26 : i32 to index
    %28 = memref.load %arg1[%27] : memref<80xi32, #tpu.memory_space<smem>>
    %c24_i32 = arith.constant 24 : i32
    %c0_i32_14 = arith.constant 0 : i32
    %29 = tpu.memref_slice %arg2[%28, %c0_i32_14] : memref<1001x128xf32, #tpu.memory_space<any>> -> memref<1x128xf32, #tpu.memory_space<any>>
    %c24_i32_15 = arith.constant 24 : i32
    %c0_i32_16 = arith.constant 0 : i32
    %30 = tpu.memref_slice %arg4[%c24_i32_15, %c0_i32_16] : memref<40x128xf32, #tpu.memory_space<vmem>> -> memref<1x128xf32, #tpu.memory_space<vmem>>
    %31 = tpu.memref_slice %arg5[%c24_i32] : memref<40x!tpu.dma_semaphore, #tpu.memory_space<semaphore_mem>> -> memref<1x!tpu.dma_semaphore, #tpu.memory_space<semaphore_mem>>
    %32 = tpu.memref_squeeze %31 : memref<1x!tpu.dma_semaphore, #tpu.memory_space<semaphore_mem>> -> memref<!tpu.dma_semaphore, #tpu.memory_space<semaphore_mem>>
    tpu.enqueue_dma source(%29 : memref<1x128xf32, #tpu.memory_space<any>>) target(%30 : memref<1x128xf32, #tpu.memory_space<vmem>>) target_semaphore(%32 : memref<!tpu.dma_semaphore, #tpu.memory_space<semaphore_mem>>)
    %c0_i32_17 = arith.constant 0 : i32
    %33 = arith.addi %0, %c0_i32_17 : i32
    %c4_i32 = arith.constant 4 : i32
    %34 = arith.addi %33, %c4_i32 : i32
    %35 = arith.index_cast %34 : i32 to index
    %36 = memref.load %arg1[%35] : memref<80xi32, #tpu.memory_space<smem>>
    %c32_i32 = arith.constant 32 : i32
    %c0_i32_18 = arith.constant 0 : i32
    %37 = tpu.memref_slice %arg2[%36, %c0_i32_18] : memref<1001x128xf32, #tpu.memory_space<any>> -> memref<1x128xf32, #tpu.memory_space<any>>
    %c32_i32_19 = arith.constant 32 : i32
    %c0_i32_20 = arith.constant 0 : i32
    %38 = tpu.memref_slice %arg4[%c32_i32_19, %c0_i32_20] : memref<40x128xf32, #tpu.memory_space<vmem>> -> memref<1x128xf32, #tpu.memory_space<vmem>>
    %39 = tpu.memref_slice %arg5[%c32_i32] : memref<40x!tpu.dma_semaphore, #tpu.memory_space<semaphore_mem>> -> memref<1x!tpu.dma_semaphore, #tpu.memory_space<semaphore_mem>>
    %40 = tpu.memref_squeeze %39 : memref<1x!tpu.dma_semaphore, #tpu.memory_space<semaphore_mem>> -> memref<!tpu.dma_semaphore, #tpu.memory_space<semaphore_mem>>
    tpu.enqueue_dma source(%37 : memref<1x128xf32, #tpu.memory_space<any>>) target(%38 : memref<1x128xf32, #tpu.memory_space<vmem>>) target_semaphore(%40 : memref<!tpu.dma_semaphore, #tpu.memory_space<semaphore_mem>>)
    %c5_i32 = arith.constant 5 : i32
    %41 = arith.addi %0, %c5_i32 : i32
    %c0_i32_21 = arith.constant 0 : i32
    %42 = arith.addi %41, %c0_i32_21 : i32
    %43 = arith.index_cast %42 : i32 to index
    %44 = memref.load %arg1[%43] : memref<80xi32, #tpu.memory_space<smem>>
    %c1_i32_22 = arith.constant 1 : i32
    %c0_i32_23 = arith.constant 0 : i32
    %45 = tpu.memref_slice %arg2[%44, %c0_i32_23] : memref<1001x128xf32, #tpu.memory_space<any>> -> memref<1x128xf32, #tpu.memory_space<any>>
    %c1_i32_24 = arith.constant 1 : i32
    %c0_i32_25 = arith.constant 0 : i32
    %46 = tpu.memref_slice %arg4[%c1_i32_24, %c0_i32_25] : memref<40x128xf32, #tpu.memory_space<vmem>> -> memref<1x128xf32, #tpu.memory_space<vmem>>
    %47 = tpu.memref_slice %arg5[%c1_i32_22] : memref<40x!tpu.dma_semaphore, #tpu.memory_space<semaphore_mem>> -> memref<1x!tpu.dma_semaphore, #tpu.memory_space<semaphore_mem>>
    %48 = tpu.memref_squeeze %47 : memref<1x!tpu.dma_semaphore, #tpu.memory_space<semaphore_mem>> -> memref<!tpu.dma_semaphore, #tpu.memory_space<semaphore_mem>>
    tpu.enqueue_dma source(%45 : memref<1x128xf32, #tpu.memory_space<any>>) target(%46 : memref<1x128xf32, #tpu.memory_space<vmem>>) target_semaphore(%48 : memref<!tpu.dma_semaphore, #tpu.memory_space<semaphore_mem>>)
    %c5_i32_26 = arith.constant 5 : i32
    %49 = arith.addi %0, %c5_i32_26 : i32
    %c1_i32_27 = arith.constant 1 : i32
    %50 = arith.addi %49, %c1_i32_27 : i32
    %51 = arith.index_cast %50 : i32 to index
    %52 = memref.load %arg1[%51] : memref<80xi32, #tpu.memory_space<smem>>
    %c9_i32 = arith.constant 9 : i32
    %c0_i32_28 = arith.constant 0 : i32
    %53 = tpu.memref_slice %arg2[%52, %c0_i32_28] : memref<1001x128xf32, #tpu.memory_space<any>> -> memref<1x128xf32, #tpu.memory_space<any>>
    %c9_i32_29 = arith.constant 9 : i32
    %c0_i32_30 = arith.constant 0 : i32
    %54 = tpu.memref_slice %arg4[%c9_i32_29, %c0_i32_30] : memref<40x128xf32, #tpu.memory_space<vmem>> -> memref<1x128xf32, #tpu.memory_space<vmem>>
    %55 = tpu.memref_slice %arg5[%c9_i32] : memref<40x!tpu.dma_semaphore, #tpu.memory_space<semaphore_mem>> -> memref<1x!tpu.dma_semaphore, #tpu.memory_space<semaphore_mem>>
    %56 = tpu.memref_squeeze %55 : memref<1x!tpu.dma_semaphore, #tpu.memory_space<semaphore_mem>> -> memref<!tpu.dma_semaphore, #tpu.memory_space<semaphore_mem>>
    tpu.enqueue_dma source(%53 : memref<1x128xf32, #tpu.memory_space<any>>) target(%54 : memref<1x128xf32, #tpu.memory_space<vmem>>) target_semaphore(%56 : memref<!tpu.dma_semaphore, #tpu.memory_space<semaphore_mem>>)
    %c5_i32_31 = arith.constant 5 : i32
    %57 = arith.addi %0, %c5_i32_31 : i32
    %c2_i32_32 = arith.constant 2 : i32
    %58 = arith.addi %57, %c2_i32_32 : i32
    %59 = arith.index_cast %58 : i32 to index
    %60 = memref.load %arg1[%59] : memref<80xi32, #tpu.memory_space<smem>>
    %c17_i32 = arith.constant 17 : i32
    %c0_i32_33 = arith.constant 0 : i32
    %61 = tpu.memref_slice %arg2[%60, %c0_i32_33] : memref<1001x128xf32, #tpu.memory_space<any>> -> memref<1x128xf32, #tpu.memory_space<any>>
    %c17_i32_34 = arith.constant 17 : i32
    %c0_i32_35 = arith.constant 0 : i32
    %62 = tpu.memref_slice %arg4[%c17_i32_34, %c0_i32_35] : memref<40x128xf32, #tpu.memory_space<vmem>> -> memref<1x128xf32, #tpu.memory_space<vmem>>
    %63 = tpu.memref_slice %arg5[%c17_i32] : memref<40x!tpu.dma_semaphore, #tpu.memory_space<semaphore_mem>> -> memref<1x!tpu.dma_semaphore, #tpu.memory_space<semaphore_mem>>
    %64 = tpu.memref_squeeze %63 : memref<1x!tpu.dma_semaphore, #tpu.memory_space<semaphore_mem>> -> memref<!tpu.dma_semaphore, #tpu.memory_space<semaphore_mem>>
    tpu.enqueue_dma source(%61 : memref<1x128xf32, #tpu.memory_space<any>>) target(%62 : memref<1x128xf32, #tpu.memory_space<vmem>>) target_semaphore(%64 : memref<!tpu.dma_semaphore, #tpu.memory_space<semaphore_mem>>)
    %c5_i32_36 = arith.constant 5 : i32
    %65 = arith.addi %0, %c5_i32_36 : i32
    %c3_i32_37 = arith.constant 3 : i32
    %66 = arith.addi %65, %c3_i32_37 : i32
    %67 = arith.index_cast %66 : i32 to index
    %68 = memref.load %arg1[%67] : memref<80xi32, #tpu.memory_space<smem>>
    %c25_i32 = arith.constant 25 : i32
    %c0_i32_38 = arith.constant 0 : i32
    %69 = tpu.memref_slice %arg2[%68, %c0_i32_38] : memref<1001x128xf32, #tpu.memory_space<any>> -> memref<1x128xf32, #tpu.memory_space<any>>
    %c25_i32_39 = arith.constant 25 : i32
    %c0_i32_40 = arith.constant 0 : i32
    %70 = tpu.memref_slice %arg4[%c25_i32_39, %c0_i32_40] : memref<40x128xf32, #tpu.memory_space<vmem>> -> memref<1x128xf32, #tpu.memory_space<vmem>>
    %71 = tpu.memref_slice %arg5[%c25_i32] : memref<40x!tpu.dma_semaphore, #tpu.memory_space<semaphore_mem>> -> memref<1x!tpu.dma_semaphore, #tpu.memory_space<semaphore_mem>>
    %72 = tpu.memref_squeeze %71 : memref<1x!tpu.dma_semaphore, #tpu.memory_space<semaphore_mem>> -> memref<!tpu.dma_semaphore, #tpu.memory_space<semaphore_mem>>
    tpu.enqueue_dma source(%69 : memref<1x128xf32, #tpu.memory_space<any>>) target(%70 : memref<1x128xf32, #tpu.memory_space<vmem>>) target_semaphore(%72 : memref<!tpu.dma_semaphore, #tpu.memory_space<semaphore_mem>>)
    %c5_i32_41 = arith.constant 5 : i32
    %73 = arith.addi %0, %c5_i32_41 : i32
    %c4_i32_42 = arith.constant 4 : i32
    %74 = arith.addi %73, %c4_i32_42 : i32
    %75 = arith.index_cast %74 : i32 to index
    %76 = memref.load %arg1[%75] : memref<80xi32, #tpu.memory_space<smem>>
    %c33_i32 = arith.constant 33 : i32
    %c0_i32_43 = arith.constant 0 : i32
    %77 = tpu.memref_slice %arg2[%76, %c0_i32_43] : memref<1001x128xf32, #tpu.memory_space<any>> -> memref<1x128xf32, #tpu.memory_space<any>>
    %c33_i32_44 = arith.constant 33 : i32
    %c0_i32_45 = arith.constant 0 : i32
    %78 = tpu.memref_slice %arg4[%c33_i32_44, %c0_i32_45] : memref<40x128xf32, #tpu.memory_space<vmem>> -> memref<1x128xf32, #tpu.memory_space<vmem>>
    %79 = tpu.memref_slice %arg5[%c33_i32] : memref<40x!tpu.dma_semaphore, #tpu.memory_space<semaphore_mem>> -> memref<1x!tpu.dma_semaphore, #tpu.memory_space<semaphore_mem>>
    %80 = tpu.memref_squeeze %79 : memref<1x!tpu.dma_semaphore, #tpu.memory_space<semaphore_mem>> -> memref<!tpu.dma_semaphore, #tpu.memory_space<semaphore_mem>>
    tpu.enqueue_dma source(%77 : memref<1x128xf32, #tpu.memory_space<any>>) target(%78 : memref<1x128xf32, #tpu.memory_space<vmem>>) target_semaphore(%80 : memref<!tpu.dma_semaphore, #tpu.memory_space<semaphore_mem>>)
    %c10_i32 = arith.constant 10 : i32
    %81 = arith.addi %0, %c10_i32 : i32
    %c0_i32_46 = arith.constant 0 : i32
    %82 = arith.addi %81, %c0_i32_46 : i32
    %83 = arith.index_cast %82 : i32 to index
    %84 = memref.load %arg1[%83] : memref<80xi32, #tpu.memory_space<smem>>
    %c2_i32_47 = arith.constant 2 : i32
    %c0_i32_48 = arith.constant 0 : i32
    %85 = tpu.memref_slice %arg2[%84, %c0_i32_48] : memref<1001x128xf32, #tpu.memory_space<any>> -> memref<1x128xf32, #tpu.memory_space<any>>
    %c2_i32_49 = arith.constant 2 : i32
    %c0_i32_50 = arith.constant 0 : i32
    %86 = tpu.memref_slice %arg4[%c2_i32_49, %c0_i32_50] : memref<40x128xf32, #tpu.memory_space<vmem>> -> memref<1x128xf32, #tpu.memory_space<vmem>>
    %87 = tpu.memref_slice %arg5[%c2_i32_47] : memref<40x!tpu.dma_semaphore, #tpu.memory_space<semaphore_mem>> -> memref<1x!tpu.dma_semaphore, #tpu.memory_space<semaphore_mem>>
    %88 = tpu.memref_squeeze %87 : memref<1x!tpu.dma_semaphore, #tpu.memory_space<semaphore_mem>> -> memref<!tpu.dma_semaphore, #tpu.memory_space<semaphore_mem>>
    tpu.enqueue_dma source(%85 : memref<1x128xf32, #tpu.memory_space<any>>) target(%86 : memref<1x128xf32, #tpu.memory_space<vmem>>) target_semaphore(%88 : memref<!tpu.dma_semaphore, #tpu.memory_space<semaphore_mem>>)
    %c10_i32_51 = arith.constant 10 : i32
    %89 = arith.addi %0, %c10_i32_51 : i32
    %c1_i32_52 = arith.constant 1 : i32
    %90 = arith.addi %89, %c1_i32_52 : i32
    %91 = arith.index_cast %90 : i32 to index
    %92 = memref.load %arg1[%91] : memref<80xi32, #tpu.memory_space<smem>>
    %c10_i32_53 = arith.constant 10 : i32
    %c0_i32_54 = arith.constant 0 : i32
    %93 = tpu.memref_slice %arg2[%92, %c0_i32_54] : memref<1001x128xf32, #tpu.memory_space<any>> -> memref<1x128xf32, #tpu.memory_space<any>>
    %c10_i32_55 = arith.constant 10 : i32
    %c0_i32_56 = arith.constant 0 : i32
    %94 = tpu.memref_slice %arg4[%c10_i32_55, %c0_i32_56] : memref<40x128xf32, #tpu.memory_space<vmem>> -> memref<1x128xf32, #tpu.memory_space<vmem>>
    %95 = tpu.memref_slice %arg5[%c10_i32_53] : memref<40x!tpu.dma_semaphore, #tpu.memory_space<semaphore_mem>> -> memref<1x!tpu.dma_semaphore, #tpu.memory_space<semaphore_mem>>
    %96 = tpu.memref_squeeze %95 : memref<1x!tpu.dma_semaphore, #tpu.memory_space<semaphore_mem>> -> memref<!tpu.dma_semaphore, #tpu.memory_space<semaphore_mem>>
    tpu.enqueue_dma source(%93 : memref<1x128xf32, #tpu.memory_space<any>>) target(%94 : memref<1x128xf32, #tpu.memory_space<vmem>>) target_semaphore(%96 : memref<!tpu.dma_semaphore, #tpu.memory_space<semaphore_mem>>)
    %c10_i32_57 = arith.constant 10 : i32
    %97 = arith.addi %0, %c10_i32_57 : i32
    %c2_i32_58 = arith.constant 2 : i32
    %98 = arith.addi %97, %c2_i32_58 : i32
    %99 = arith.index_cast %98 : i32 to index
    %100 = memref.load %arg1[%99] : memref<80xi32, #tpu.memory_space<smem>>
    %c18_i32 = arith.constant 18 : i32
    %c0_i32_59 = arith.constant 0 : i32
    %101 = tpu.memref_slice %arg2[%100, %c0_i32_59] : memref<1001x128xf32, #tpu.memory_space<any>> -> memref<1x128xf32, #tpu.memory_space<any>>
    %c18_i32_60 = arith.constant 18 : i32
    %c0_i32_61 = arith.constant 0 : i32
    %102 = tpu.memref_slice %arg4[%c18_i32_60, %c0_i32_61] : memref<40x128xf32, #tpu.memory_space<vmem>> -> memref<1x128xf32, #tpu.memory_space<vmem>>
    %103 = tpu.memref_slice %arg5[%c18_i32] : memref<40x!tpu.dma_semaphore, #tpu.memory_space<semaphore_mem>> -> memref<1x!tpu.dma_semaphore, #tpu.memory_space<semaphore_mem>>
    %104 = tpu.memref_squeeze %103 : memref<1x!tpu.dma_semaphore, #tpu.memory_space<semaphore_mem>> -> memref<!tpu.dma_semaphore, #tpu.memory_space<semaphore_mem>>
    tpu.enqueue_dma source(%101 : memref<1x128xf32, #tpu.memory_space<any>>) target(%102 : memref<1x128xf32, #tpu.memory_space<vmem>>) target_semaphore(%104 : memref<!tpu.dma_semaphore, #tpu.memory_space<semaphore_mem>>)
    %c10_i32_62 = arith.constant 10 : i32
    %105 = arith.addi %0, %c10_i32_62 : i32
    %c3_i32_63 = arith.constant 3 : i32
    %106 = arith.addi %105, %c3_i32_63 : i32
    %107 = arith.index_cast %106 : i32 to index
    %108 = memref.load %arg1[%107] : memref<80xi32, #tpu.memory_space<smem>>
    %c26_i32 = arith.constant 26 : i32
    %c0_i32_64 = arith.constant 0 : i32
    %109 = tpu.memref_slice %arg2[%108, %c0_i32_64] : memref<1001x128xf32, #tpu.memory_space<any>> -> memref<1x128xf32, #tpu.memory_space<any>>
    %c26_i32_65 = arith.constant 26 : i32
    %c0_i32_66 = arith.constant 0 : i32
    %110 = tpu.memref_slice %arg4[%c26_i32_65, %c0_i32_66] : memref<40x128xf32, #tpu.memory_space<vmem>> -> memref<1x128xf32, #tpu.memory_space<vmem>>
    %111 = tpu.memref_slice %arg5[%c26_i32] : memref<40x!tpu.dma_semaphore, #tpu.memory_space<semaphore_mem>> -> memref<1x!tpu.dma_semaphore, #tpu.memory_space<semaphore_mem>>
    %112 = tpu.memref_squeeze %111 : memref<1x!tpu.dma_semaphore, #tpu.memory_space<semaphore_mem>> -> memref<!tpu.dma_semaphore, #tpu.memory_space<semaphore_mem>>
    tpu.enqueue_dma source(%109 : memref<1x128xf32, #tpu.memory_space<any>>) target(%110 : memref<1x128xf32, #tpu.memory_space<vmem>>) target_semaphore(%112 : memref<!tpu.dma_semaphore, #tpu.memory_space<semaphore_mem>>)
    %c10_i32_67 = arith.constant 10 : i32
    %113 = arith.addi %0, %c10_i32_67 : i32
    %c4_i32_68 = arith.constant 4 : i32
    %114 = arith.addi %113, %c4_i32_68 : i32
    %115 = arith.index_cast %114 : i32 to index
    %116 = memref.load %arg1[%115] : memref<80xi32, #tpu.memory_space<smem>>
    %c34_i32 = arith.constant 34 : i32
    %c0_i32_69 = arith.constant 0 : i32
    %117 = tpu.memref_slice %arg2[%116, %c0_i32_69] : memref<1001x128xf32, #tpu.memory_space<any>> -> memref<1x128xf32, #tpu.memory_space<any>>
    %c34_i32_70 = arith.constant 34 : i32
    %c0_i32_71 = arith.constant 0 : i32
    %118 = tpu.memref_slice %arg4[%c34_i32_70, %c0_i32_71] : memref<40x128xf32, #tpu.memory_space<vmem>> -> memref<1x128xf32, #tpu.memory_space<vmem>>
    %119 = tpu.memref_slice %arg5[%c34_i32] : memref<40x!tpu.dma_semaphore, #tpu.memory_space<semaphore_mem>> -> memref<1x!tpu.dma_semaphore, #tpu.memory_space<semaphore_mem>>
    %120 = tpu.memref_squeeze %119 : memref<1x!tpu.dma_semaphore, #tpu.memory_space<semaphore_mem>> -> memref<!tpu.dma_semaphore, #tpu.memory_space<semaphore_mem>>
    tpu.enqueue_dma source(%117 : memref<1x128xf32, #tpu.memory_space<any>>) target(%118 : memref<1x128xf32, #tpu.memory_space<vmem>>) target_semaphore(%120 : memref<!tpu.dma_semaphore, #tpu.memory_space<semaphore_mem>>)
    %c15_i32 = arith.constant 15 : i32
    %121 = arith.addi %0, %c15_i32 : i32
    %c0_i32_72 = arith.constant 0 : i32
    %122 = arith.addi %121, %c0_i32_72 : i32
    %123 = arith.index_cast %122 : i32 to index
    %124 = memref.load %arg1[%123] : memref<80xi32, #tpu.memory_space<smem>>
    %c3_i32_73 = arith.constant 3 : i32
    %c0_i32_74 = arith.constant 0 : i32
    %125 = tpu.memref_slice %arg2[%124, %c0_i32_74] : memref<1001x128xf32, #tpu.memory_space<any>> -> memref<1x128xf32, #tpu.memory_space<any>>
    %c3_i32_75 = arith.constant 3 : i32
    %c0_i32_76 = arith.constant 0 : i32
    %126 = tpu.memref_slice %arg4[%c3_i32_75, %c0_i32_76] : memref<40x128xf32, #tpu.memory_space<vmem>> -> memref<1x128xf32, #tpu.memory_space<vmem>>
    %127 = tpu.memref_slice %arg5[%c3_i32_73] : memref<40x!tpu.dma_semaphore, #tpu.memory_space<semaphore_mem>> -> memref<1x!tpu.dma_semaphore, #tpu.memory_space<semaphore_mem>>
    %128 = tpu.memref_squeeze %127 : memref<1x!tpu.dma_semaphore, #tpu.memory_space<semaphore_mem>> -> memref<!tpu.dma_semaphore, #tpu.memory_space<semaphore_mem>>
    tpu.enqueue_dma source(%125 : memref<1x128xf32, #tpu.memory_space<any>>) target(%126 : memref<1x128xf32, #tpu.memory_space<vmem>>) target_semaphore(%128 : memref<!tpu.dma_semaphore, #tpu.memory_space<semaphore_mem>>)
    %c15_i32_77 = arith.constant 15 : i32
    %129 = arith.addi %0, %c15_i32_77 : i32
    %c1_i32_78 = arith.constant 1 : i32
    %130 = arith.addi %129, %c1_i32_78 : i32
    %131 = arith.index_cast %130 : i32 to index
    %132 = memref.load %arg1[%131] : memref<80xi32, #tpu.memory_space<smem>>
    %c11_i32 = arith.constant 11 : i32
    %c0_i32_79 = arith.constant 0 : i32
    %133 = tpu.memref_slice %arg2[%132, %c0_i32_79] : memref<1001x128xf32, #tpu.memory_space<any>> -> memref<1x128xf32, #tpu.memory_space<any>>
    %c11_i32_80 = arith.constant 11 : i32
    %c0_i32_81 = arith.constant 0 : i32
    %134 = tpu.memref_slice %arg4[%c11_i32_80, %c0_i32_81] : memref<40x128xf32, #tpu.memory_space<vmem>> -> memref<1x128xf32, #tpu.memory_space<vmem>>
    %135 = tpu.memref_slice %arg5[%c11_i32] : memref<40x!tpu.dma_semaphore, #tpu.memory_space<semaphore_mem>> -> memref<1x!tpu.dma_semaphore, #tpu.memory_space<semaphore_mem>>
    %136 = tpu.memref_squeeze %135 : memref<1x!tpu.dma_semaphore, #tpu.memory_space<semaphore_mem>> -> memref<!tpu.dma_semaphore, #tpu.memory_space<semaphore_mem>>
    tpu.enqueue_dma source(%133 : memref<1x128xf32, #tpu.memory_space<any>>) target(%134 : memref<1x128xf32, #tpu.memory_space<vmem>>) target_semaphore(%136 : memref<!tpu.dma_semaphore, #tpu.memory_space<semaphore_mem>>)
    %c15_i32_82 = arith.constant 15 : i32
    %137 = arith.addi %0, %c15_i32_82 : i32
    %c2_i32_83 = arith.constant 2 : i32
    %138 = arith.addi %137, %c2_i32_83 : i32
    %139 = arith.index_cast %138 : i32 to index
    %140 = memref.load %arg1[%139] : memref<80xi32, #tpu.memory_space<smem>>
    %c19_i32 = arith.constant 19 : i32
    %c0_i32_84 = arith.constant 0 : i32
    %141 = tpu.memref_slice %arg2[%140, %c0_i32_84] : memref<1001x128xf32, #tpu.memory_space<any>> -> memref<1x128xf32, #tpu.memory_space<any>>
    %c19_i32_85 = arith.constant 19 : i32
    %c0_i32_86 = arith.constant 0 : i32
    %142 = tpu.memref_slice %arg4[%c19_i32_85, %c0_i32_86] : memref<40x128xf32, #tpu.memory_space<vmem>> -> memref<1x128xf32, #tpu.memory_space<vmem>>
    %143 = tpu.memref_slice %arg5[%c19_i32] : memref<40x!tpu.dma_semaphore, #tpu.memory_space<semaphore_mem>> -> memref<1x!tpu.dma_semaphore, #tpu.memory_space<semaphore_mem>>
    %144 = tpu.memref_squeeze %143 : memref<1x!tpu.dma_semaphore, #tpu.memory_space<semaphore_mem>> -> memref<!tpu.dma_semaphore, #tpu.memory_space<semaphore_mem>>
    tpu.enqueue_dma source(%141 : memref<1x128xf32, #tpu.memory_space<any>>) target(%142 : memref<1x128xf32, #tpu.memory_space<vmem>>) target_semaphore(%144 : memref<!tpu.dma_semaphore, #tpu.memory_space<semaphore_mem>>)
    %c15_i32_87 = arith.constant 15 : i32
    %145 = arith.addi %0, %c15_i32_87 : i32
    %c3_i32_88 = arith.constant 3 : i32
    %146 = arith.addi %145, %c3_i32_88 : i32
    %147 = arith.index_cast %146 : i32 to index
    %148 = memref.load %arg1[%147] : memref<80xi32, #tpu.memory_space<smem>>
    %c27_i32 = arith.constant 27 : i32
    %c0_i32_89 = arith.constant 0 : i32
    %149 = tpu.memref_slice %arg2[%148, %c0_i32_89] : memref<1001x128xf32, #tpu.memory_space<any>> -> memref<1x128xf32, #tpu.memory_space<any>>
    %c27_i32_90 = arith.constant 27 : i32
    %c0_i32_91 = arith.constant 0 : i32
    %150 = tpu.memref_slice %arg4[%c27_i32_90, %c0_i32_91] : memref<40x128xf32, #tpu.memory_space<vmem>> -> memref<1x128xf32, #tpu.memory_space<vmem>>
    %151 = tpu.memref_slice %arg5[%c27_i32] : memref<40x!tpu.dma_semaphore, #tpu.memory_space<semaphore_mem>> -> memref<1x!tpu.dma_semaphore, #tpu.memory_space<semaphore_mem>>
    %152 = tpu.memref_squeeze %151 : memref<1x!tpu.dma_semaphore, #tpu.memory_space<semaphore_mem>> -> memref<!tpu.dma_semaphore, #tpu.memory_space<semaphore_mem>>
    tpu.enqueue_dma source(%149 : memref<1x128xf32, #tpu.memory_space<any>>) target(%150 : memref<1x128xf32, #tpu.memory_space<vmem>>) target_semaphore(%152 : memref<!tpu.dma_semaphore, #tpu.memory_space<semaphore_mem>>)
    %c15_i32_92 = arith.constant 15 : i32
    %153 = arith.addi %0, %c15_i32_92 : i32
    %c4_i32_93 = arith.constant 4 : i32
    %154 = arith.addi %153, %c4_i32_93 : i32
    %155 = arith.index_cast %154 : i32 to index
    %156 = memref.load %arg1[%155] : memref<80xi32, #tpu.memory_space<smem>>
    %c35_i32 = arith.constant 35 : i32
    %c0_i32_94 = arith.constant 0 : i32
    %157 = tpu.memref_slice %arg2[%156, %c0_i32_94] : memref<1001x128xf32, #tpu.memory_space<any>> -> memref<1x128xf32, #tpu.memory_space<any>>
    %c35_i32_95 = arith.constant 35 : i32
    %c0_i32_96 = arith.constant 0 : i32
    %158 = tpu.memref_slice %arg4[%c35_i32_95, %c0_i32_96] : memref<40x128xf32, #tpu.memory_space<vmem>> -> memref<1x128xf32, #tpu.memory_space<vmem>>
    %159 = tpu.memref_slice %arg5[%c35_i32] : memref<40x!tpu.dma_semaphore, #tpu.memory_space<semaphore_mem>> -> memref<1x!tpu.dma_semaphore, #tpu.memory_space<semaphore_mem>>
    %160 = tpu.memref_squeeze %159 : memref<1x!tpu.dma_semaphore, #tpu.memory_space<semaphore_mem>> -> memref<!tpu.dma_semaphore, #tpu.memory_space<semaphore_mem>>
    tpu.enqueue_dma source(%157 : memref<1x128xf32, #tpu.memory_space<any>>) target(%158 : memref<1x128xf32, #tpu.memory_space<vmem>>) target_semaphore(%160 : memref<!tpu.dma_semaphore, #tpu.memory_space<semaphore_mem>>)
    %c20_i32 = arith.constant 20 : i32
    %161 = arith.addi %0, %c20_i32 : i32
    %c0_i32_97 = arith.constant 0 : i32
    %162 = arith.addi %161, %c0_i32_97 : i32
    %163 = arith.index_cast %162 : i32 to index
    %164 = memref.load %arg1[%163] : memref<80xi32, #tpu.memory_space<smem>>
    %c4_i32_98 = arith.constant 4 : i32
    %c0_i32_99 = arith.constant 0 : i32
    %165 = tpu.memref_slice %arg2[%164, %c0_i32_99] : memref<1001x128xf32, #tpu.memory_space<any>> -> memref<1x128xf32, #tpu.memory_space<any>>
    %c4_i32_100 = arith.constant 4 : i32
    %c0_i32_101 = arith.constant 0 : i32
    %166 = tpu.memref_slice %arg4[%c4_i32_100, %c0_i32_101] : memref<40x128xf32, #tpu.memory_space<vmem>> -> memref<1x128xf32, #tpu.memory_space<vmem>>
    %167 = tpu.memref_slice %arg5[%c4_i32_98] : memref<40x!tpu.dma_semaphore, #tpu.memory_space<semaphore_mem>> -> memref<1x!tpu.dma_semaphore, #tpu.memory_space<semaphore_mem>>
    %168 = tpu.memref_squeeze %167 : memref<1x!tpu.dma_semaphore, #tpu.memory_space<semaphore_mem>> -> memref<!tpu.dma_semaphore, #tpu.memory_space<semaphore_mem>>
    tpu.enqueue_dma source(%165 : memref<1x128xf32, #tpu.memory_space<any>>) target(%166 : memref<1x128xf32, #tpu.memory_space<vmem>>) target_semaphore(%168 : memref<!tpu.dma_semaphore, #tpu.memory_space<semaphore_mem>>)
    %c20_i32_102 = arith.constant 20 : i32
    %169 = arith.addi %0, %c20_i32_102 : i32
    %c1_i32_103 = arith.constant 1 : i32
    %170 = arith.addi %169, %c1_i32_103 : i32
    %171 = arith.index_cast %170 : i32 to index
    %172 = memref.load %arg1[%171] : memref<80xi32, #tpu.memory_space<smem>>
    %c12_i32 = arith.constant 12 : i32
    %c0_i32_104 = arith.constant 0 : i32
    %173 = tpu.memref_slice %arg2[%172, %c0_i32_104] : memref<1001x128xf32, #tpu.memory_space<any>> -> memref<1x128xf32, #tpu.memory_space<any>>
    %c12_i32_105 = arith.constant 12 : i32
    %c0_i32_106 = arith.constant 0 : i32
    %174 = tpu.memref_slice %arg4[%c12_i32_105, %c0_i32_106] : memref<40x128xf32, #tpu.memory_space<vmem>> -> memref<1x128xf32, #tpu.memory_space<vmem>>
    %175 = tpu.memref_slice %arg5[%c12_i32] : memref<40x!tpu.dma_semaphore, #tpu.memory_space<semaphore_mem>> -> memref<1x!tpu.dma_semaphore, #tpu.memory_space<semaphore_mem>>
    %176 = tpu.memref_squeeze %175 : memref<1x!tpu.dma_semaphore, #tpu.memory_space<semaphore_mem>> -> memref<!tpu.dma_semaphore, #tpu.memory_space<semaphore_mem>>
    tpu.enqueue_dma source(%173 : memref<1x128xf32, #tpu.memory_space<any>>) target(%174 : memref<1x128xf32, #tpu.memory_space<vmem>>) target_semaphore(%176 : memref<!tpu.dma_semaphore, #tpu.memory_space<semaphore_mem>>)
    %c20_i32_107 = arith.constant 20 : i32
    %177 = arith.addi %0, %c20_i32_107 : i32
    %c2_i32_108 = arith.constant 2 : i32
    %178 = arith.addi %177, %c2_i32_108 : i32
    %179 = arith.index_cast %178 : i32 to index
    %180 = memref.load %arg1[%179] : memref<80xi32, #tpu.memory_space<smem>>
    %c20_i32_109 = arith.constant 20 : i32
    %c0_i32_110 = arith.constant 0 : i32
    %181 = tpu.memref_slice %arg2[%180, %c0_i32_110] : memref<1001x128xf32, #tpu.memory_space<any>> -> memref<1x128xf32, #tpu.memory_space<any>>
    %c20_i32_111 = arith.constant 20 : i32
    %c0_i32_112 = arith.constant 0 : i32
    %182 = tpu.memref_slice %arg4[%c20_i32_111, %c0_i32_112] : memref<40x128xf32, #tpu.memory_space<vmem>> -> memref<1x128xf32, #tpu.memory_space<vmem>>
    %183 = tpu.memref_slice %arg5[%c20_i32_109] : memref<40x!tpu.dma_semaphore, #tpu.memory_space<semaphore_mem>> -> memref<1x!tpu.dma_semaphore, #tpu.memory_space<semaphore_mem>>
    %184 = tpu.memref_squeeze %183 : memref<1x!tpu.dma_semaphore, #tpu.memory_space<semaphore_mem>> -> memref<!tpu.dma_semaphore, #tpu.memory_space<semaphore_mem>>
    tpu.enqueue_dma source(%181 : memref<1x128xf32, #tpu.memory_space<any>>) target(%182 : memref<1x128xf32, #tpu.memory_space<vmem>>) target_semaphore(%184 : memref<!tpu.dma_semaphore, #tpu.memory_space<semaphore_mem>>)
    %c20_i32_113 = arith.constant 20 : i32
    %185 = arith.addi %0, %c20_i32_113 : i32
    %c3_i32_114 = arith.constant 3 : i32
    %186 = arith.addi %185, %c3_i32_114 : i32
    %187 = arith.index_cast %186 : i32 to index
    %188 = memref.load %arg1[%187] : memref<80xi32, #tpu.memory_space<smem>>
    %c28_i32 = arith.constant 28 : i32
    %c0_i32_115 = arith.constant 0 : i32
    %189 = tpu.memref_slice %arg2[%188, %c0_i32_115] : memref<1001x128xf32, #tpu.memory_space<any>> -> memref<1x128xf32, #tpu.memory_space<any>>
    %c28_i32_116 = arith.constant 28 : i32
    %c0_i32_117 = arith.constant 0 : i32
    %190 = tpu.memref_slice %arg4[%c28_i32_116, %c0_i32_117] : memref<40x128xf32, #tpu.memory_space<vmem>> -> memref<1x128xf32, #tpu.memory_space<vmem>>
    %191 = tpu.memref_slice %arg5[%c28_i32] : memref<40x!tpu.dma_semaphore, #tpu.memory_space<semaphore_mem>> -> memref<1x!tpu.dma_semaphore, #tpu.memory_space<semaphore_mem>>
    %192 = tpu.memref_squeeze %191 : memref<1x!tpu.dma_semaphore, #tpu.memory_space<semaphore_mem>> -> memref<!tpu.dma_semaphore, #tpu.memory_space<semaphore_mem>>
    tpu.enqueue_dma source(%189 : memref<1x128xf32, #tpu.memory_space<any>>) target(%190 : memref<1x128xf32, #tpu.memory_space<vmem>>) target_semaphore(%192 : memref<!tpu.dma_semaphore, #tpu.memory_space<semaphore_mem>>)
    %c20_i32_118 = arith.constant 20 : i32
    %193 = arith.addi %0, %c20_i32_118 : i32
    %c4_i32_119 = arith.constant 4 : i32
    %194 = arith.addi %193, %c4_i32_119 : i32
    %195 = arith.index_cast %194 : i32 to index
    %196 = memref.load %arg1[%195] : memref<80xi32, #tpu.memory_space<smem>>
    %c36_i32 = arith.constant 36 : i32
    %c0_i32_120 = arith.constant 0 : i32
    %197 = tpu.memref_slice %arg2[%196, %c0_i32_120] : memref<1001x128xf32, #tpu.memory_space<any>> -> memref<1x128xf32, #tpu.memory_space<any>>
    %c36_i32_121 = arith.constant 36 : i32
    %c0_i32_122 = arith.constant 0 : i32
    %198 = tpu.memref_slice %arg4[%c36_i32_121, %c0_i32_122] : memref<40x128xf32, #tpu.memory_space<vmem>> -> memref<1x128xf32, #tpu.memory_space<vmem>>
    %199 = tpu.memref_slice %arg5[%c36_i32] : memref<40x!tpu.dma_semaphore, #tpu.memory_space<semaphore_mem>> -> memref<1x!tpu.dma_semaphore, #tpu.memory_space<semaphore_mem>>
    %200 = tpu.memref_squeeze %199 : memref<1x!tpu.dma_semaphore, #tpu.memory_space<semaphore_mem>> -> memref<!tpu.dma_semaphore, #tpu.memory_space<semaphore_mem>>
    tpu.enqueue_dma source(%197 : memref<1x128xf32, #tpu.memory_space<any>>) target(%198 : memref<1x128xf32, #tpu.memory_space<vmem>>) target_semaphore(%200 : memref<!tpu.dma_semaphore, #tpu.memory_space<semaphore_mem>>)
    %c25_i32_123 = arith.constant 25 : i32
    %201 = arith.addi %0, %c25_i32_123 : i32
    %c0_i32_124 = arith.constant 0 : i32
    %202 = arith.addi %201, %c0_i32_124 : i32
    %203 = arith.index_cast %202 : i32 to index
    %204 = memref.load %arg1[%203] : memref<80xi32, #tpu.memory_space<smem>>
    %c5_i32_125 = arith.constant 5 : i32
    %c0_i32_126 = arith.constant 0 : i32
    %205 = tpu.memref_slice %arg2[%204, %c0_i32_126] : memref<1001x128xf32, #tpu.memory_space<any>> -> memref<1x128xf32, #tpu.memory_space<any>>
    %c5_i32_127 = arith.constant 5 : i32
    %c0_i32_128 = arith.constant 0 : i32
    %206 = tpu.memref_slice %arg4[%c5_i32_127, %c0_i32_128] : memref<40x128xf32, #tpu.memory_space<vmem>> -> memref<1x128xf32, #tpu.memory_space<vmem>>
    %207 = tpu.memref_slice %arg5[%c5_i32_125] : memref<40x!tpu.dma_semaphore, #tpu.memory_space<semaphore_mem>> -> memref<1x!tpu.dma_semaphore, #tpu.memory_space<semaphore_mem>>
    %208 = tpu.memref_squeeze %207 : memref<1x!tpu.dma_semaphore, #tpu.memory_space<semaphore_mem>> -> memref<!tpu.dma_semaphore, #tpu.memory_space<semaphore_mem>>
    tpu.enqueue_dma source(%205 : memref<1x128xf32, #tpu.memory_space<any>>) target(%206 : memref<1x128xf32, #tpu.memory_space<vmem>>) target_semaphore(%208 : memref<!tpu.dma_semaphore, #tpu.memory_space<semaphore_mem>>)
    %c25_i32_129 = arith.constant 25 : i32
    %209 = arith.addi %0, %c25_i32_129 : i32
    %c1_i32_130 = arith.constant 1 : i32
    %210 = arith.addi %209, %c1_i32_130 : i32
    %211 = arith.index_cast %210 : i32 to index
    %212 = memref.load %arg1[%211] : memref<80xi32, #tpu.memory_space<smem>>
    %c13_i32 = arith.constant 13 : i32
    %c0_i32_131 = arith.constant 0 : i32
    %213 = tpu.memref_slice %arg2[%212, %c0_i32_131] : memref<1001x128xf32, #tpu.memory_space<any>> -> memref<1x128xf32, #tpu.memory_space<any>>
    %c13_i32_132 = arith.constant 13 : i32
    %c0_i32_133 = arith.constant 0 : i32
    %214 = tpu.memref_slice %arg4[%c13_i32_132, %c0_i32_133] : memref<40x128xf32, #tpu.memory_space<vmem>> -> memref<1x128xf32, #tpu.memory_space<vmem>>
    %215 = tpu.memref_slice %arg5[%c13_i32] : memref<40x!tpu.dma_semaphore, #tpu.memory_space<semaphore_mem>> -> memref<1x!tpu.dma_semaphore, #tpu.memory_space<semaphore_mem>>
    %216 = tpu.memref_squeeze %215 : memref<1x!tpu.dma_semaphore, #tpu.memory_space<semaphore_mem>> -> memref<!tpu.dma_semaphore, #tpu.memory_space<semaphore_mem>>
    tpu.enqueue_dma source(%213 : memref<1x128xf32, #tpu.memory_space<any>>) target(%214 : memref<1x128xf32, #tpu.memory_space<vmem>>) target_semaphore(%216 : memref<!tpu.dma_semaphore, #tpu.memory_space<semaphore_mem>>)
    %c25_i32_134 = arith.constant 25 : i32
    %217 = arith.addi %0, %c25_i32_134 : i32
    %c2_i32_135 = arith.constant 2 : i32
    %218 = arith.addi %217, %c2_i32_135 : i32
    %219 = arith.index_cast %218 : i32 to index
    %220 = memref.load %arg1[%219] : memref<80xi32, #tpu.memory_space<smem>>
    %c21_i32 = arith.constant 21 : i32
    %c0_i32_136 = arith.constant 0 : i32
    %221 = tpu.memref_slice %arg2[%220, %c0_i32_136] : memref<1001x128xf32, #tpu.memory_space<any>> -> memref<1x128xf32, #tpu.memory_space<any>>
    %c21_i32_137 = arith.constant 21 : i32
    %c0_i32_138 = arith.constant 0 : i32
    %222 = tpu.memref_slice %arg4[%c21_i32_137, %c0_i32_138] : memref<40x128xf32, #tpu.memory_space<vmem>> -> memref<1x128xf32, #tpu.memory_space<vmem>>
    %223 = tpu.memref_slice %arg5[%c21_i32] : memref<40x!tpu.dma_semaphore, #tpu.memory_space<semaphore_mem>> -> memref<1x!tpu.dma_semaphore, #tpu.memory_space<semaphore_mem>>
    %224 = tpu.memref_squeeze %223 : memref<1x!tpu.dma_semaphore, #tpu.memory_space<semaphore_mem>> -> memref<!tpu.dma_semaphore, #tpu.memory_space<semaphore_mem>>
    tpu.enqueue_dma source(%221 : memref<1x128xf32, #tpu.memory_space<any>>) target(%222 : memref<1x128xf32, #tpu.memory_space<vmem>>) target_semaphore(%224 : memref<!tpu.dma_semaphore, #tpu.memory_space<semaphore_mem>>)
    %c25_i32_139 = arith.constant 25 : i32
    %225 = arith.addi %0, %c25_i32_139 : i32
    %c3_i32_140 = arith.constant 3 : i32
    %226 = arith.addi %225, %c3_i32_140 : i32
    %227 = arith.index_cast %226 : i32 to index
    %228 = memref.load %arg1[%227] : memref<80xi32, #tpu.memory_space<smem>>
    %c29_i32 = arith.constant 29 : i32
    %c0_i32_141 = arith.constant 0 : i32
    %229 = tpu.memref_slice %arg2[%228, %c0_i32_141] : memref<1001x128xf32, #tpu.memory_space<any>> -> memref<1x128xf32, #tpu.memory_space<any>>
    %c29_i32_142 = arith.constant 29 : i32
    %c0_i32_143 = arith.constant 0 : i32
    %230 = tpu.memref_slice %arg4[%c29_i32_142, %c0_i32_143] : memref<40x128xf32, #tpu.memory_space<vmem>> -> memref<1x128xf32, #tpu.memory_space<vmem>>
    %231 = tpu.memref_slice %arg5[%c29_i32] : memref<40x!tpu.dma_semaphore, #tpu.memory_space<semaphore_mem>> -> memref<1x!tpu.dma_semaphore, #tpu.memory_space<semaphore_mem>>
    %232 = tpu.memref_squeeze %231 : memref<1x!tpu.dma_semaphore, #tpu.memory_space<semaphore_mem>> -> memref<!tpu.dma_semaphore, #tpu.memory_space<semaphore_mem>>
    tpu.enqueue_dma source(%229 : memref<1x128xf32, #tpu.memory_space<any>>) target(%230 : memref<1x128xf32, #tpu.memory_space<vmem>>) target_semaphore(%232 : memref<!tpu.dma_semaphore, #tpu.memory_space<semaphore_mem>>)
    %c25_i32_144 = arith.constant 25 : i32
    %233 = arith.addi %0, %c25_i32_144 : i32
    %c4_i32_145 = arith.constant 4 : i32
    %234 = arith.addi %233, %c4_i32_145 : i32
    %235 = arith.index_cast %234 : i32 to index
    %236 = memref.load %arg1[%235] : memref<80xi32, #tpu.memory_space<smem>>
    %c37_i32 = arith.constant 37 : i32
    %c0_i32_146 = arith.constant 0 : i32
    %237 = tpu.memref_slice %arg2[%236, %c0_i32_146] : memref<1001x128xf32, #tpu.memory_space<any>> -> memref<1x128xf32, #tpu.memory_space<any>>
    %c37_i32_147 = arith.constant 37 : i32
    %c0_i32_148 = arith.constant 0 : i32
    %238 = tpu.memref_slice %arg4[%c37_i32_147, %c0_i32_148] : memref<40x128xf32, #tpu.memory_space<vmem>> -> memref<1x128xf32, #tpu.memory_space<vmem>>
    %239 = tpu.memref_slice %arg5[%c37_i32] : memref<40x!tpu.dma_semaphore, #tpu.memory_space<semaphore_mem>> -> memref<1x!tpu.dma_semaphore, #tpu.memory_space<semaphore_mem>>
    %240 = tpu.memref_squeeze %239 : memref<1x!tpu.dma_semaphore, #tpu.memory_space<semaphore_mem>> -> memref<!tpu.dma_semaphore, #tpu.memory_space<semaphore_mem>>
    tpu.enqueue_dma source(%237 : memref<1x128xf32, #tpu.memory_space<any>>) target(%238 : memref<1x128xf32, #tpu.memory_space<vmem>>) target_semaphore(%240 : memref<!tpu.dma_semaphore, #tpu.memory_space<semaphore_mem>>)
    %c30_i32 = arith.constant 30 : i32
    %241 = arith.addi %0, %c30_i32 : i32
    %c0_i32_149 = arith.constant 0 : i32
    %242 = arith.addi %241, %c0_i32_149 : i32
    %243 = arith.index_cast %242 : i32 to index
    %244 = memref.load %arg1[%243] : memref<80xi32, #tpu.memory_space<smem>>
    %c6_i32 = arith.constant 6 : i32
    %c0_i32_150 = arith.constant 0 : i32
    %245 = tpu.memref_slice %arg2[%244, %c0_i32_150] : memref<1001x128xf32, #tpu.memory_space<any>> -> memref<1x128xf32, #tpu.memory_space<any>>
    %c6_i32_151 = arith.constant 6 : i32
    %c0_i32_152 = arith.constant 0 : i32
    %246 = tpu.memref_slice %arg4[%c6_i32_151, %c0_i32_152] : memref<40x128xf32, #tpu.memory_space<vmem>> -> memref<1x128xf32, #tpu.memory_space<vmem>>
    %247 = tpu.memref_slice %arg5[%c6_i32] : memref<40x!tpu.dma_semaphore, #tpu.memory_space<semaphore_mem>> -> memref<1x!tpu.dma_semaphore, #tpu.memory_space<semaphore_mem>>
    %248 = tpu.memref_squeeze %247 : memref<1x!tpu.dma_semaphore, #tpu.memory_space<semaphore_mem>> -> memref<!tpu.dma_semaphore, #tpu.memory_space<semaphore_mem>>
    tpu.enqueue_dma source(%245 : memref<1x128xf32, #tpu.memory_space<any>>) target(%246 : memref<1x128xf32, #tpu.memory_space<vmem>>) target_semaphore(%248 : memref<!tpu.dma_semaphore, #tpu.memory_space<semaphore_mem>>)
    %c30_i32_153 = arith.constant 30 : i32
    %249 = arith.addi %0, %c30_i32_153 : i32
    %c1_i32_154 = arith.constant 1 : i32
    %250 = arith.addi %249, %c1_i32_154 : i32
    %251 = arith.index_cast %250 : i32 to index
    %252 = memref.load %arg1[%251] : memref<80xi32, #tpu.memory_space<smem>>
    %c14_i32 = arith.constant 14 : i32
    %c0_i32_155 = arith.constant 0 : i32
    %253 = tpu.memref_slice %arg2[%252, %c0_i32_155] : memref<1001x128xf32, #tpu.memory_space<any>> -> memref<1x128xf32, #tpu.memory_space<any>>
    %c14_i32_156 = arith.constant 14 : i32
    %c0_i32_157 = arith.constant 0 : i32
    %254 = tpu.memref_slice %arg4[%c14_i32_156, %c0_i32_157] : memref<40x128xf32, #tpu.memory_space<vmem>> -> memref<1x128xf32, #tpu.memory_space<vmem>>
    %255 = tpu.memref_slice %arg5[%c14_i32] : memref<40x!tpu.dma_semaphore, #tpu.memory_space<semaphore_mem>> -> memref<1x!tpu.dma_semaphore, #tpu.memory_space<semaphore_mem>>
    %256 = tpu.memref_squeeze %255 : memref<1x!tpu.dma_semaphore, #tpu.memory_space<semaphore_mem>> -> memref<!tpu.dma_semaphore, #tpu.memory_space<semaphore_mem>>
    tpu.enqueue_dma source(%253 : memref<1x128xf32, #tpu.memory_space<any>>) target(%254 : memref<1x128xf32, #tpu.memory_space<vmem>>) target_semaphore(%256 : memref<!tpu.dma_semaphore, #tpu.memory_space<semaphore_mem>>)
    %c30_i32_158 = arith.constant 30 : i32
    %257 = arith.addi %0, %c30_i32_158 : i32
    %c2_i32_159 = arith.constant 2 : i32
    %258 = arith.addi %257, %c2_i32_159 : i32
    %259 = arith.index_cast %258 : i32 to index
    %260 = memref.load %arg1[%259] : memref<80xi32, #tpu.memory_space<smem>>
    %c22_i32 = arith.constant 22 : i32
    %c0_i32_160 = arith.constant 0 : i32
    %261 = tpu.memref_slice %arg2[%260, %c0_i32_160] : memref<1001x128xf32, #tpu.memory_space<any>> -> memref<1x128xf32, #tpu.memory_space<any>>
    %c22_i32_161 = arith.constant 22 : i32
    %c0_i32_162 = arith.constant 0 : i32
    %262 = tpu.memref_slice %arg4[%c22_i32_161, %c0_i32_162] : memref<40x128xf32, #tpu.memory_space<vmem>> -> memref<1x128xf32, #tpu.memory_space<vmem>>
    %263 = tpu.memref_slice %arg5[%c22_i32] : memref<40x!tpu.dma_semaphore, #tpu.memory_space<semaphore_mem>> -> memref<1x!tpu.dma_semaphore, #tpu.memory_space<semaphore_mem>>
    %264 = tpu.memref_squeeze %263 : memref<1x!tpu.dma_semaphore, #tpu.memory_space<semaphore_mem>> -> memref<!tpu.dma_semaphore, #tpu.memory_space<semaphore_mem>>
    tpu.enqueue_dma source(%261 : memref<1x128xf32, #tpu.memory_space<any>>) target(%262 : memref<1x128xf32, #tpu.memory_space<vmem>>) target_semaphore(%264 : memref<!tpu.dma_semaphore, #tpu.memory_space<semaphore_mem>>)
    %c30_i32_163 = arith.constant 30 : i32
    %265 = arith.addi %0, %c30_i32_163 : i32
    %c3_i32_164 = arith.constant 3 : i32
    %266 = arith.addi %265, %c3_i32_164 : i32
    %267 = arith.index_cast %266 : i32 to index
    %268 = memref.load %arg1[%267] : memref<80xi32, #tpu.memory_space<smem>>
    %c30_i32_165 = arith.constant 30 : i32
    %c0_i32_166 = arith.constant 0 : i32
    %269 = tpu.memref_slice %arg2[%268, %c0_i32_166] : memref<1001x128xf32, #tpu.memory_space<any>> -> memref<1x128xf32, #tpu.memory_space<any>>
    %c30_i32_167 = arith.constant 30 : i32
    %c0_i32_168 = arith.constant 0 : i32
    %270 = tpu.memref_slice %arg4[%c30_i32_167, %c0_i32_168] : memref<40x128xf32, #tpu.memory_space<vmem>> -> memref<1x128xf32, #tpu.memory_space<vmem>>
    %271 = tpu.memref_slice %arg5[%c30_i32_165] : memref<40x!tpu.dma_semaphore, #tpu.memory_space<semaphore_mem>> -> memref<1x!tpu.dma_semaphore, #tpu.memory_space<semaphore_mem>>
    %272 = tpu.memref_squeeze %271 : memref<1x!tpu.dma_semaphore, #tpu.memory_space<semaphore_mem>> -> memref<!tpu.dma_semaphore, #tpu.memory_space<semaphore_mem>>
    tpu.enqueue_dma source(%269 : memref<1x128xf32, #tpu.memory_space<any>>) target(%270 : memref<1x128xf32, #tpu.memory_space<vmem>>) target_semaphore(%272 : memref<!tpu.dma_semaphore, #tpu.memory_space<semaphore_mem>>)
    %c30_i32_169 = arith.constant 30 : i32
    %273 = arith.addi %0, %c30_i32_169 : i32
    %c4_i32_170 = arith.constant 4 : i32
    %274 = arith.addi %273, %c4_i32_170 : i32
    %275 = arith.index_cast %274 : i32 to index
    %276 = memref.load %arg1[%275] : memref<80xi32, #tpu.memory_space<smem>>
    %c38_i32 = arith.constant 38 : i32
    %c0_i32_171 = arith.constant 0 : i32
    %277 = tpu.memref_slice %arg2[%276, %c0_i32_171] : memref<1001x128xf32, #tpu.memory_space<any>> -> memref<1x128xf32, #tpu.memory_space<any>>
    %c38_i32_172 = arith.constant 38 : i32
    %c0_i32_173 = arith.constant 0 : i32
    %278 = tpu.memref_slice %arg4[%c38_i32_172, %c0_i32_173] : memref<40x128xf32, #tpu.memory_space<vmem>> -> memref<1x128xf32, #tpu.memory_space<vmem>>
    %279 = tpu.memref_slice %arg5[%c38_i32] : memref<40x!tpu.dma_semaphore, #tpu.memory_space<semaphore_mem>> -> memref<1x!tpu.dma_semaphore, #tpu.memory_space<semaphore_mem>>
    %280 = tpu.memref_squeeze %279 : memref<1x!tpu.dma_semaphore, #tpu.memory_space<semaphore_mem>> -> memref<!tpu.dma_semaphore, #tpu.memory_space<semaphore_mem>>
    tpu.enqueue_dma source(%277 : memref<1x128xf32, #tpu.memory_space<any>>) target(%278 : memref<1x128xf32, #tpu.memory_space<vmem>>) target_semaphore(%280 : memref<!tpu.dma_semaphore, #tpu.memory_space<semaphore_mem>>)
    %c35_i32_174 = arith.constant 35 : i32
    %281 = arith.addi %0, %c35_i32_174 : i32
    %c0_i32_175 = arith.constant 0 : i32
    %282 = arith.addi %281, %c0_i32_175 : i32
    %283 = arith.index_cast %282 : i32 to index
    %284 = memref.load %arg1[%283] : memref<80xi32, #tpu.memory_space<smem>>
    %c7_i32 = arith.constant 7 : i32
    %c0_i32_176 = arith.constant 0 : i32
    %285 = tpu.memref_slice %arg2[%284, %c0_i32_176] : memref<1001x128xf32, #tpu.memory_space<any>> -> memref<1x128xf32, #tpu.memory_space<any>>
    %c7_i32_177 = arith.constant 7 : i32
    %c0_i32_178 = arith.constant 0 : i32
    %286 = tpu.memref_slice %arg4[%c7_i32_177, %c0_i32_178] : memref<40x128xf32, #tpu.memory_space<vmem>> -> memref<1x128xf32, #tpu.memory_space<vmem>>
    %287 = tpu.memref_slice %arg5[%c7_i32] : memref<40x!tpu.dma_semaphore, #tpu.memory_space<semaphore_mem>> -> memref<1x!tpu.dma_semaphore, #tpu.memory_space<semaphore_mem>>
    %288 = tpu.memref_squeeze %287 : memref<1x!tpu.dma_semaphore, #tpu.memory_space<semaphore_mem>> -> memref<!tpu.dma_semaphore, #tpu.memory_space<semaphore_mem>>
    tpu.enqueue_dma source(%285 : memref<1x128xf32, #tpu.memory_space<any>>) target(%286 : memref<1x128xf32, #tpu.memory_space<vmem>>) target_semaphore(%288 : memref<!tpu.dma_semaphore, #tpu.memory_space<semaphore_mem>>)
    %c35_i32_179 = arith.constant 35 : i32
    %289 = arith.addi %0, %c35_i32_179 : i32
    %c1_i32_180 = arith.constant 1 : i32
    %290 = arith.addi %289, %c1_i32_180 : i32
    %291 = arith.index_cast %290 : i32 to index
    %292 = memref.load %arg1[%291] : memref<80xi32, #tpu.memory_space<smem>>
    %c15_i32_181 = arith.constant 15 : i32
    %c0_i32_182 = arith.constant 0 : i32
    %293 = tpu.memref_slice %arg2[%292, %c0_i32_182] : memref<1001x128xf32, #tpu.memory_space<any>> -> memref<1x128xf32, #tpu.memory_space<any>>
    %c15_i32_183 = arith.constant 15 : i32
    %c0_i32_184 = arith.constant 0 : i32
    %294 = tpu.memref_slice %arg4[%c15_i32_183, %c0_i32_184] : memref<40x128xf32, #tpu.memory_space<vmem>> -> memref<1x128xf32, #tpu.memory_space<vmem>>
    %295 = tpu.memref_slice %arg5[%c15_i32_181] : memref<40x!tpu.dma_semaphore, #tpu.memory_space<semaphore_mem>> -> memref<1x!tpu.dma_semaphore, #tpu.memory_space<semaphore_mem>>
    %296 = tpu.memref_squeeze %295 : memref<1x!tpu.dma_semaphore, #tpu.memory_space<semaphore_mem>> -> memref<!tpu.dma_semaphore, #tpu.memory_space<semaphore_mem>>
    tpu.enqueue_dma source(%293 : memref<1x128xf32, #tpu.memory_space<any>>) target(%294 : memref<1x128xf32, #tpu.memory_space<vmem>>) target_semaphore(%296 : memref<!tpu.dma_semaphore, #tpu.memory_space<semaphore_mem>>)
    %c35_i32_185 = arith.constant 35 : i32
    %297 = arith.addi %0, %c35_i32_185 : i32
    %c2_i32_186 = arith.constant 2 : i32
    %298 = arith.addi %297, %c2_i32_186 : i32
    %299 = arith.index_cast %298 : i32 to index
    %300 = memref.load %arg1[%299] : memref<80xi32, #tpu.memory_space<smem>>
    %c23_i32 = arith.constant 23 : i32
    %c0_i32_187 = arith.constant 0 : i32
    %301 = tpu.memref_slice %arg2[%300, %c0_i32_187] : memref<1001x128xf32, #tpu.memory_space<any>> -> memref<1x128xf32, #tpu.memory_space<any>>
    %c23_i32_188 = arith.constant 23 : i32
    %c0_i32_189 = arith.constant 0 : i32
    %302 = tpu.memref_slice %arg4[%c23_i32_188, %c0_i32_189] : memref<40x128xf32, #tpu.memory_space<vmem>> -> memref<1x128xf32, #tpu.memory_space<vmem>>
    %303 = tpu.memref_slice %arg5[%c23_i32] : memref<40x!tpu.dma_semaphore, #tpu.memory_space<semaphore_mem>> -> memref<1x!tpu.dma_semaphore, #tpu.memory_space<semaphore_mem>>
    %304 = tpu.memref_squeeze %303 : memref<1x!tpu.dma_semaphore, #tpu.memory_space<semaphore_mem>> -> memref<!tpu.dma_semaphore, #tpu.memory_space<semaphore_mem>>
    tpu.enqueue_dma source(%301 : memref<1x128xf32, #tpu.memory_space<any>>) target(%302 : memref<1x128xf32, #tpu.memory_space<vmem>>) target_semaphore(%304 : memref<!tpu.dma_semaphore, #tpu.memory_space<semaphore_mem>>)
    %c35_i32_190 = arith.constant 35 : i32
    %305 = arith.addi %0, %c35_i32_190 : i32
    %c3_i32_191 = arith.constant 3 : i32
    %306 = arith.addi %305, %c3_i32_191 : i32
    %307 = arith.index_cast %306 : i32 to index
    %308 = memref.load %arg1[%307] : memref<80xi32, #tpu.memory_space<smem>>
    %c31_i32 = arith.constant 31 : i32
    %c0_i32_192 = arith.constant 0 : i32
    %309 = tpu.memref_slice %arg2[%308, %c0_i32_192] : memref<1001x128xf32, #tpu.memory_space<any>> -> memref<1x128xf32, #tpu.memory_space<any>>
    %c31_i32_193 = arith.constant 31 : i32
    %c0_i32_194 = arith.constant 0 : i32
    %310 = tpu.memref_slice %arg4[%c31_i32_193, %c0_i32_194] : memref<40x128xf32, #tpu.memory_space<vmem>> -> memref<1x128xf32, #tpu.memory_space<vmem>>
    %311 = tpu.memref_slice %arg5[%c31_i32] : memref<40x!tpu.dma_semaphore, #tpu.memory_space<semaphore_mem>> -> memref<1x!tpu.dma_semaphore, #tpu.memory_space<semaphore_mem>>
    %312 = tpu.memref_squeeze %311 : memref<1x!tpu.dma_semaphore, #tpu.memory_space<semaphore_mem>> -> memref<!tpu.dma_semaphore, #tpu.memory_space<semaphore_mem>>
    tpu.enqueue_dma source(%309 : memref<1x128xf32, #tpu.memory_space<any>>) target(%310 : memref<1x128xf32, #tpu.memory_space<vmem>>) target_semaphore(%312 : memref<!tpu.dma_semaphore, #tpu.memory_space<semaphore_mem>>)
    %c35_i32_195 = arith.constant 35 : i32
    %313 = arith.addi %0, %c35_i32_195 : i32
    %c4_i32_196 = arith.constant 4 : i32
    %314 = arith.addi %313, %c4_i32_196 : i32
    %315 = arith.index_cast %314 : i32 to index
    %316 = memref.load %arg1[%315] : memref<80xi32, #tpu.memory_space<smem>>
    %c39_i32 = arith.constant 39 : i32
    %c0_i32_197 = arith.constant 0 : i32
    %317 = tpu.memref_slice %arg2[%316, %c0_i32_197] : memref<1001x128xf32, #tpu.memory_space<any>> -> memref<1x128xf32, #tpu.memory_space<any>>
    %c39_i32_198 = arith.constant 39 : i32
    %c0_i32_199 = arith.constant 0 : i32
    %318 = tpu.memref_slice %arg4[%c39_i32_198, %c0_i32_199] : memref<40x128xf32, #tpu.memory_space<vmem>> -> memref<1x128xf32, #tpu.memory_space<vmem>>
    %319 = tpu.memref_slice %arg5[%c39_i32] : memref<40x!tpu.dma_semaphore, #tpu.memory_space<semaphore_mem>> -> memref<1x!tpu.dma_semaphore, #tpu.memory_space<semaphore_mem>>
    %320 = tpu.memref_squeeze %319 : memref<1x!tpu.dma_semaphore, #tpu.memory_space<semaphore_mem>> -> memref<!tpu.dma_semaphore, #tpu.memory_space<semaphore_mem>>
    tpu.enqueue_dma source(%317 : memref<1x128xf32, #tpu.memory_space<any>>) target(%318 : memref<1x128xf32, #tpu.memory_space<vmem>>) target_semaphore(%320 : memref<!tpu.dma_semaphore, #tpu.memory_space<semaphore_mem>>)
    %c0_i32_200 = arith.constant 0 : i32
    %c0_i32_201 = arith.constant 0 : i32
    %321 = tpu.memref_slice %arg2[%4, %c0_i32_201] : memref<1001x128xf32, #tpu.memory_space<any>> -> memref<1x128xf32, #tpu.memory_space<any>>
    %c0_i32_202 = arith.constant 0 : i32
    %c0_i32_203 = arith.constant 0 : i32
    %322 = tpu.memref_slice %arg4[%c0_i32_202, %c0_i32_203] : memref<40x128xf32, #tpu.memory_space<vmem>> -> memref<1x128xf32, #tpu.memory_space<vmem>>
    %323 = tpu.memref_slice %arg5[%c0_i32_200] : memref<40x!tpu.dma_semaphore, #tpu.memory_space<semaphore_mem>> -> memref<1x!tpu.dma_semaphore, #tpu.memory_space<semaphore_mem>>
    %324 = tpu.memref_squeeze %323 : memref<1x!tpu.dma_semaphore, #tpu.memory_space<semaphore_mem>> -> memref<!tpu.dma_semaphore, #tpu.memory_space<semaphore_mem>>
    tpu.wait_dma2 semaphore(%324 : memref<!tpu.dma_semaphore, #tpu.memory_space<semaphore_mem>>) src(%321 : memref<1x128xf32, #tpu.memory_space<any>>) dst(%322 : memref<1x128xf32, #tpu.memory_space<vmem>>)
    %c8_i32_204 = arith.constant 8 : i32
    %c0_i32_205 = arith.constant 0 : i32
    %325 = tpu.memref_slice %arg2[%12, %c0_i32_205] : memref<1001x128xf32, #tpu.memory_space<any>> -> memref<1x128xf32, #tpu.memory_space<any>>
    %c8_i32_206 = arith.constant 8 : i32
    %c0_i32_207 = arith.constant 0 : i32
    %326 = tpu.memref_slice %arg4[%c8_i32_206, %c0_i32_207] : memref<40x128xf32, #tpu.memory_space<vmem>> -> memref<1x128xf32, #tpu.memory_space<vmem>>
    %327 = tpu.memref_slice %arg5[%c8_i32_204] : memref<40x!tpu.dma_semaphore, #tpu.memory_space<semaphore_mem>> -> memref<1x!tpu.dma_semaphore, #tpu.memory_space<semaphore_mem>>
    %328 = tpu.memref_squeeze %327 : memref<1x!tpu.dma_semaphore, #tpu.memory_space<semaphore_mem>> -> memref<!tpu.dma_semaphore, #tpu.memory_space<semaphore_mem>>
    tpu.wait_dma2 semaphore(%328 : memref<!tpu.dma_semaphore, #tpu.memory_space<semaphore_mem>>) src(%325 : memref<1x128xf32, #tpu.memory_space<any>>) dst(%326 : memref<1x128xf32, #tpu.memory_space<vmem>>)
    %c16_i32_208 = arith.constant 16 : i32
    %c0_i32_209 = arith.constant 0 : i32
    %329 = tpu.memref_slice %arg2[%20, %c0_i32_209] : memref<1001x128xf32, #tpu.memory_space<any>> -> memref<1x128xf32, #tpu.memory_space<any>>
    %c16_i32_210 = arith.constant 16 : i32
    %c0_i32_211 = arith.constant 0 : i32
    %330 = tpu.memref_slice %arg4[%c16_i32_210, %c0_i32_211] : memref<40x128xf32, #tpu.memory_space<vmem>> -> memref<1x128xf32, #tpu.memory_space<vmem>>
    %331 = tpu.memref_slice %arg5[%c16_i32_208] : memref<40x!tpu.dma_semaphore, #tpu.memory_space<semaphore_mem>> -> memref<1x!tpu.dma_semaphore, #tpu.memory_space<semaphore_mem>>
    %332 = tpu.memref_squeeze %331 : memref<1x!tpu.dma_semaphore, #tpu.memory_space<semaphore_mem>> -> memref<!tpu.dma_semaphore, #tpu.memory_space<semaphore_mem>>
    tpu.wait_dma2 semaphore(%332 : memref<!tpu.dma_semaphore, #tpu.memory_space<semaphore_mem>>) src(%329 : memref<1x128xf32, #tpu.memory_space<any>>) dst(%330 : memref<1x128xf32, #tpu.memory_space<vmem>>)
    %c24_i32_212 = arith.constant 24 : i32
    %c0_i32_213 = arith.constant 0 : i32
    %333 = tpu.memref_slice %arg2[%28, %c0_i32_213] : memref<1001x128xf32, #tpu.memory_space<any>> -> memref<1x128xf32, #tpu.memory_space<any>>
    %c24_i32_214 = arith.constant 24 : i32
    %c0_i32_215 = arith.constant 0 : i32
    %334 = tpu.memref_slice %arg4[%c24_i32_214, %c0_i32_215] : memref<40x128xf32, #tpu.memory_space<vmem>> -> memref<1x128xf32, #tpu.memory_space<vmem>>
    %335 = tpu.memref_slice %arg5[%c24_i32_212] : memref<40x!tpu.dma_semaphore, #tpu.memory_space<semaphore_mem>> -> memref<1x!tpu.dma_semaphore, #tpu.memory_space<semaphore_mem>>
    %336 = tpu.memref_squeeze %335 : memref<1x!tpu.dma_semaphore, #tpu.memory_space<semaphore_mem>> -> memref<!tpu.dma_semaphore, #tpu.memory_space<semaphore_mem>>
    tpu.wait_dma2 semaphore(%336 : memref<!tpu.dma_semaphore, #tpu.memory_space<semaphore_mem>>) src(%333 : memref<1x128xf32, #tpu.memory_space<any>>) dst(%334 : memref<1x128xf32, #tpu.memory_space<vmem>>)
    %c32_i32_216 = arith.constant 32 : i32
    %c0_i32_217 = arith.constant 0 : i32
    %337 = tpu.memref_slice %arg2[%36, %c0_i32_217] : memref<1001x128xf32, #tpu.memory_space<any>> -> memref<1x128xf32, #tpu.memory_space<any>>
    %c32_i32_218 = arith.constant 32 : i32
    %c0_i32_219 = arith.constant 0 : i32
    %338 = tpu.memref_slice %arg4[%c32_i32_218, %c0_i32_219] : memref<40x128xf32, #tpu.memory_space<vmem>> -> memref<1x128xf32, #tpu.memory_space<vmem>>
    %339 = tpu.memref_slice %arg5[%c32_i32_216] : memref<40x!tpu.dma_semaphore, #tpu.memory_space<semaphore_mem>> -> memref<1x!tpu.dma_semaphore, #tpu.memory_space<semaphore_mem>>
    %340 = tpu.memref_squeeze %339 : memref<1x!tpu.dma_semaphore, #tpu.memory_space<semaphore_mem>> -> memref<!tpu.dma_semaphore, #tpu.memory_space<semaphore_mem>>
    tpu.wait_dma2 semaphore(%340 : memref<!tpu.dma_semaphore, #tpu.memory_space<semaphore_mem>>) src(%337 : memref<1x128xf32, #tpu.memory_space<any>>) dst(%338 : memref<1x128xf32, #tpu.memory_space<vmem>>)
    %c1_i32_220 = arith.constant 1 : i32
    %c0_i32_221 = arith.constant 0 : i32
    %341 = tpu.memref_slice %arg2[%44, %c0_i32_221] : memref<1001x128xf32, #tpu.memory_space<any>> -> memref<1x128xf32, #tpu.memory_space<any>>
    %c1_i32_222 = arith.constant 1 : i32
    %c0_i32_223 = arith.constant 0 : i32
    %342 = tpu.memref_slice %arg4[%c1_i32_222, %c0_i32_223] : memref<40x128xf32, #tpu.memory_space<vmem>> -> memref<1x128xf32, #tpu.memory_space<vmem>>
    %343 = tpu.memref_slice %arg5[%c1_i32_220] : memref<40x!tpu.dma_semaphore, #tpu.memory_space<semaphore_mem>> -> memref<1x!tpu.dma_semaphore, #tpu.memory_space<semaphore_mem>>
    %344 = tpu.memref_squeeze %343 : memref<1x!tpu.dma_semaphore, #tpu.memory_space<semaphore_mem>> -> memref<!tpu.dma_semaphore, #tpu.memory_space<semaphore_mem>>
    tpu.wait_dma2 semaphore(%344 : memref<!tpu.dma_semaphore, #tpu.memory_space<semaphore_mem>>) src(%341 : memref<1x128xf32, #tpu.memory_space<any>>) dst(%342 : memref<1x128xf32, #tpu.memory_space<vmem>>)
    %c9_i32_224 = arith.constant 9 : i32
    %c0_i32_225 = arith.constant 0 : i32
    %345 = tpu.memref_slice %arg2[%52, %c0_i32_225] : memref<1001x128xf32, #tpu.memory_space<any>> -> memref<1x128xf32, #tpu.memory_space<any>>
    %c9_i32_226 = arith.constant 9 : i32
    %c0_i32_227 = arith.constant 0 : i32
    %346 = tpu.memref_slice %arg4[%c9_i32_226, %c0_i32_227] : memref<40x128xf32, #tpu.memory_space<vmem>> -> memref<1x128xf32, #tpu.memory_space<vmem>>
    %347 = tpu.memref_slice %arg5[%c9_i32_224] : memref<40x!tpu.dma_semaphore, #tpu.memory_space<semaphore_mem>> -> memref<1x!tpu.dma_semaphore, #tpu.memory_space<semaphore_mem>>
    %348 = tpu.memref_squeeze %347 : memref<1x!tpu.dma_semaphore, #tpu.memory_space<semaphore_mem>> -> memref<!tpu.dma_semaphore, #tpu.memory_space<semaphore_mem>>
    tpu.wait_dma2 semaphore(%348 : memref<!tpu.dma_semaphore, #tpu.memory_space<semaphore_mem>>) src(%345 : memref<1x128xf32, #tpu.memory_space<any>>) dst(%346 : memref<1x128xf32, #tpu.memory_space<vmem>>)
    %c17_i32_228 = arith.constant 17 : i32
    %c0_i32_229 = arith.constant 0 : i32
    %349 = tpu.memref_slice %arg2[%60, %c0_i32_229] : memref<1001x128xf32, #tpu.memory_space<any>> -> memref<1x128xf32, #tpu.memory_space<any>>
    %c17_i32_230 = arith.constant 17 : i32
    %c0_i32_231 = arith.constant 0 : i32
    %350 = tpu.memref_slice %arg4[%c17_i32_230, %c0_i32_231] : memref<40x128xf32, #tpu.memory_space<vmem>> -> memref<1x128xf32, #tpu.memory_space<vmem>>
    %351 = tpu.memref_slice %arg5[%c17_i32_228] : memref<40x!tpu.dma_semaphore, #tpu.memory_space<semaphore_mem>> -> memref<1x!tpu.dma_semaphore, #tpu.memory_space<semaphore_mem>>
    %352 = tpu.memref_squeeze %351 : memref<1x!tpu.dma_semaphore, #tpu.memory_space<semaphore_mem>> -> memref<!tpu.dma_semaphore, #tpu.memory_space<semaphore_mem>>
    tpu.wait_dma2 semaphore(%352 : memref<!tpu.dma_semaphore, #tpu.memory_space<semaphore_mem>>) src(%349 : memref<1x128xf32, #tpu.memory_space<any>>) dst(%350 : memref<1x128xf32, #tpu.memory_space<vmem>>)
    %c25_i32_232 = arith.constant 25 : i32
    %c0_i32_233 = arith.constant 0 : i32
    %353 = tpu.memref_slice %arg2[%68, %c0_i32_233] : memref<1001x128xf32, #tpu.memory_space<any>> -> memref<1x128xf32, #tpu.memory_space<any>>
    %c25_i32_234 = arith.constant 25 : i32
    %c0_i32_235 = arith.constant 0 : i32
    %354 = tpu.memref_slice %arg4[%c25_i32_234, %c0_i32_235] : memref<40x128xf32, #tpu.memory_space<vmem>> -> memref<1x128xf32, #tpu.memory_space<vmem>>
    %355 = tpu.memref_slice %arg5[%c25_i32_232] : memref<40x!tpu.dma_semaphore, #tpu.memory_space<semaphore_mem>> -> memref<1x!tpu.dma_semaphore, #tpu.memory_space<semaphore_mem>>
    %356 = tpu.memref_squeeze %355 : memref<1x!tpu.dma_semaphore, #tpu.memory_space<semaphore_mem>> -> memref<!tpu.dma_semaphore, #tpu.memory_space<semaphore_mem>>
    tpu.wait_dma2 semaphore(%356 : memref<!tpu.dma_semaphore, #tpu.memory_space<semaphore_mem>>) src(%353 : memref<1x128xf32, #tpu.memory_space<any>>) dst(%354 : memref<1x128xf32, #tpu.memory_space<vmem>>)
    %c33_i32_236 = arith.constant 33 : i32
    %c0_i32_237 = arith.constant 0 : i32
    %357 = tpu.memref_slice %arg2[%76, %c0_i32_237] : memref<1001x128xf32, #tpu.memory_space<any>> -> memref<1x128xf32, #tpu.memory_space<any>>
    %c33_i32_238 = arith.constant 33 : i32
    %c0_i32_239 = arith.constant 0 : i32
    %358 = tpu.memref_slice %arg4[%c33_i32_238, %c0_i32_239] : memref<40x128xf32, #tpu.memory_space<vmem>> -> memref<1x128xf32, #tpu.memory_space<vmem>>
    %359 = tpu.memref_slice %arg5[%c33_i32_236] : memref<40x!tpu.dma_semaphore, #tpu.memory_space<semaphore_mem>> -> memref<1x!tpu.dma_semaphore, #tpu.memory_space<semaphore_mem>>
    %360 = tpu.memref_squeeze %359 : memref<1x!tpu.dma_semaphore, #tpu.memory_space<semaphore_mem>> -> memref<!tpu.dma_semaphore, #tpu.memory_space<semaphore_mem>>
    tpu.wait_dma2 semaphore(%360 : memref<!tpu.dma_semaphore, #tpu.memory_space<semaphore_mem>>) src(%357 : memref<1x128xf32, #tpu.memory_space<any>>) dst(%358 : memref<1x128xf32, #tpu.memory_space<vmem>>)
    %c2_i32_240 = arith.constant 2 : i32
    %c0_i32_241 = arith.constant 0 : i32
    %361 = tpu.memref_slice %arg2[%84, %c0_i32_241] : memref<1001x128xf32, #tpu.memory_space<any>> -> memref<1x128xf32, #tpu.memory_space<any>>
    %c2_i32_242 = arith.constant 2 : i32
    %c0_i32_243 = arith.constant 0 : i32
    %362 = tpu.memref_slice %arg4[%c2_i32_242, %c0_i32_243] : memref<40x128xf32, #tpu.memory_space<vmem>> -> memref<1x128xf32, #tpu.memory_space<vmem>>
    %363 = tpu.memref_slice %arg5[%c2_i32_240] : memref<40x!tpu.dma_semaphore, #tpu.memory_space<semaphore_mem>> -> memref<1x!tpu.dma_semaphore, #tpu.memory_space<semaphore_mem>>
    %364 = tpu.memref_squeeze %363 : memref<1x!tpu.dma_semaphore, #tpu.memory_space<semaphore_mem>> -> memref<!tpu.dma_semaphore, #tpu.memory_space<semaphore_mem>>
    tpu.wait_dma2 semaphore(%364 : memref<!tpu.dma_semaphore, #tpu.memory_space<semaphore_mem>>) src(%361 : memref<1x128xf32, #tpu.memory_space<any>>) dst(%362 : memref<1x128xf32, #tpu.memory_space<vmem>>)
    %c10_i32_244 = arith.constant 10 : i32
    %c0_i32_245 = arith.constant 0 : i32
    %365 = tpu.memref_slice %arg2[%92, %c0_i32_245] : memref<1001x128xf32, #tpu.memory_space<any>> -> memref<1x128xf32, #tpu.memory_space<any>>
    %c10_i32_246 = arith.constant 10 : i32
    %c0_i32_247 = arith.constant 0 : i32
    %366 = tpu.memref_slice %arg4[%c10_i32_246, %c0_i32_247] : memref<40x128xf32, #tpu.memory_space<vmem>> -> memref<1x128xf32, #tpu.memory_space<vmem>>
    %367 = tpu.memref_slice %arg5[%c10_i32_244] : memref<40x!tpu.dma_semaphore, #tpu.memory_space<semaphore_mem>> -> memref<1x!tpu.dma_semaphore, #tpu.memory_space<semaphore_mem>>
    %368 = tpu.memref_squeeze %367 : memref<1x!tpu.dma_semaphore, #tpu.memory_space<semaphore_mem>> -> memref<!tpu.dma_semaphore, #tpu.memory_space<semaphore_mem>>
    tpu.wait_dma2 semaphore(%368 : memref<!tpu.dma_semaphore, #tpu.memory_space<semaphore_mem>>) src(%365 : memref<1x128xf32, #tpu.memory_space<any>>) dst(%366 : memref<1x128xf32, #tpu.memory_space<vmem>>)
    %c18_i32_248 = arith.constant 18 : i32
    %c0_i32_249 = arith.constant 0 : i32
    %369 = tpu.memref_slice %arg2[%100, %c0_i32_249] : memref<1001x128xf32, #tpu.memory_space<any>> -> memref<1x128xf32, #tpu.memory_space<any>>
    %c18_i32_250 = arith.constant 18 : i32
    %c0_i32_251 = arith.constant 0 : i32
    %370 = tpu.memref_slice %arg4[%c18_i32_250, %c0_i32_251] : memref<40x128xf32, #tpu.memory_space<vmem>> -> memref<1x128xf32, #tpu.memory_space<vmem>>
    %371 = tpu.memref_slice %arg5[%c18_i32_248] : memref<40x!tpu.dma_semaphore, #tpu.memory_space<semaphore_mem>> -> memref<1x!tpu.dma_semaphore, #tpu.memory_space<semaphore_mem>>
    %372 = tpu.memref_squeeze %371 : memref<1x!tpu.dma_semaphore, #tpu.memory_space<semaphore_mem>> -> memref<!tpu.dma_semaphore, #tpu.memory_space<semaphore_mem>>
    tpu.wait_dma2 semaphore(%372 : memref<!tpu.dma_semaphore, #tpu.memory_space<semaphore_mem>>) src(%369 : memref<1x128xf32, #tpu.memory_space<any>>) dst(%370 : memref<1x128xf32, #tpu.memory_space<vmem>>)
    %c26_i32_252 = arith.constant 26 : i32
    %c0_i32_253 = arith.constant 0 : i32
    %373 = tpu.memref_slice %arg2[%108, %c0_i32_253] : memref<1001x128xf32, #tpu.memory_space<any>> -> memref<1x128xf32, #tpu.memory_space<any>>
    %c26_i32_254 = arith.constant 26 : i32
    %c0_i32_255 = arith.constant 0 : i32
    %374 = tpu.memref_slice %arg4[%c26_i32_254, %c0_i32_255] : memref<40x128xf32, #tpu.memory_space<vmem>> -> memref<1x128xf32, #tpu.memory_space<vmem>>
    %375 = tpu.memref_slice %arg5[%c26_i32_252] : memref<40x!tpu.dma_semaphore, #tpu.memory_space<semaphore_mem>> -> memref<1x!tpu.dma_semaphore, #tpu.memory_space<semaphore_mem>>
    %376 = tpu.memref_squeeze %375 : memref<1x!tpu.dma_semaphore, #tpu.memory_space<semaphore_mem>> -> memref<!tpu.dma_semaphore, #tpu.memory_space<semaphore_mem>>
    tpu.wait_dma2 semaphore(%376 : memref<!tpu.dma_semaphore, #tpu.memory_space<semaphore_mem>>) src(%373 : memref<1x128xf32, #tpu.memory_space<any>>) dst(%374 : memref<1x128xf32, #tpu.memory_space<vmem>>)
    %c34_i32_256 = arith.constant 34 : i32
    %c0_i32_257 = arith.constant 0 : i32
    %377 = tpu.memref_slice %arg2[%116, %c0_i32_257] : memref<1001x128xf32, #tpu.memory_space<any>> -> memref<1x128xf32, #tpu.memory_space<any>>
    %c34_i32_258 = arith.constant 34 : i32
    %c0_i32_259 = arith.constant 0 : i32
    %378 = tpu.memref_slice %arg4[%c34_i32_258, %c0_i32_259] : memref<40x128xf32, #tpu.memory_space<vmem>> -> memref<1x128xf32, #tpu.memory_space<vmem>>
    %379 = tpu.memref_slice %arg5[%c34_i32_256] : memref<40x!tpu.dma_semaphore, #tpu.memory_space<semaphore_mem>> -> memref<1x!tpu.dma_semaphore, #tpu.memory_space<semaphore_mem>>
    %380 = tpu.memref_squeeze %379 : memref<1x!tpu.dma_semaphore, #tpu.memory_space<semaphore_mem>> -> memref<!tpu.dma_semaphore, #tpu.memory_space<semaphore_mem>>
    tpu.wait_dma2 semaphore(%380 : memref<!tpu.dma_semaphore, #tpu.memory_space<semaphore_mem>>) src(%377 : memref<1x128xf32, #tpu.memory_space<any>>) dst(%378 : memref<1x128xf32, #tpu.memory_space<vmem>>)
    %c3_i32_260 = arith.constant 3 : i32
    %c0_i32_261 = arith.constant 0 : i32
    %381 = tpu.memref_slice %arg2[%124, %c0_i32_261] : memref<1001x128xf32, #tpu.memory_space<any>> -> memref<1x128xf32, #tpu.memory_space<any>>
    %c3_i32_262 = arith.constant 3 : i32
    %c0_i32_263 = arith.constant 0 : i32
    %382 = tpu.memref_slice %arg4[%c3_i32_262, %c0_i32_263] : memref<40x128xf32, #tpu.memory_space<vmem>> -> memref<1x128xf32, #tpu.memory_space<vmem>>
    %383 = tpu.memref_slice %arg5[%c3_i32_260] : memref<40x!tpu.dma_semaphore, #tpu.memory_space<semaphore_mem>> -> memref<1x!tpu.dma_semaphore, #tpu.memory_space<semaphore_mem>>
    %384 = tpu.memref_squeeze %383 : memref<1x!tpu.dma_semaphore, #tpu.memory_space<semaphore_mem>> -> memref<!tpu.dma_semaphore, #tpu.memory_space<semaphore_mem>>
    tpu.wait_dma2 semaphore(%384 : memref<!tpu.dma_semaphore, #tpu.memory_space<semaphore_mem>>) src(%381 : memref<1x128xf32, #tpu.memory_space<any>>) dst(%382 : memref<1x128xf32, #tpu.memory_space<vmem>>)
    %c11_i32_264 = arith.constant 11 : i32
    %c0_i32_265 = arith.constant 0 : i32
    %385 = tpu.memref_slice %arg2[%132, %c0_i32_265] : memref<1001x128xf32, #tpu.memory_space<any>> -> memref<1x128xf32, #tpu.memory_space<any>>
    %c11_i32_266 = arith.constant 11 : i32
    %c0_i32_267 = arith.constant 0 : i32
    %386 = tpu.memref_slice %arg4[%c11_i32_266, %c0_i32_267] : memref<40x128xf32, #tpu.memory_space<vmem>> -> memref<1x128xf32, #tpu.memory_space<vmem>>
    %387 = tpu.memref_slice %arg5[%c11_i32_264] : memref<40x!tpu.dma_semaphore, #tpu.memory_space<semaphore_mem>> -> memref<1x!tpu.dma_semaphore, #tpu.memory_space<semaphore_mem>>
    %388 = tpu.memref_squeeze %387 : memref<1x!tpu.dma_semaphore, #tpu.memory_space<semaphore_mem>> -> memref<!tpu.dma_semaphore, #tpu.memory_space<semaphore_mem>>
    tpu.wait_dma2 semaphore(%388 : memref<!tpu.dma_semaphore, #tpu.memory_space<semaphore_mem>>) src(%385 : memref<1x128xf32, #tpu.memory_space<any>>) dst(%386 : memref<1x128xf32, #tpu.memory_space<vmem>>)
    %c19_i32_268 = arith.constant 19 : i32
    %c0_i32_269 = arith.constant 0 : i32
    %389 = tpu.memref_slice %arg2[%140, %c0_i32_269] : memref<1001x128xf32, #tpu.memory_space<any>> -> memref<1x128xf32, #tpu.memory_space<any>>
    %c19_i32_270 = arith.constant 19 : i32
    %c0_i32_271 = arith.constant 0 : i32
    %390 = tpu.memref_slice %arg4[%c19_i32_270, %c0_i32_271] : memref<40x128xf32, #tpu.memory_space<vmem>> -> memref<1x128xf32, #tpu.memory_space<vmem>>
    %391 = tpu.memref_slice %arg5[%c19_i32_268] : memref<40x!tpu.dma_semaphore, #tpu.memory_space<semaphore_mem>> -> memref<1x!tpu.dma_semaphore, #tpu.memory_space<semaphore_mem>>
    %392 = tpu.memref_squeeze %391 : memref<1x!tpu.dma_semaphore, #tpu.memory_space<semaphore_mem>> -> memref<!tpu.dma_semaphore, #tpu.memory_space<semaphore_mem>>
    tpu.wait_dma2 semaphore(%392 : memref<!tpu.dma_semaphore, #tpu.memory_space<semaphore_mem>>) src(%389 : memref<1x128xf32, #tpu.memory_space<any>>) dst(%390 : memref<1x128xf32, #tpu.memory_space<vmem>>)
    %c27_i32_272 = arith.constant 27 : i32
    %c0_i32_273 = arith.constant 0 : i32
    %393 = tpu.memref_slice %arg2[%148, %c0_i32_273] : memref<1001x128xf32, #tpu.memory_space<any>> -> memref<1x128xf32, #tpu.memory_space<any>>
    %c27_i32_274 = arith.constant 27 : i32
    %c0_i32_275 = arith.constant 0 : i32
    %394 = tpu.memref_slice %arg4[%c27_i32_274, %c0_i32_275] : memref<40x128xf32, #tpu.memory_space<vmem>> -> memref<1x128xf32, #tpu.memory_space<vmem>>
    %395 = tpu.memref_slice %arg5[%c27_i32_272] : memref<40x!tpu.dma_semaphore, #tpu.memory_space<semaphore_mem>> -> memref<1x!tpu.dma_semaphore, #tpu.memory_space<semaphore_mem>>
    %396 = tpu.memref_squeeze %395 : memref<1x!tpu.dma_semaphore, #tpu.memory_space<semaphore_mem>> -> memref<!tpu.dma_semaphore, #tpu.memory_space<semaphore_mem>>
    tpu.wait_dma2 semaphore(%396 : memref<!tpu.dma_semaphore, #tpu.memory_space<semaphore_mem>>) src(%393 : memref<1x128xf32, #tpu.memory_space<any>>) dst(%394 : memref<1x128xf32, #tpu.memory_space<vmem>>)
    %c35_i32_276 = arith.constant 35 : i32
    %c0_i32_277 = arith.constant 0 : i32
    %397 = tpu.memref_slice %arg2[%156, %c0_i32_277] : memref<1001x128xf32, #tpu.memory_space<any>> -> memref<1x128xf32, #tpu.memory_space<any>>
    %c35_i32_278 = arith.constant 35 : i32
    %c0_i32_279 = arith.constant 0 : i32
    %398 = tpu.memref_slice %arg4[%c35_i32_278, %c0_i32_279] : memref<40x128xf32, #tpu.memory_space<vmem>> -> memref<1x128xf32, #tpu.memory_space<vmem>>
    %399 = tpu.memref_slice %arg5[%c35_i32_276] : memref<40x!tpu.dma_semaphore, #tpu.memory_space<semaphore_mem>> -> memref<1x!tpu.dma_semaphore, #tpu.memory_space<semaphore_mem>>
    %400 = tpu.memref_squeeze %399 : memref<1x!tpu.dma_semaphore, #tpu.memory_space<semaphore_mem>> -> memref<!tpu.dma_semaphore, #tpu.memory_space<semaphore_mem>>
    tpu.wait_dma2 semaphore(%400 : memref<!tpu.dma_semaphore, #tpu.memory_space<semaphore_mem>>) src(%397 : memref<1x128xf32, #tpu.memory_space<any>>) dst(%398 : memref<1x128xf32, #tpu.memory_space<vmem>>)
    %c4_i32_280 = arith.constant 4 : i32
    %c0_i32_281 = arith.constant 0 : i32
    %401 = tpu.memref_slice %arg2[%164, %c0_i32_281] : memref<1001x128xf32, #tpu.memory_space<any>> -> memref<1x128xf32, #tpu.memory_space<any>>
    %c4_i32_282 = arith.constant 4 : i32
    %c0_i32_283 = arith.constant 0 : i32
    %402 = tpu.memref_slice %arg4[%c4_i32_282, %c0_i32_283] : memref<40x128xf32, #tpu.memory_space<vmem>> -> memref<1x128xf32, #tpu.memory_space<vmem>>
    %403 = tpu.memref_slice %arg5[%c4_i32_280] : memref<40x!tpu.dma_semaphore, #tpu.memory_space<semaphore_mem>> -> memref<1x!tpu.dma_semaphore, #tpu.memory_space<semaphore_mem>>
    %404 = tpu.memref_squeeze %403 : memref<1x!tpu.dma_semaphore, #tpu.memory_space<semaphore_mem>> -> memref<!tpu.dma_semaphore, #tpu.memory_space<semaphore_mem>>
    tpu.wait_dma2 semaphore(%404 : memref<!tpu.dma_semaphore, #tpu.memory_space<semaphore_mem>>) src(%401 : memref<1x128xf32, #tpu.memory_space<any>>) dst(%402 : memref<1x128xf32, #tpu.memory_space<vmem>>)
    %c12_i32_284 = arith.constant 12 : i32
    %c0_i32_285 = arith.constant 0 : i32
    %405 = tpu.memref_slice %arg2[%172, %c0_i32_285] : memref<1001x128xf32, #tpu.memory_space<any>> -> memref<1x128xf32, #tpu.memory_space<any>>
    %c12_i32_286 = arith.constant 12 : i32
    %c0_i32_287 = arith.constant 0 : i32
    %406 = tpu.memref_slice %arg4[%c12_i32_286, %c0_i32_287] : memref<40x128xf32, #tpu.memory_space<vmem>> -> memref<1x128xf32, #tpu.memory_space<vmem>>
    %407 = tpu.memref_slice %arg5[%c12_i32_284] : memref<40x!tpu.dma_semaphore, #tpu.memory_space<semaphore_mem>> -> memref<1x!tpu.dma_semaphore, #tpu.memory_space<semaphore_mem>>
    %408 = tpu.memref_squeeze %407 : memref<1x!tpu.dma_semaphore, #tpu.memory_space<semaphore_mem>> -> memref<!tpu.dma_semaphore, #tpu.memory_space<semaphore_mem>>
    tpu.wait_dma2 semaphore(%408 : memref<!tpu.dma_semaphore, #tpu.memory_space<semaphore_mem>>) src(%405 : memref<1x128xf32, #tpu.memory_space<any>>) dst(%406 : memref<1x128xf32, #tpu.memory_space<vmem>>)
    %c20_i32_288 = arith.constant 20 : i32
    %c0_i32_289 = arith.constant 0 : i32
    %409 = tpu.memref_slice %arg2[%180, %c0_i32_289] : memref<1001x128xf32, #tpu.memory_space<any>> -> memref<1x128xf32, #tpu.memory_space<any>>
    %c20_i32_290 = arith.constant 20 : i32
    %c0_i32_291 = arith.constant 0 : i32
    %410 = tpu.memref_slice %arg4[%c20_i32_290, %c0_i32_291] : memref<40x128xf32, #tpu.memory_space<vmem>> -> memref<1x128xf32, #tpu.memory_space<vmem>>
    %411 = tpu.memref_slice %arg5[%c20_i32_288] : memref<40x!tpu.dma_semaphore, #tpu.memory_space<semaphore_mem>> -> memref<1x!tpu.dma_semaphore, #tpu.memory_space<semaphore_mem>>
    %412 = tpu.memref_squeeze %411 : memref<1x!tpu.dma_semaphore, #tpu.memory_space<semaphore_mem>> -> memref<!tpu.dma_semaphore, #tpu.memory_space<semaphore_mem>>
    tpu.wait_dma2 semaphore(%412 : memref<!tpu.dma_semaphore, #tpu.memory_space<semaphore_mem>>) src(%409 : memref<1x128xf32, #tpu.memory_space<any>>) dst(%410 : memref<1x128xf32, #tpu.memory_space<vmem>>)
    %c28_i32_292 = arith.constant 28 : i32
    %c0_i32_293 = arith.constant 0 : i32
    %413 = tpu.memref_slice %arg2[%188, %c0_i32_293] : memref<1001x128xf32, #tpu.memory_space<any>> -> memref<1x128xf32, #tpu.memory_space<any>>
    %c28_i32_294 = arith.constant 28 : i32
    %c0_i32_295 = arith.constant 0 : i32
    %414 = tpu.memref_slice %arg4[%c28_i32_294, %c0_i32_295] : memref<40x128xf32, #tpu.memory_space<vmem>> -> memref<1x128xf32, #tpu.memory_space<vmem>>
    %415 = tpu.memref_slice %arg5[%c28_i32_292] : memref<40x!tpu.dma_semaphore, #tpu.memory_space<semaphore_mem>> -> memref<1x!tpu.dma_semaphore, #tpu.memory_space<semaphore_mem>>
    %416 = tpu.memref_squeeze %415 : memref<1x!tpu.dma_semaphore, #tpu.memory_space<semaphore_mem>> -> memref<!tpu.dma_semaphore, #tpu.memory_space<semaphore_mem>>
    tpu.wait_dma2 semaphore(%416 : memref<!tpu.dma_semaphore, #tpu.memory_space<semaphore_mem>>) src(%413 : memref<1x128xf32, #tpu.memory_space<any>>) dst(%414 : memref<1x128xf32, #tpu.memory_space<vmem>>)
    %c36_i32_296 = arith.constant 36 : i32
    %c0_i32_297 = arith.constant 0 : i32
    %417 = tpu.memref_slice %arg2[%196, %c0_i32_297] : memref<1001x128xf32, #tpu.memory_space<any>> -> memref<1x128xf32, #tpu.memory_space<any>>
    %c36_i32_298 = arith.constant 36 : i32
    %c0_i32_299 = arith.constant 0 : i32
    %418 = tpu.memref_slice %arg4[%c36_i32_298, %c0_i32_299] : memref<40x128xf32, #tpu.memory_space<vmem>> -> memref<1x128xf32, #tpu.memory_space<vmem>>
    %419 = tpu.memref_slice %arg5[%c36_i32_296] : memref<40x!tpu.dma_semaphore, #tpu.memory_space<semaphore_mem>> -> memref<1x!tpu.dma_semaphore, #tpu.memory_space<semaphore_mem>>
    %420 = tpu.memref_squeeze %419 : memref<1x!tpu.dma_semaphore, #tpu.memory_space<semaphore_mem>> -> memref<!tpu.dma_semaphore, #tpu.memory_space<semaphore_mem>>
    tpu.wait_dma2 semaphore(%420 : memref<!tpu.dma_semaphore, #tpu.memory_space<semaphore_mem>>) src(%417 : memref<1x128xf32, #tpu.memory_space<any>>) dst(%418 : memref<1x128xf32, #tpu.memory_space<vmem>>)
    %c5_i32_300 = arith.constant 5 : i32
    %c0_i32_301 = arith.constant 0 : i32
    %421 = tpu.memref_slice %arg2[%204, %c0_i32_301] : memref<1001x128xf32, #tpu.memory_space<any>> -> memref<1x128xf32, #tpu.memory_space<any>>
    %c5_i32_302 = arith.constant 5 : i32
    %c0_i32_303 = arith.constant 0 : i32
    %422 = tpu.memref_slice %arg4[%c5_i32_302, %c0_i32_303] : memref<40x128xf32, #tpu.memory_space<vmem>> -> memref<1x128xf32, #tpu.memory_space<vmem>>
    %423 = tpu.memref_slice %arg5[%c5_i32_300] : memref<40x!tpu.dma_semaphore, #tpu.memory_space<semaphore_mem>> -> memref<1x!tpu.dma_semaphore, #tpu.memory_space<semaphore_mem>>
    %424 = tpu.memref_squeeze %423 : memref<1x!tpu.dma_semaphore, #tpu.memory_space<semaphore_mem>> -> memref<!tpu.dma_semaphore, #tpu.memory_space<semaphore_mem>>
    tpu.wait_dma2 semaphore(%424 : memref<!tpu.dma_semaphore, #tpu.memory_space<semaphore_mem>>) src(%421 : memref<1x128xf32, #tpu.memory_space<any>>) dst(%422 : memref<1x128xf32, #tpu.memory_space<vmem>>)
    %c13_i32_304 = arith.constant 13 : i32
    %c0_i32_305 = arith.constant 0 : i32
    %425 = tpu.memref_slice %arg2[%212, %c0_i32_305] : memref<1001x128xf32, #tpu.memory_space<any>> -> memref<1x128xf32, #tpu.memory_space<any>>
    %c13_i32_306 = arith.constant 13 : i32
    %c0_i32_307 = arith.constant 0 : i32
    %426 = tpu.memref_slice %arg4[%c13_i32_306, %c0_i32_307] : memref<40x128xf32, #tpu.memory_space<vmem>> -> memref<1x128xf32, #tpu.memory_space<vmem>>
    %427 = tpu.memref_slice %arg5[%c13_i32_304] : memref<40x!tpu.dma_semaphore, #tpu.memory_space<semaphore_mem>> -> memref<1x!tpu.dma_semaphore, #tpu.memory_space<semaphore_mem>>
    %428 = tpu.memref_squeeze %427 : memref<1x!tpu.dma_semaphore, #tpu.memory_space<semaphore_mem>> -> memref<!tpu.dma_semaphore, #tpu.memory_space<semaphore_mem>>
    tpu.wait_dma2 semaphore(%428 : memref<!tpu.dma_semaphore, #tpu.memory_space<semaphore_mem>>) src(%425 : memref<1x128xf32, #tpu.memory_space<any>>) dst(%426 : memref<1x128xf32, #tpu.memory_space<vmem>>)
    %c21_i32_308 = arith.constant 21 : i32
    %c0_i32_309 = arith.constant 0 : i32
    %429 = tpu.memref_slice %arg2[%220, %c0_i32_309] : memref<1001x128xf32, #tpu.memory_space<any>> -> memref<1x128xf32, #tpu.memory_space<any>>
    %c21_i32_310 = arith.constant 21 : i32
    %c0_i32_311 = arith.constant 0 : i32
    %430 = tpu.memref_slice %arg4[%c21_i32_310, %c0_i32_311] : memref<40x128xf32, #tpu.memory_space<vmem>> -> memref<1x128xf32, #tpu.memory_space<vmem>>
    %431 = tpu.memref_slice %arg5[%c21_i32_308] : memref<40x!tpu.dma_semaphore, #tpu.memory_space<semaphore_mem>> -> memref<1x!tpu.dma_semaphore, #tpu.memory_space<semaphore_mem>>
    %432 = tpu.memref_squeeze %431 : memref<1x!tpu.dma_semaphore, #tpu.memory_space<semaphore_mem>> -> memref<!tpu.dma_semaphore, #tpu.memory_space<semaphore_mem>>
    tpu.wait_dma2 semaphore(%432 : memref<!tpu.dma_semaphore, #tpu.memory_space<semaphore_mem>>) src(%429 : memref<1x128xf32, #tpu.memory_space<any>>) dst(%430 : memref<1x128xf32, #tpu.memory_space<vmem>>)
    %c29_i32_312 = arith.constant 29 : i32
    %c0_i32_313 = arith.constant 0 : i32
    %433 = tpu.memref_slice %arg2[%228, %c0_i32_313] : memref<1001x128xf32, #tpu.memory_space<any>> -> memref<1x128xf32, #tpu.memory_space<any>>
    %c29_i32_314 = arith.constant 29 : i32
    %c0_i32_315 = arith.constant 0 : i32
    %434 = tpu.memref_slice %arg4[%c29_i32_314, %c0_i32_315] : memref<40x128xf32, #tpu.memory_space<vmem>> -> memref<1x128xf32, #tpu.memory_space<vmem>>
    %435 = tpu.memref_slice %arg5[%c29_i32_312] : memref<40x!tpu.dma_semaphore, #tpu.memory_space<semaphore_mem>> -> memref<1x!tpu.dma_semaphore, #tpu.memory_space<semaphore_mem>>
    %436 = tpu.memref_squeeze %435 : memref<1x!tpu.dma_semaphore, #tpu.memory_space<semaphore_mem>> -> memref<!tpu.dma_semaphore, #tpu.memory_space<semaphore_mem>>
    tpu.wait_dma2 semaphore(%436 : memref<!tpu.dma_semaphore, #tpu.memory_space<semaphore_mem>>) src(%433 : memref<1x128xf32, #tpu.memory_space<any>>) dst(%434 : memref<1x128xf32, #tpu.memory_space<vmem>>)
    %c37_i32_316 = arith.constant 37 : i32
    %c0_i32_317 = arith.constant 0 : i32
    %437 = tpu.memref_slice %arg2[%236, %c0_i32_317] : memref<1001x128xf32, #tpu.memory_space<any>> -> memref<1x128xf32, #tpu.memory_space<any>>
    %c37_i32_318 = arith.constant 37 : i32
    %c0_i32_319 = arith.constant 0 : i32
    %438 = tpu.memref_slice %arg4[%c37_i32_318, %c0_i32_319] : memref<40x128xf32, #tpu.memory_space<vmem>> -> memref<1x128xf32, #tpu.memory_space<vmem>>
    %439 = tpu.memref_slice %arg5[%c37_i32_316] : memref<40x!tpu.dma_semaphore, #tpu.memory_space<semaphore_mem>> -> memref<1x!tpu.dma_semaphore, #tpu.memory_space<semaphore_mem>>
    %440 = tpu.memref_squeeze %439 : memref<1x!tpu.dma_semaphore, #tpu.memory_space<semaphore_mem>> -> memref<!tpu.dma_semaphore, #tpu.memory_space<semaphore_mem>>
    tpu.wait_dma2 semaphore(%440 : memref<!tpu.dma_semaphore, #tpu.memory_space<semaphore_mem>>) src(%437 : memref<1x128xf32, #tpu.memory_space<any>>) dst(%438 : memref<1x128xf32, #tpu.memory_space<vmem>>)
    %c6_i32_320 = arith.constant 6 : i32
    %c0_i32_321 = arith.constant 0 : i32
    %441 = tpu.memref_slice %arg2[%244, %c0_i32_321] : memref<1001x128xf32, #tpu.memory_space<any>> -> memref<1x128xf32, #tpu.memory_space<any>>
    %c6_i32_322 = arith.constant 6 : i32
    %c0_i32_323 = arith.constant 0 : i32
    %442 = tpu.memref_slice %arg4[%c6_i32_322, %c0_i32_323] : memref<40x128xf32, #tpu.memory_space<vmem>> -> memref<1x128xf32, #tpu.memory_space<vmem>>
    %443 = tpu.memref_slice %arg5[%c6_i32_320] : memref<40x!tpu.dma_semaphore, #tpu.memory_space<semaphore_mem>> -> memref<1x!tpu.dma_semaphore, #tpu.memory_space<semaphore_mem>>
    %444 = tpu.memref_squeeze %443 : memref<1x!tpu.dma_semaphore, #tpu.memory_space<semaphore_mem>> -> memref<!tpu.dma_semaphore, #tpu.memory_space<semaphore_mem>>
    tpu.wait_dma2 semaphore(%444 : memref<!tpu.dma_semaphore, #tpu.memory_space<semaphore_mem>>) src(%441 : memref<1x128xf32, #tpu.memory_space<any>>) dst(%442 : memref<1x128xf32, #tpu.memory_space<vmem>>)
    %c14_i32_324 = arith.constant 14 : i32
    %c0_i32_325 = arith.constant 0 : i32
    %445 = tpu.memref_slice %arg2[%252, %c0_i32_325] : memref<1001x128xf32, #tpu.memory_space<any>> -> memref<1x128xf32, #tpu.memory_space<any>>
    %c14_i32_326 = arith.constant 14 : i32
    %c0_i32_327 = arith.constant 0 : i32
    %446 = tpu.memref_slice %arg4[%c14_i32_326, %c0_i32_327] : memref<40x128xf32, #tpu.memory_space<vmem>> -> memref<1x128xf32, #tpu.memory_space<vmem>>
    %447 = tpu.memref_slice %arg5[%c14_i32_324] : memref<40x!tpu.dma_semaphore, #tpu.memory_space<semaphore_mem>> -> memref<1x!tpu.dma_semaphore, #tpu.memory_space<semaphore_mem>>
    %448 = tpu.memref_squeeze %447 : memref<1x!tpu.dma_semaphore, #tpu.memory_space<semaphore_mem>> -> memref<!tpu.dma_semaphore, #tpu.memory_space<semaphore_mem>>
    tpu.wait_dma2 semaphore(%448 : memref<!tpu.dma_semaphore, #tpu.memory_space<semaphore_mem>>) src(%445 : memref<1x128xf32, #tpu.memory_space<any>>) dst(%446 : memref<1x128xf32, #tpu.memory_space<vmem>>)
    %c22_i32_328 = arith.constant 22 : i32
    %c0_i32_329 = arith.constant 0 : i32
    %449 = tpu.memref_slice %arg2[%260, %c0_i32_329] : memref<1001x128xf32, #tpu.memory_space<any>> -> memref<1x128xf32, #tpu.memory_space<any>>
    %c22_i32_330 = arith.constant 22 : i32
    %c0_i32_331 = arith.constant 0 : i32
    %450 = tpu.memref_slice %arg4[%c22_i32_330, %c0_i32_331] : memref<40x128xf32, #tpu.memory_space<vmem>> -> memref<1x128xf32, #tpu.memory_space<vmem>>
    %451 = tpu.memref_slice %arg5[%c22_i32_328] : memref<40x!tpu.dma_semaphore, #tpu.memory_space<semaphore_mem>> -> memref<1x!tpu.dma_semaphore, #tpu.memory_space<semaphore_mem>>
    %452 = tpu.memref_squeeze %451 : memref<1x!tpu.dma_semaphore, #tpu.memory_space<semaphore_mem>> -> memref<!tpu.dma_semaphore, #tpu.memory_space<semaphore_mem>>
    tpu.wait_dma2 semaphore(%452 : memref<!tpu.dma_semaphore, #tpu.memory_space<semaphore_mem>>) src(%449 : memref<1x128xf32, #tpu.memory_space<any>>) dst(%450 : memref<1x128xf32, #tpu.memory_space<vmem>>)
    %c30_i32_332 = arith.constant 30 : i32
    %c0_i32_333 = arith.constant 0 : i32
    %453 = tpu.memref_slice %arg2[%268, %c0_i32_333] : memref<1001x128xf32, #tpu.memory_space<any>> -> memref<1x128xf32, #tpu.memory_space<any>>
    %c30_i32_334 = arith.constant 30 : i32
    %c0_i32_335 = arith.constant 0 : i32
    %454 = tpu.memref_slice %arg4[%c30_i32_334, %c0_i32_335] : memref<40x128xf32, #tpu.memory_space<vmem>> -> memref<1x128xf32, #tpu.memory_space<vmem>>
    %455 = tpu.memref_slice %arg5[%c30_i32_332] : memref<40x!tpu.dma_semaphore, #tpu.memory_space<semaphore_mem>> -> memref<1x!tpu.dma_semaphore, #tpu.memory_space<semaphore_mem>>
    %456 = tpu.memref_squeeze %455 : memref<1x!tpu.dma_semaphore, #tpu.memory_space<semaphore_mem>> -> memref<!tpu.dma_semaphore, #tpu.memory_space<semaphore_mem>>
    tpu.wait_dma2 semaphore(%456 : memref<!tpu.dma_semaphore, #tpu.memory_space<semaphore_mem>>) src(%453 : memref<1x128xf32, #tpu.memory_space<any>>) dst(%454 : memref<1x128xf32, #tpu.memory_space<vmem>>)
    %c38_i32_336 = arith.constant 38 : i32
    %c0_i32_337 = arith.constant 0 : i32
    %457 = tpu.memref_slice %arg2[%276, %c0_i32_337] : memref<1001x128xf32, #tpu.memory_space<any>> -> memref<1x128xf32, #tpu.memory_space<any>>
    %c38_i32_338 = arith.constant 38 : i32
    %c0_i32_339 = arith.constant 0 : i32
    %458 = tpu.memref_slice %arg4[%c38_i32_338, %c0_i32_339] : memref<40x128xf32, #tpu.memory_space<vmem>> -> memref<1x128xf32, #tpu.memory_space<vmem>>
    %459 = tpu.memref_slice %arg5[%c38_i32_336] : memref<40x!tpu.dma_semaphore, #tpu.memory_space<semaphore_mem>> -> memref<1x!tpu.dma_semaphore, #tpu.memory_space<semaphore_mem>>
    %460 = tpu.memref_squeeze %459 : memref<1x!tpu.dma_semaphore, #tpu.memory_space<semaphore_mem>> -> memref<!tpu.dma_semaphore, #tpu.memory_space<semaphore_mem>>
    tpu.wait_dma2 semaphore(%460 : memref<!tpu.dma_semaphore, #tpu.memory_space<semaphore_mem>>) src(%457 : memref<1x128xf32, #tpu.memory_space<any>>) dst(%458 : memref<1x128xf32, #tpu.memory_space<vmem>>)
    %c7_i32_340 = arith.constant 7 : i32
    %c0_i32_341 = arith.constant 0 : i32
    %461 = tpu.memref_slice %arg2[%284, %c0_i32_341] : memref<1001x128xf32, #tpu.memory_space<any>> -> memref<1x128xf32, #tpu.memory_space<any>>
    %c7_i32_342 = arith.constant 7 : i32
    %c0_i32_343 = arith.constant 0 : i32
    %462 = tpu.memref_slice %arg4[%c7_i32_342, %c0_i32_343] : memref<40x128xf32, #tpu.memory_space<vmem>> -> memref<1x128xf32, #tpu.memory_space<vmem>>
    %463 = tpu.memref_slice %arg5[%c7_i32_340] : memref<40x!tpu.dma_semaphore, #tpu.memory_space<semaphore_mem>> -> memref<1x!tpu.dma_semaphore, #tpu.memory_space<semaphore_mem>>
    %464 = tpu.memref_squeeze %463 : memref<1x!tpu.dma_semaphore, #tpu.memory_space<semaphore_mem>> -> memref<!tpu.dma_semaphore, #tpu.memory_space<semaphore_mem>>
    tpu.wait_dma2 semaphore(%464 : memref<!tpu.dma_semaphore, #tpu.memory_space<semaphore_mem>>) src(%461 : memref<1x128xf32, #tpu.memory_space<any>>) dst(%462 : memref<1x128xf32, #tpu.memory_space<vmem>>)
    %c15_i32_344 = arith.constant 15 : i32
    %c0_i32_345 = arith.constant 0 : i32
    %465 = tpu.memref_slice %arg2[%292, %c0_i32_345] : memref<1001x128xf32, #tpu.memory_space<any>> -> memref<1x128xf32, #tpu.memory_space<any>>
    %c15_i32_346 = arith.constant 15 : i32
    %c0_i32_347 = arith.constant 0 : i32
    %466 = tpu.memref_slice %arg4[%c15_i32_346, %c0_i32_347] : memref<40x128xf32, #tpu.memory_space<vmem>> -> memref<1x128xf32, #tpu.memory_space<vmem>>
    %467 = tpu.memref_slice %arg5[%c15_i32_344] : memref<40x!tpu.dma_semaphore, #tpu.memory_space<semaphore_mem>> -> memref<1x!tpu.dma_semaphore, #tpu.memory_space<semaphore_mem>>
    %468 = tpu.memref_squeeze %467 : memref<1x!tpu.dma_semaphore, #tpu.memory_space<semaphore_mem>> -> memref<!tpu.dma_semaphore, #tpu.memory_space<semaphore_mem>>
    tpu.wait_dma2 semaphore(%468 : memref<!tpu.dma_semaphore, #tpu.memory_space<semaphore_mem>>) src(%465 : memref<1x128xf32, #tpu.memory_space<any>>) dst(%466 : memref<1x128xf32, #tpu.memory_space<vmem>>)
    %c23_i32_348 = arith.constant 23 : i32
    %c0_i32_349 = arith.constant 0 : i32
    %469 = tpu.memref_slice %arg2[%300, %c0_i32_349] : memref<1001x128xf32, #tpu.memory_space<any>> -> memref<1x128xf32, #tpu.memory_space<any>>
    %c23_i32_350 = arith.constant 23 : i32
    %c0_i32_351 = arith.constant 0 : i32
    %470 = tpu.memref_slice %arg4[%c23_i32_350, %c0_i32_351] : memref<40x128xf32, #tpu.memory_space<vmem>> -> memref<1x128xf32, #tpu.memory_space<vmem>>
    %471 = tpu.memref_slice %arg5[%c23_i32_348] : memref<40x!tpu.dma_semaphore, #tpu.memory_space<semaphore_mem>> -> memref<1x!tpu.dma_semaphore, #tpu.memory_space<semaphore_mem>>
    %472 = tpu.memref_squeeze %471 : memref<1x!tpu.dma_semaphore, #tpu.memory_space<semaphore_mem>> -> memref<!tpu.dma_semaphore, #tpu.memory_space<semaphore_mem>>
    tpu.wait_dma2 semaphore(%472 : memref<!tpu.dma_semaphore, #tpu.memory_space<semaphore_mem>>) src(%469 : memref<1x128xf32, #tpu.memory_space<any>>) dst(%470 : memref<1x128xf32, #tpu.memory_space<vmem>>)
    %c31_i32_352 = arith.constant 31 : i32
    %c0_i32_353 = arith.constant 0 : i32
    %473 = tpu.memref_slice %arg2[%308, %c0_i32_353] : memref<1001x128xf32, #tpu.memory_space<any>> -> memref<1x128xf32, #tpu.memory_space<any>>
    %c31_i32_354 = arith.constant 31 : i32
    %c0_i32_355 = arith.constant 0 : i32
    %474 = tpu.memref_slice %arg4[%c31_i32_354, %c0_i32_355] : memref<40x128xf32, #tpu.memory_space<vmem>> -> memref<1x128xf32, #tpu.memory_space<vmem>>
    %475 = tpu.memref_slice %arg5[%c31_i32_352] : memref<40x!tpu.dma_semaphore, #tpu.memory_space<semaphore_mem>> -> memref<1x!tpu.dma_semaphore, #tpu.memory_space<semaphore_mem>>
    %476 = tpu.memref_squeeze %475 : memref<1x!tpu.dma_semaphore, #tpu.memory_space<semaphore_mem>> -> memref<!tpu.dma_semaphore, #tpu.memory_space<semaphore_mem>>
    tpu.wait_dma2 semaphore(%476 : memref<!tpu.dma_semaphore, #tpu.memory_space<semaphore_mem>>) src(%473 : memref<1x128xf32, #tpu.memory_space<any>>) dst(%474 : memref<1x128xf32, #tpu.memory_space<vmem>>)
    %c39_i32_356 = arith.constant 39 : i32
    %c0_i32_357 = arith.constant 0 : i32
    %477 = tpu.memref_slice %arg2[%316, %c0_i32_357] : memref<1001x128xf32, #tpu.memory_space<any>> -> memref<1x128xf32, #tpu.memory_space<any>>
    %c39_i32_358 = arith.constant 39 : i32
    %c0_i32_359 = arith.constant 0 : i32
    %478 = tpu.memref_slice %arg4[%c39_i32_358, %c0_i32_359] : memref<40x128xf32, #tpu.memory_space<vmem>> -> memref<1x128xf32, #tpu.memory_space<vmem>>
    %479 = tpu.memref_slice %arg5[%c39_i32_356] : memref<40x!tpu.dma_semaphore, #tpu.memory_space<semaphore_mem>> -> memref<1x!tpu.dma_semaphore, #tpu.memory_space<semaphore_mem>>
    %480 = tpu.memref_squeeze %479 : memref<1x!tpu.dma_semaphore, #tpu.memory_space<semaphore_mem>> -> memref<!tpu.dma_semaphore, #tpu.memory_space<semaphore_mem>>
    tpu.wait_dma2 semaphore(%480 : memref<!tpu.dma_semaphore, #tpu.memory_space<semaphore_mem>>) src(%477 : memref<1x128xf32, #tpu.memory_space<any>>) dst(%478 : memref<1x128xf32, #tpu.memory_space<vmem>>)
    %c0 = arith.constant 0 : index
    %c0_360 = arith.constant 0 : index
    %481 = vector.load %arg4[%c0, %c0_360] : memref<40x128xf32, #tpu.memory_space<vmem>>, vector<8x128xf32>
    %c8 = arith.constant 8 : index
    %c0_361 = arith.constant 0 : index
    %482 = vector.load %arg4[%c8, %c0_361] : memref<40x128xf32, #tpu.memory_space<vmem>>, vector<8x128xf32>
    %483 = arith.addf %481, %482 : vector<8x128xf32>
    %c16 = arith.constant 16 : index
    %c0_362 = arith.constant 0 : index
    %484 = vector.load %arg4[%c16, %c0_362] : memref<40x128xf32, #tpu.memory_space<vmem>>, vector<8x128xf32>
    %485 = arith.addf %483, %484 : vector<8x128xf32>
    %c24 = arith.constant 24 : index
    %c0_363 = arith.constant 0 : index
    %486 = vector.load %arg4[%c24, %c0_363] : memref<40x128xf32, #tpu.memory_space<vmem>>, vector<8x128xf32>
    %487 = arith.addf %485, %486 : vector<8x128xf32>
    %c32 = arith.constant 32 : index
    %c0_364 = arith.constant 0 : index
    %488 = vector.load %arg4[%c32, %c0_364] : memref<40x128xf32, #tpu.memory_space<vmem>>, vector<8x128xf32>
    %489 = arith.addf %487, %488 : vector<8x128xf32>
    %cst = arith.constant 2.000000e-01 : f32
    %490 = vector.broadcast %cst : f32 to vector<8x128xf32>
    %491 = arith.mulf %489, %490 : vector<8x128xf32>
    %492 = arith.truncf %491 : vector<8x128xf32> to vector<8x128xbf16>
    %c0_365 = arith.constant 0 : index
    %c0_366 = arith.constant 0 : index
    %493 = vector.load %arg3[%c0_365, %c0_366] : memref<8x128xbf16, #tpu.memory_space<vmem>>, vector<8x128xbf16>
    tpu.vector_store %arg3[%c0_365, %c0_366], %492 {strides = array<i32>} : memref<8x128xbf16, #tpu.memory_space<vmem>>, vector<8x128xbf16>,
    return
  }
  func.func @transform_1(%arg0: i32, %arg1: memref<80xi32, #tpu.memory_space<smem>>) -> (i32, i32) {
    %c0_i32 = arith.constant 0 : i32
    %c0_i32_0 = arith.constant 0 : i32
    return %arg0, %c0_i32 : i32, i32
  }
}

</mosaic_0001>

<llo_original>
// kernel: tpu_custom_call.1
$region0: #{tpu_custom_call.1}
  #allocation0 [shape = 'u32[]', space=smem, size = 0x4, offset = 0x4, fixed_abs, tag = 'smem constant byte address 0x4 - core index']
  #allocation1 [shape = 'u32[144,128]{1,0:T(1,128)}', space=vmem, size = 0x12000, scoped, tag = 'internal scratch']
  #allocation2 [shape = 'f32[40,128]{1,0:T(8,128)}', space=vmem, size = 0x5000, scoped, tag = 'scratch operand']
  #allocation3 [shape = 's32[40]{0}', space=sflag, size = 0xa0, scoped, tag = 'scratch operand']
  #allocation4 [shape = 's32[1]{0}', space=sflag, size = 0x4, scoped, tag = 'scoped memory for tpu_custom_call.1']
  #allocation5 [shape = 'u8[512]{0}', space=smem, size = 0x200, scoped, tag = 'prefetched SMEM operand 0']
  #allocation8 [shape = 's32[]', space=sflag, size = 0x4, offset = 0, fixed_abs, tag = 'sflag constant byte address 0x0 - dummy sync flag']
  #allocation9 [shape = 's32[]', space=sflag, size = 0x4, offset = 0, fixed_abs, tag = 'sflag constant byte address 0x0 - dummy sync flag']
  #allocation10 [shape = 'u32[]', space=smem, size = 0x4, offset = 0x44, fixed_abs, tag = 'smem constant byte address 0x44 - assertion arg 0']
  #allocation11 [shape = 'u32[]', space=smem, size = 0x4, offset = 0x48, fixed_abs, tag = 'smem constant byte address 0x48 - assertion arg 1']
  #allocation12 [shape = 's32[]', space=sflag, size = 0x4, offset = 0, fixed_abs, tag = 'sflag constant byte address 0x0 - dummy sync flag']
  #allocation13 [shape = 's32[]', space=sflag, size = 0x4, offset = 0, fixed_abs, tag = 'sflag constant byte address 0x0 - dummy sync flag']
  #allocation14 [shape = 's32[]', space=sflag, size = 0x4, offset = 0, fixed_abs, tag = 'sflag constant byte address 0x0 - dummy sync flag']
  #allocation15 [shape = 's32[]', space=sflag, size = 0x4, offset = 0, fixed_abs, tag = 'sflag constant byte address 0x0 - dummy sync flag']
  #allocation16 [shape = 's32[]', space=sflag, size = 0x4, offset = 0, fixed_abs, tag = 'sflag constant byte address 0x0 - dummy sync flag']
  #allocation17 [shape = 's32[]', space=sflag, size = 0x4, offset = 0, fixed_abs, tag = 'sflag constant byte address 0x0 - dummy sync flag']
  #allocation18 [shape = 's32[]', space=sflag, size = 0x4, offset = 0, fixed_abs, tag = 'sflag constant byte address 0x0 - dummy sync flag']
  #allocation19 [shape = 's32[]', space=sflag, size = 0x4, offset = 0, fixed_abs, tag = 'sflag constant byte address 0x0 - dummy sync flag']
  #allocation20 [shape = 's32[]', space=sflag, size = 0x4, offset = 0, fixed_abs, tag = 'sflag constant byte address 0x0 - dummy sync flag']
  #allocation21 [shape = 's32[]', space=sflag, size = 0x4, offset = 0, fixed_abs, tag = 'sflag constant byte address 0x0 - dummy sync flag']
  #allocation22 [shape = 's32[]', space=sflag, size = 0x4, offset = 0, fixed_abs, tag = 'sflag constant byte address 0x0 - dummy sync flag']
  #allocation23 [shape = 's32[]', space=sflag, size = 0x4, offset = 0, fixed_abs, tag = 'sflag constant byte address 0x0 - dummy sync flag']
  #allocation24 [shape = 's32[]', space=sflag, size = 0x4, offset = 0, fixed_abs, tag = 'sflag constant byte address 0x0 - dummy sync flag']
  #allocation25 [shape = 's32[]', space=sflag, size = 0x4, offset = 0, fixed_abs, tag = 'sflag constant byte address 0x0 - dummy sync flag']
  #allocation26 [shape = 's32[]', space=sflag, size = 0x4, offset = 0, fixed_abs, tag = 'sflag constant byte address 0x0 - dummy sync flag']
  #allocation27 [shape = 's32[]', space=sflag, size = 0x4, offset = 0, fixed_abs, tag = 'sflag constant byte address 0x0 - dummy sync flag']
  #allocation28 [shape = 's32[]', space=sflag, size = 0x4, offset = 0, fixed_abs, tag = 'sflag constant byte address 0x0 - dummy sync flag']
  #allocation29 [shape = 's32[]', space=sflag, size = 0x4, offset = 0, fixed_abs, tag = 'sflag constant byte address 0x0 - dummy sync flag']
  #allocation30 [shape = 's32[]', space=sflag, size = 0x4, offset = 0, fixed_abs, tag = 'sflag constant byte address 0x0 - dummy sync flag']
  #allocation31 [shape = 's32[]', space=sflag, size = 0x4, offset = 0, fixed_abs, tag = 'sflag constant byte address 0x0 - dummy sync flag']
  #allocation32 [shape = 's32[]', space=sflag, size = 0x4, offset = 0, fixed_abs, tag = 'sflag constant byte address 0x0 - dummy sync flag']
  #allocation33 [shape = 's32[]', space=sflag, size = 0x4, offset = 0, fixed_abs, tag = 'sflag constant byte address 0x0 - dummy sync flag']
  #allocation34 [shape = 's32[]', space=sflag, size = 0x4, offset = 0, fixed_abs, tag = 'sflag constant byte address 0x0 - dummy sync flag']
  #allocation35 [shape = 's32[]', space=sflag, size = 0x4, offset = 0, fixed_abs, tag = 'sflag constant byte address 0x0 - dummy sync flag']
  #allocation36 [shape = 's32[]', space=sflag, size = 0x4, offset = 0, fixed_abs, tag = 'sflag constant byte address 0x0 - dummy sync flag']
  #allocation37 [shape = 's32[]', space=sflag, size = 0x4, offset = 0, fixed_abs, tag = 'sflag constant byte address 0x0 - dummy sync flag']
  #allocation38 [shape = 's32[]', space=sflag, size = 0x4, offset = 0, fixed_abs, tag = 'sflag constant byte address 0x0 - dummy sync flag']
  #allocation39 [shape = 's32[]', space=sflag, size = 0x4, offset = 0, fixed_abs, tag = 'sflag constant byte address 0x0 - dummy sync flag']
  #allocation40 [shape = 's32[]', space=sflag, size = 0x4, offset = 0, fixed_abs, tag = 'sflag constant byte address 0x0 - dummy sync flag']
  #allocation41 [shape = 's32[]', space=sflag, size = 0x4, offset = 0, fixed_abs, tag = 'sflag constant byte address 0x0 - dummy sync flag']
  #allocation42 [shape = 's32[]', space=sflag, size = 0x4, offset = 0, fixed_abs, tag = 'sflag constant byte address 0x0 - dummy sync flag']
  #allocation43 [shape = 's32[]', space=sflag, size = 0x4, offset = 0, fixed_abs, tag = 'sflag constant byte address 0x0 - dummy sync flag']
  #allocation44 [shape = 's32[]', space=sflag, size = 0x4, offset = 0, fixed_abs, tag = 'sflag constant byte address 0x0 - dummy sync flag']
  #allocation45 [shape = 's32[]', space=sflag, size = 0x4, offset = 0, fixed_abs, tag = 'sflag constant byte address 0x0 - dummy sync flag']
  #allocation46 [shape = 's32[]', space=sflag, size = 0x4, offset = 0, fixed_abs, tag = 'sflag constant byte address 0x0 - dummy sync flag']
  #allocation47 [shape = 's32[]', space=sflag, size = 0x4, offset = 0, fixed_abs, tag = 'sflag constant byte address 0x0 - dummy sync flag']
  #allocation48 [shape = 's32[]', space=sflag, size = 0x4, offset = 0, fixed_abs, tag = 'sflag constant byte address 0x0 - dummy sync flag']
  #allocation49 [shape = 's32[]', space=sflag, size = 0x4, offset = 0, fixed_abs, tag = 'sflag constant byte address 0x0 - dummy sync flag']
  #allocation50 [shape = 's32[]', space=sflag, size = 0x4, offset = 0, fixed_abs, tag = 'sflag constant byte address 0x0 - dummy sync flag']
  #allocation51 [shape = 's32[]', space=sflag, size = 0x4, offset = 0, fixed_abs, tag = 'sflag constant byte address 0x0 - dummy sync flag']
  #allocation52 [shape = 's32[]', space=sflag, size = 0x4, offset = 0, fixed_abs, tag = 'sflag constant byte address 0x0 - dummy sync flag']
  #allocation53 [shape = 's32[]', space=sflag, size = 0x4, offset = 0, fixed_abs, tag = 'sflag constant byte address 0x0 - dummy sync flag']
  #allocation54 [shape = 's32[]', space=sflag, size = 0x4, offset = 0, fixed_abs, tag = 'sflag constant byte address 0x0 - dummy sync flag']
  #allocation55 [shape = 's32[]', space=sflag, size = 0x4, offset = 0, fixed_abs, tag = 'sflag constant byte address 0x0 - dummy sync flag']
  #allocation56 [shape = 's32[]', space=sflag, size = 0x4, offset = 0, fixed_abs, tag = 'sflag constant byte address 0x0 - dummy sync flag']
  #allocation57 [shape = 's32[]', space=sflag, size = 0x4, offset = 0, fixed_abs, tag = 'sflag constant byte address 0x0 - dummy sync flag']
  #allocation58 [shape = 's32[]', space=sflag, size = 0x4, offset = 0, fixed_abs, tag = 'sflag constant byte address 0x0 - dummy sync flag']
  #allocation59 [shape = 's32[]', space=sflag, size = 0x4, offset = 0, fixed_abs, tag = 'sflag constant byte address 0x0 - dummy sync flag']
  #allocation60 [shape = 's32[]', space=sflag, size = 0x4, offset = 0, fixed_abs, tag = 'sflag constant byte address 0x0 - dummy sync flag']
  #allocation61 [shape = 's32[]', space=sflag, size = 0x4, offset = 0, fixed_abs, tag = 'sflag constant byte address 0x0 - dummy sync flag']
  #allocation62 [shape = 's32[]', space=sflag, size = 0x4, offset = 0, fixed_abs, tag = 'sflag constant byte address 0x0 - dummy sync flag']
  #allocation63 [shape = 's32[]', space=sflag, size = 0x4, offset = 0, fixed_abs, tag = 'sflag constant byte address 0x0 - dummy sync flag']
  #allocation64 [shape = 's32[]', space=sflag, size = 0x4, offset = 0, fixed_abs, tag = 'sflag constant byte address 0x0 - dummy sync flag']
  #allocation65 [shape = 's32[]', space=sflag, size = 0x4, offset = 0, fixed_abs, tag = 'sflag constant byte address 0x0 - dummy sync flag']
  #allocation66 [shape = 's32[]', space=sflag, size = 0x4, offset = 0, fixed_abs, tag = 'sflag constant byte address 0x0 - dummy sync flag']
  #allocation67 [shape = 's32[]', space=sflag, size = 0x4, offset = 0, fixed_abs, tag = 'sflag constant byte address 0x0 - dummy sync flag']
  #allocation68 [shape = 's32[]', space=sflag, size = 0x4, offset = 0, fixed_abs, tag = 'sflag constant byte address 0x0 - dummy sync flag']
  #allocation69 [shape = 's32[]', space=sflag, size = 0x4, offset = 0, fixed_abs, tag = 'sflag constant byte address 0x0 - dummy sync flag']
  #allocation70 [shape = 's32[]', space=sflag, size = 0x4, offset = 0, fixed_abs, tag = 'sflag constant byte address 0x0 - dummy sync flag']
  #allocation71 [shape = 's32[]', space=sflag, size = 0x4, offset = 0, fixed_abs, tag = 'sflag constant byte address 0x0 - dummy sync flag']
  #allocation72 [shape = 's32[]', space=sflag, size = 0x4, offset = 0, fixed_abs, tag = 'sflag constant byte address 0x0 - dummy sync flag']
  #allocation73 [shape = 's32[]', space=sflag, size = 0x4, offset = 0, fixed_abs, tag = 'sflag constant byte address 0x0 - dummy sync flag']
  #allocation74 [shape = 's32[]', space=sflag, size = 0x4, offset = 0, fixed_abs, tag = 'sflag constant byte address 0x0 - dummy sync flag']
  #allocation75 [shape = 's32[]', space=sflag, size = 0x4, offset = 0, fixed_abs, tag = 'sflag constant byte address 0x0 - dummy sync flag']
  #allocation76 [shape = 's32[]', space=sflag, size = 0x4, offset = 0, fixed_abs, tag = 'sflag constant byte address 0x0 - dummy sync flag']
  #allocation77 [shape = 's32[]', space=sflag, size = 0x4, offset = 0, fixed_abs, tag = 'sflag constant byte address 0x0 - dummy sync flag']
  #allocation78 [shape = 's32[]', space=sflag, size = 0x4, offset = 0, fixed_abs, tag = 'sflag constant byte address 0x0 - dummy sync flag']
  #allocation79 [shape = 's32[]', space=sflag, size = 0x4, offset = 0, fixed_abs, tag = 'sflag constant byte address 0x0 - dummy sync flag']
  #allocation80 [shape = 's32[]', space=sflag, size = 0x4, offset = 0, fixed_abs, tag = 'sflag constant byte address 0x0 - dummy sync flag']
  #allocation81 [shape = 's32[]', space=sflag, size = 0x4, offset = 0, fixed_abs, tag = 'sflag constant byte address 0x0 - dummy sync flag']
  #allocation82 [shape = 's32[]', space=sflag, size = 0x4, offset = 0, fixed_abs, tag = 'sflag constant byte address 0x0 - dummy sync flag']
  #allocation83 [shape = 's32[]', space=sflag, size = 0x4, offset = 0, fixed_abs, tag = 'sflag constant byte address 0x0 - dummy sync flag']
  #allocation84 [shape = 's32[]', space=sflag, size = 0x4, offset = 0, fixed_abs, tag = 'sflag constant byte address 0x0 - dummy sync flag']
  #allocation85 [shape = 's32[]', space=sflag, size = 0x4, offset = 0, fixed_abs, tag = 'sflag constant byte address 0x0 - dummy sync flag']
  #allocation86 [shape = 's32[]', space=sflag, size = 0x4, offset = 0, fixed_abs, tag = 'sflag constant byte address 0x0 - dummy sync flag']
  #allocation87 [shape = 's32[]', space=sflag, size = 0x4, offset = 0, fixed_abs, tag = 'sflag constant byte address 0x0 - dummy sync flag']
  #allocation88 [shape = 's32[]', space=sflag, size = 0x4, offset = 0, fixed_abs, tag = 'sflag constant byte address 0x0 - dummy sync flag']
  #allocation89 [shape = 's32[]', space=sflag, size = 0x4, offset = 0, fixed_abs, tag = 'sflag constant byte address 0x0 - dummy sync flag']
  %s0 = inlined_call_operand.hbm [shape: s32[80], index: 0, kind: input, shape index: {}]
  %s1 = inlined_call_operand.hbm [shape: f32[1001,128], index: 1, kind: input, shape index: {}]
  %s2 = inlined_call_operand.hbm [shape: bf16[16,128], index: 2, kind: output, shape index: {}]
  %s3 = sld [smem:[#allocation0]]
  $region185: #{tpu_custom_call.1} parent=0
    _
  %s5 = ssub.s32 1, %s3
  %s6 = scalar_select 0, %s5, %s3
  %8 = dma.hbm_to_smem %s0, 16, [#allocation5], [#allocation4]
  %9 = dma.done [#allocation4], 16
  %10 = sfence
  $region1: #{tpu_custom_call.1} parent=0
    #allocation6 [shape = 'u8[4096]{0}', space=vmem, size = 0x1000, scoped, tag = 'output window, operand 0']
    #allocation7 [shape = 's32[2]{0}', space=sflag, size = 0x8, scoped, tag = 'scoped memory for tpu_custom_call.1']
    %11 = vsyncpa [#allocation7], 0
    %s12 = scalar_lea.sflag [#allocation7], 1
    %13 = vsyncpa %s12, 0
    loop: start=0, step=1, limit=3
    $region2: #{tpu_custom_call.1} parent=1 // loop_pre_header
      _
    $region3: #{tpu_custom_call.1} parent=1 // loop_header
      %s15 = sphi 0, %s19
      %p16 = scmp.ge.s32.totalorder %s15, 3
      %s24 = sphi 0, %s26
      %s27 = sphi 0, %s24
      %s37 = sphi 0, %s27
    $region4: #{tpu_custom_call.1} parent=1 // loop_header_branch
      %18 = sbr.rel (%p16) target = $region8
    $region5: #{tpu_custom_call.1} parent=1 // loop_body
      %s20 = ssub.s32 %s15, 1
      %s21 = sadd.s32 %s15, 1
      %s22 = ssub.s32 %s15, %s21
      %p23 = scmp.eq.s32.totalorder %s22, 0
      %s25 = sadd.s32 %s24, 1
      %s26 = scalar_select %p23, %s24, %s25
      %p28 = pneg %p23
      %p29 = scmp.eq.s32.totalorder %s15, 1
      %p30 = por %p28, %p29
      %p31 = scmp.ne.s32.totalorder %s24, %s27
      %p32 = scmp.eq.s32.totalorder %s15, 0
      %p33 = por %p31, %p32
      %p34 = scmp.ne.s32.totalorder %s24, %s27
      %p35 = scmp.eq.s32.totalorder %s20, 1
      %p36 = por %p34, %p35
      %p38 = scmp.ne.s32.totalorder %s27, %s37
      %p39 = scmp.eq.s32.totalorder %s20, 0
      %p40 = por %p38, %p39
      %p41 = scmp.lt.s32.totalorder %s15, 2
      // Predicated region
      $region9: #{tpu_custom_call.1} parent=5 // pred_check
        %p42 = pneg %p41
      $region10: #{tpu_custom_call.1} parent=5 // pred_check_branch
        %44 = sbr.rel (%p42) target = $region12
      $region11: #{tpu_custom_call.1} parent=5 // pred_region
        %p45 = pneg %p33
        %p46 = pneg %p30
        %s47 = sand.u32 %s24, 1
        %s48 = scalar_lea.sflag [#allocation7], %s47
        %s49 = sand.u32 %s24, 1
        %s50 = smul.addr %s49, 4
        %s51 = scalar_lea.vmem [#allocation6], %s50
        %s52 = smul.u32 %s15, 40
        %s53 = sld [smem:[#allocation5 + %s52]]
        %s54 = smul.addr %s53, 16
        %s55 = scalar_lea.hbm %s1, %s54
        // Predicated region
        $region13: #{tpu_custom_call.1} parent=11 // pred_check
          _
        $region14: #{tpu_custom_call.1} parent=11 // pred_check_branch
          %57 = sbr.rel target = $region16
        $region15: #{tpu_custom_call.1} parent=11 // pred_region
          %58 = sst [smem:[#allocation10]] [#allocation9]
          %59 = sst [smem:[#allocation11]] [#allocation8]
        $region16: #{tpu_custom_call.1} parent=11 // pred_fallthru
          _
        %61 = shalt.err (0)
        %s63 = sshll.u32 [#allocation2], 4
        %s64 = int_to_ptr.vmem [resolvable:$true] %s63
        %66 = dma.hbm_to_vmem [thread:$0]  %s55, 16, %s64, [#allocation3]
        %s67 = sadd.s32 %s52, 1
        %s68 = sld [smem:[#allocation5 + %s67]]
        %s69 = smul.addr %s68, 16
        %s70 = scalar_lea.hbm %s1, %s69
        %s71 = scalar_lea.vmem [#allocation2], 8
        %s72 = scalar_lea.sflag [#allocation3], 8
        // Predicated region
        $region17: #{tpu_custom_call.1} parent=11 // pred_check
          _
        $region18: #{tpu_custom_call.1} parent=11 // pred_check_branch
          %74 = sbr.rel target = $region20
        $region19: #{tpu_custom_call.1} parent=11 // pred_region
          %75 = sst [smem:[#allocation10]] [#allocation13]
          %76 = sst [smem:[#allocation11]] [#allocation12]
        $region20: #{tpu_custom_call.1} parent=11 // pred_fallthru
          _
        %78 = shalt.err (0)
        %s80 = sshll.u32 %s71, 4
        %s81 = int_to_ptr.vmem [resolvable:$true] %s80
        %83 = dma.hbm_to_vmem [thread:$0]  %s70, 16, %s81, %s72
        %s84 = sadd.s32 %s52, 2
        %s85 = sld [smem:[#allocation5 + %s84]]
        %s86 = smul.addr %s85, 16
        %s87 = scalar_lea.hbm %s1, %s86
        %s88 = scalar_lea.vmem [#allocation2], 16
        %s89 = scalar_lea.sflag [#allocation3], 16
        // Predicated region
        $region21: #{tpu_custom_call.1} parent=11 // pred_check
          _
        $region22: #{tpu_custom_call.1} parent=11 // pred_check_branch
          %91 = sbr.rel target = $region24
        $region23: #{tpu_custom_call.1} parent=11 // pred_region
          %92 = sst [smem:[#allocation10]] [#allocation15]
          %93 = sst [smem:[#allocation11]] [#allocation14]
        $region24: #{tpu_custom_call.1} parent=11 // pred_fallthru
          _
        %95 = shalt.err (0)
        %s97 = sshll.u32 %s88, 4
        %s98 = int_to_ptr.vmem [resolvable:$true] %s97
        %100 = dma.hbm_to_vmem [thread:$0]  %s87, 16, %s98, %s89
        %s101 = sadd.s32 %s52, 3
        %s102 = sld [smem:[#allocation5 + %s101]]
        %s103 = smul.addr %s102, 16
        %s104 = scalar_lea.hbm %s1, %s103
        %s105 = scalar_lea.vmem [#allocation2], 24
        %s106 = scalar_lea.sflag [#allocation3], 24
        // Predicated region
        $region25: #{tpu_custom_call.1} parent=11 // pred_check
          _
        $region26: #{tpu_custom_call.1} parent=11 // pred_check_branch
          %108 = sbr.rel target = $region28
        $region27: #{tpu_custom_call.1} parent=11 // pred_region
          %109 = sst [smem:[#allocation10]] [#allocation17]
          %110 = sst [smem:[#allocation11]] [#allocation16]
        $region28: #{tpu_custom_call.1} parent=11 // pred_fallthru
          _
        %112 = shalt.err (0)
        %s114 = sshll.u32 %s105, 4
        %s115 = int_to_ptr.vmem [resolvable:$true] %s114
        %117 = dma.hbm_to_vmem [thread:$0]  %s104, 16, %s115, %s106
        %s118 = sadd.s32 %s52, 4
        %s119 = sld [smem:[#allocation5 + %s118]]
        %s120 = smul.addr %s119, 16
        %s121 = scalar_lea.hbm %s1, %s120
        %s122 = scalar_lea.vmem [#allocation2], 32
        %s123 = scalar_lea.sflag [#allocation3], 32
        // Predicated region
        $region29: #{tpu_custom_call.1} parent=11 // pred_check
          _
        $region30: #{tpu_custom_call.1} parent=11 // pred_check_branch
          %125 = sbr.rel target = $region32
        $region31: #{tpu_custom_call.1} parent=11 // pred_region
          %126 = sst [smem:[#allocation10]] [#allocation19]
          %127 = sst [smem:[#allocation11]] [#allocation18]
        $region32: #{tpu_custom_call.1} parent=11 // pred_fallthru
          _
        %129 = shalt.err (0)
        %s131 = sshll.u32 %s122, 4
        %s132 = int_to_ptr.vmem [resolvable:$true] %s131
        %134 = dma.hbm_to_vmem [thread:$0]  %s121, 16, %s132, %s123
        %s135 = sadd.s32 %s52, 5
        %s136 = sld [smem:[#allocation5 + %s135]]
        %s137 = smul.addr %s136, 16
        %s138 = scalar_lea.hbm %s1, %s137
        %s139 = scalar_lea.vmem [#allocation2], 1
        %s140 = scalar_lea.sflag [#allocation3], 1
        // Predicated region
        $region33: #{tpu_custom_call.1} parent=11 // pred_check
          _
        $region34: #{tpu_custom_call.1} parent=11 // pred_check_branch
          %142 = sbr.rel target = $region36
        $region35: #{tpu_custom_call.1} parent=11 // pred_region
          %143 = sst [smem:[#allocation10]] [#allocation21]
          %144 = sst [smem:[#allocation11]] [#allocation20]
        $region36: #{tpu_custom_call.1} parent=11 // pred_fallthru
          _
        %146 = shalt.err (0)
        %s148 = sshll.u32 %s139, 4
        %s149 = int_to_ptr.vmem [resolvable:$true] %s148
        %151 = dma.hbm_to_vmem [thread:$0]  %s138, 16, %s149, %s140
        %s152 = sadd.s32 %s52, 6
        %s153 = sld [smem:[#allocation5 + %s152]]
        %s154 = smul.addr %s153, 16
        %s155 = scalar_lea.hbm %s1, %s154
        %s156 = scalar_lea.vmem [#allocation2], 9
        %s157 = scalar_lea.sflag [#allocation3], 9
        // Predicated region
        $region37: #{tpu_custom_call.1} parent=11 // pred_check
          _
        $region38: #{tpu_custom_call.1} parent=11 // pred_check_branch
          %159 = sbr.rel target = $region40
        $region39: #{tpu_custom_call.1} parent=11 // pred_region
          %160 = sst [smem:[#allocation10]] [#allocation23]
          %161 = sst [smem:[#allocation11]] [#allocation22]
        $region40: #{tpu_custom_call.1} parent=11 // pred_fallthru
          _
        %163 = shalt.err (0)
        %s165 = sshll.u32 %s156, 4
        %s166 = int_to_ptr.vmem [resolvable:$true] %s165
        %168 = dma.hbm_to_vmem [thread:$0]  %s155, 16, %s166, %s157
        %s169 = sadd.s32 %s52, 7
        %s170 = sld [smem:[#allocation5 + %s169]]
        %s171 = smul.addr %s170, 16
        %s172 = scalar_lea.hbm %s1, %s171
        %s173 = scalar_lea.vmem [#allocation2], 17
        %s174 = scalar_lea.sflag [#allocation3], 17
        // Predicated region
        $region41: #{tpu_custom_call.1} parent=11 // pred_check
          _
        $region42: #{tpu_custom_call.1} parent=11 // pred_check_branch
          %176 = sbr.rel target = $region44
        $region43: #{tpu_custom_call.1} parent=11 // pred_region
          %177 = sst [smem:[#allocation10]] [#allocation25]
          %178 = sst [smem:[#allocation11]] [#allocation24]
        $region44: #{tpu_custom_call.1} parent=11 // pred_fallthru
          _
        %180 = shalt.err (0)
        %s182 = sshll.u32 %s173, 4
        %s183 = int_to_ptr.vmem [resolvable:$true] %s182
        %185 = dma.hbm_to_vmem [thread:$0]  %s172, 16, %s183, %s174
        %s186 = sadd.s32 %s52, 8
        %s187 = sld [smem:[#allocation5 + %s186]]
        %s188 = smul.addr %s187, 16
        %s189 = scalar_lea.hbm %s1, %s188
        %s190 = scalar_lea.vmem [#allocation2], 25
        %s191 = scalar_lea.sflag [#allocation3], 25
        // Predicated region
        $region45: #{tpu_custom_call.1} parent=11 // pred_check
          _
        $region46: #{tpu_custom_call.1} parent=11 // pred_check_branch
          %193 = sbr.rel target = $region48
        $region47: #{tpu_custom_call.1} parent=11 // pred_region
          %194 = sst [smem:[#allocation10]] [#allocation27]
          %195 = sst [smem:[#allocation11]] [#allocation26]
        $region48: #{tpu_custom_call.1} parent=11 // pred_fallthru
          _
        %197 = shalt.err (0)
        %s199 = sshll.u32 %s190, 4
        %s200 = int_to_ptr.vmem [resolvable:$true] %s199
        %202 = dma.hbm_to_vmem [thread:$0]  %s189, 16, %s200, %s191
        %s203 = sadd.s32 %s52, 9
        %s204 = sld [smem:[#allocation5 + %s203]]
        %s205 = smul.addr %s204, 16
        %s206 = scalar_lea.hbm %s1, %s205
        %s207 = scalar_lea.vmem [#allocation2], 33
        %s208 = scalar_lea.sflag [#allocation3], 33
        // Predicated region
        $region49: #{tpu_custom_call.1} parent=11 // pred_check
          _
        $region50: #{tpu_custom_call.1} parent=11 // pred_check_branch
          %210 = sbr.rel target = $region52
        $region51: #{tpu_custom_call.1} parent=11 // pred_region
          %211 = sst [smem:[#allocation10]] [#allocation29]
          %212 = sst [smem:[#allocation11]] [#allocation28]
        $region52: #{tpu_custom_call.1} parent=11 // pred_fallthru
          _
        %214 = shalt.err (0)
        %s216 = sshll.u32 %s207, 4
        %s217 = int_to_ptr.vmem [resolvable:$true] %s216
        %219 = dma.hbm_to_vmem [thread:$0]  %s206, 16, %s217, %s208
        %s220 = sadd.s32 %s52, 10
        %s221 = sld [smem:[#allocation5 + %s220]]
        %s222 = smul.addr %s221, 16
        %s223 = scalar_lea.hbm %s1, %s222
        %s224 = scalar_lea.vmem [#allocation2], 2
        %s225 = scalar_lea.sflag [#allocation3], 2
        // Predicated region
        $region53: #{tpu_custom_call.1} parent=11 // pred_check
          _
        $region54: #{tpu_custom_call.1} parent=11 // pred_check_branch
          %227 = sbr.rel target = $region56
        $region55: #{tpu_custom_call.1} parent=11 // pred_region
          %228 = sst [smem:[#allocation10]] [#allocation31]
          %229 = sst [smem:[#allocation11]] [#allocation30]
        $region56: #{tpu_custom_call.1} parent=11 // pred_fallthru
          _
        %231 = shalt.err (0)
        %s233 = sshll.u32 %s224, 4
        %s234 = int_to_ptr.vmem [resolvable:$true] %s233
        %236 = dma.hbm_to_vmem [thread:$0]  %s223, 16, %s234, %s225
        %s237 = sadd.s32 %s52, 11
        %s238 = sld [smem:[#allocation5 + %s237]]
        %s239 = smul.addr %s238, 16
        %s240 = scalar_lea.hbm %s1, %s239
        %s241 = scalar_lea.vmem [#allocation2], 10
        %s242 = scalar_lea.sflag [#allocation3], 10
        // Predicated region
        $region57: #{tpu_custom_call.1} parent=11 // pred_check
          _
        $region58: #{tpu_custom_call.1} parent=11 // pred_check_branch
          %244 = sbr.rel target = $region60
        $region59: #{tpu_custom_call.1} parent=11 // pred_region
          %245 = sst [smem:[#allocation10]] [#allocation33]
          %246 = sst [smem:[#allocation11]] [#allocation32]
        $region60: #{tpu_custom_call.1} parent=11 // pred_fallthru
          _
        %248 = shalt.err (0)
        %s250 = sshll.u32 %s241, 4
        %s251 = int_to_ptr.vmem [resolvable:$true] %s250
        %253 = dma.hbm_to_vmem [thread:$0]  %s240, 16, %s251, %s242
        %s254 = sadd.s32 %s52, 12
        %s255 = sld [smem:[#allocation5 + %s254]]
        %s256 = smul.addr %s255, 16
        %s257 = scalar_lea.hbm %s1, %s256
        %s258 = scalar_lea.vmem [#allocation2], 18
        %s259 = scalar_lea.sflag [#allocation3], 18
        // Predicated region
        $region61: #{tpu_custom_call.1} parent=11 // pred_check
          _
        $region62: #{tpu_custom_call.1} parent=11 // pred_check_branch
          %261 = sbr.rel target = $region64
        $region63: #{tpu_custom_call.1} parent=11 // pred_region
          %262 = sst [smem:[#allocation10]] [#allocation35]
          %263 = sst [smem:[#allocation11]] [#allocation34]
        $region64: #{tpu_custom_call.1} parent=11 // pred_fallthru
          _
        %265 = shalt.err (0)
        %s267 = sshll.u32 %s258, 4
        %s268 = int_to_ptr.vmem [resolvable:$true] %s267
        %270 = dma.hbm_to_vmem [thread:$0]  %s257, 16, %s268, %s259
        %s271 = sadd.s32 %s52, 13
        %s272 = sld [smem:[#allocation5 + %s271]]
        %s273 = smul.addr %s272, 16
        %s274 = scalar_lea.hbm %s1, %s273
        %s275 = scalar_lea.vmem [#allocation2], 26
        %s276 = scalar_lea.sflag [#allocation3], 26
        // Predicated region
        $region65: #{tpu_custom_call.1} parent=11 // pred_check
          _
        $region66: #{tpu_custom_call.1} parent=11 // pred_check_branch
          %278 = sbr.rel target = $region68
        $region67: #{tpu_custom_call.1} parent=11 // pred_region
          %279 = sst [smem:[#allocation10]] [#allocation37]
          %280 = sst [smem:[#allocation11]] [#allocation36]
        $region68: #{tpu_custom_call.1} parent=11 // pred_fallthru
          _
        %282 = shalt.err (0)
        %s284 = sshll.u32 %s275, 4
        %s285 = int_to_ptr.vmem [resolvable:$true] %s284
        %287 = dma.hbm_to_vmem [thread:$0]  %s274, 16, %s285, %s276
        %s288 = sadd.s32 %s52, 14
        %s289 = sld [smem:[#allocation5 + %s288]]
        %s290 = smul.addr %s289, 16
        %s291 = scalar_lea.hbm %s1, %s290
        %s292 = scalar_lea.vmem [#allocation2], 34
        %s293 = scalar_lea.sflag [#allocation3], 34
        // Predicated region
        $region69: #{tpu_custom_call.1} parent=11 // pred_check
          _
        $region70: #{tpu_custom_call.1} parent=11 // pred_check_branch
          %295 = sbr.rel target = $region72
        $region71: #{tpu_custom_call.1} parent=11 // pred_region
          %296 = sst [smem:[#allocation10]] [#allocation39]
          %297 = sst [smem:[#allocation11]] [#allocation38]
        $region72: #{tpu_custom_call.1} parent=11 // pred_fallthru
          _
        %299 = shalt.err (0)
        %s301 = sshll.u32 %s292, 4
        %s302 = int_to_ptr.vmem [resolvable:$true] %s301
        %304 = dma.hbm_to_vmem [thread:$0]  %s291, 16, %s302, %s293
        %s305 = sadd.s32 %s52, 15
        %s306 = sld [smem:[#allocation5 + %s305]]
        %s307 = smul.addr %s306, 16
        %s308 = scalar_lea.hbm %s1, %s307
        %s309 = scalar_lea.vmem [#allocation2], 3
        %s310 = scalar_lea.sflag [#allocation3], 3
        // Predicated region
        $region73: #{tpu_custom_call.1} parent=11 // pred_check
          _
        $region74: #{tpu_custom_call.1} parent=11 // pred_check_branch
          %312 = sbr.rel target = $region76
        $region75: #{tpu_custom_call.1} parent=11 // pred_region
          %313 = sst [smem:[#allocation10]] [#allocation41]
          %314 = sst [smem:[#allocation11]] [#allocation40]
        $region76: #{tpu_custom_call.1} parent=11 // pred_fallthru
          _
        %316 = shalt.err (0)
        %s318 = sshll.u32 %s309, 4
        %s319 = int_to_ptr.vmem [resolvable:$true] %s318
        %321 = dma.hbm_to_vmem [thread:$0]  %s308, 16, %s319, %s310
        %s322 = sadd.s32 %s52, 16
        %s323 = sld [smem:[#allocation5 + %s322]]
        %s324 = smul.addr %s323, 16
        %s325 = scalar_lea.hbm %s1, %s324
        %s326 = scalar_lea.vmem [#allocation2], 11
        %s327 = scalar_lea.sflag [#allocation3], 11
        // Predicated region
        $region77: #{tpu_custom_call.1} parent=11 // pred_check
          _
        $region78: #{tpu_custom_call.1} parent=11 // pred_check_branch
          %329 = sbr.rel target = $region80
        $region79: #{tpu_custom_call.1} parent=11 // pred_region
          %330 = sst [smem:[#allocation10]] [#allocation43]
          %331 = sst [smem:[#allocation11]] [#allocation42]
        $region80: #{tpu_custom_call.1} parent=11 // pred_fallthru
          _
        %333 = shalt.err (0)
        %s335 = sshll.u32 %s326, 4
        %s336 = int_to_ptr.vmem [resolvable:$true] %s335
        %338 = dma.hbm_to_vmem [thread:$0]  %s325, 16, %s336, %s327
        %s339 = sadd.s32 %s52, 17
        %s340 = sld [smem:[#allocation5 + %s339]]
        %s341 = smul.addr %s340, 16
        %s342 = scalar_lea.hbm %s1, %s341
        %s343 = scalar_lea.vmem [#allocation2], 19
        %s344 = scalar_lea.sflag [#allocation3], 19
        // Predicated region
        $region81: #{tpu_custom_call.1} parent=11 // pred_check
          _
        $region82: #{tpu_custom_call.1} parent=11 // pred_check_branch
          %346 = sbr.rel target = $region84
        $region83: #{tpu_custom_call.1} parent=11 // pred_region
          %347 = sst [smem:[#allocation10]] [#allocation45]
          %348 = sst [smem:[#allocation11]] [#allocation44]
        $region84: #{tpu_custom_call.1} parent=11 // pred_fallthru
          _
        %350 = shalt.err (0)
        %s352 = sshll.u32 %s343, 4
        %s353 = int_to_ptr.vmem [resolvable:$true] %s352
        %355 = dma.hbm_to_vmem [thread:$0]  %s342, 16, %s353, %s344
        %s356 = sadd.s32 %s52, 18
        %s357 = sld [smem:[#allocation5 + %s356]]
        %s358 = smul.addr %s357, 16
        %s359 = scalar_lea.hbm %s1, %s358
        %s360 = scalar_lea.vmem [#allocation2], 27
        %s361 = scalar_lea.sflag [#allocation3], 27
        // Predicated region
        $region85: #{tpu_custom_call.1} parent=11 // pred_check
          _
        $region86: #{tpu_custom_call.1} parent=11 // pred_check_branch
          %363 = sbr.rel target = $region88
        $region87: #{tpu_custom_call.1} parent=11 // pred_region
          %364 = sst [smem:[#allocation10]] [#allocation47]
          %365 = sst [smem:[#allocation11]] [#allocation46]
        $region88: #{tpu_custom_call.1} parent=11 // pred_fallthru
          _
        %367 = shalt.err (0)
        %s369 = sshll.u32 %s360, 4
        %s370 = int_to_ptr.vmem [resolvable:$true] %s369
        %372 = dma.hbm_to_vmem [thread:$0]  %s359, 16, %s370, %s361
        %s373 = sadd.s32 %s52, 19
        %s374 = sld [smem:[#allocation5 + %s373]]
        %s375 = smul.addr %s374, 16
        %s376 = scalar_lea.hbm %s1, %s375
        %s377 = scalar_lea.vmem [#allocation2], 35
        %s378 = scalar_lea.sflag [#allocation3], 35
        // Predicated region
        $region89: #{tpu_custom_call.1} parent=11 // pred_check
          _
        $region90: #{tpu_custom_call.1} parent=11 // pred_check_branch
          %380 = sbr.rel target = $region92
        $region91: #{tpu_custom_call.1} parent=11 // pred_region
          %381 = sst [smem:[#allocation10]] [#allocation49]
          %382 = sst [smem:[#allocation11]] [#allocation48]
        $region92: #{tpu_custom_call.1} parent=11 // pred_fallthru
          _
        %384 = shalt.err (0)
        %s386 = sshll.u32 %s377, 4
        %s387 = int_to_ptr.vmem [resolvable:$true] %s386
        %389 = dma.hbm_to_vmem [thread:$0]  %s376, 16, %s387, %s378
        %s390 = sadd.s32 %s52, 20
        %s391 = sld [smem:[#allocation5 + %s390]]
        %s392 = smul.addr %s391, 16
        %s393 = scalar_lea.hbm %s1, %s392
        %s394 = scalar_lea.vmem [#allocation2], 4
        %s395 = scalar_lea.sflag [#allocation3], 4
        // Predicated region
        $region93: #{tpu_custom_call.1} parent=11 // pred_check
          _
        $region94: #{tpu_custom_call.1} parent=11 // pred_check_branch
          %397 = sbr.rel target = $region96
        $region95: #{tpu_custom_call.1} parent=11 // pred_region
          %398 = sst [smem:[#allocation10]] [#allocation51]
          %399 = sst [smem:[#allocation11]] [#allocation50]
        $region96: #{tpu_custom_call.1} parent=11 // pred_fallthru
          _
        %401 = shalt.err (0)
        %s403 = sshll.u32 %s394, 4
        %s404 = int_to_ptr.vmem [resolvable:$true] %s403
        %406 = dma.hbm_to_vmem [thread:$0]  %s393, 16, %s404, %s395
        %s407 = sadd.s32 %s52, 21
        %s408 = sld [smem:[#allocation5 + %s407]]
        %s409 = smul.addr %s408, 16
        %s410 = scalar_lea.hbm %s1, %s409
        %s411 = scalar_lea.vmem [#allocation2], 12
        %s412 = scalar_lea.sflag [#allocation3], 12
        // Predicated region
        $region97: #{tpu_custom_call.1} parent=11 // pred_check
          _
        $region98: #{tpu_custom_call.1} parent=11 // pred_check_branch
          %414 = sbr.rel target = $region100
        $region99: #{tpu_custom_call.1} parent=11 // pred_region
          %415 = sst [smem:[#allocation10]] [#allocation53]
          %416 = sst [smem:[#allocation11]] [#allocation52]
        $region100: #{tpu_custom_call.1} parent=11 // pred_fallthru
          _
        %418 = shalt.err (0)
        %s420 = sshll.u32 %s411, 4
        %s421 = int_to_ptr.vmem [resolvable:$true] %s420
        %423 = dma.hbm_to_vmem [thread:$0]  %s410, 16, %s421, %s412
        %s424 = sadd.s32 %s52, 22
        %s425 = sld [smem:[#allocation5 + %s424]]
        %s426 = smul.addr %s425, 16
        %s427 = scalar_lea.hbm %s1, %s426
        %s428 = scalar_lea.vmem [#allocation2], 20
        %s429 = scalar_lea.sflag [#allocation3], 20
        // Predicated region
        $region101: #{tpu_custom_call.1} parent=11 // pred_check
          _
        $region102: #{tpu_custom_call.1} parent=11 // pred_check_branch
          %431 = sbr.rel target = $region104
        $region103: #{tpu_custom_call.1} parent=11 // pred_region
          %432 = sst [smem:[#allocation10]] [#allocation55]
          %433 = sst [smem:[#allocation11]] [#allocation54]
        $region104: #{tpu_custom_call.1} parent=11 // pred_fallthru
          _
        %435 = shalt.err (0)
        %s437 = sshll.u32 %s428, 4
        %s438 = int_to_ptr.vmem [resolvable:$true] %s437
        %440 = dma.hbm_to_vmem [thread:$0]  %s427, 16, %s438, %s429
        %s441 = sadd.s32 %s52, 23
        %s442 = sld [smem:[#allocation5 + %s441]]
        %s443 = smul.addr %s442, 16
        %s444 = scalar_lea.hbm %s1, %s443
        %s445 = scalar_lea.vmem [#allocation2], 28
        %s446 = scalar_lea.sflag [#allocation3], 28
        // Predicated region
        $region105: #{tpu_custom_call.1} parent=11 // pred_check
          _
        $region106: #{tpu_custom_call.1} parent=11 // pred_check_branch
          %448 = sbr.rel target = $region108
        $region107: #{tpu_custom_call.1} parent=11 // pred_region
          %449 = sst [smem:[#allocation10]] [#allocation57]
          %450 = sst [smem:[#allocation11]] [#allocation56]
        $region108: #{tpu_custom_call.1} parent=11 // pred_fallthru
          _
        %452 = shalt.err (0)
        %s454 = sshll.u32 %s445, 4
        %s455 = int_to_ptr.vmem [resolvable:$true] %s454
        %457 = dma.hbm_to_vmem [thread:$0]  %s444, 16, %s455, %s446
        %s458 = sadd.s32 %s52, 24
        %s459 = sld [smem:[#allocation5 + %s458]]
        %s460 = smul.addr %s459, 16
        %s461 = scalar_lea.hbm %s1, %s460
        %s462 = scalar_lea.vmem [#allocation2], 36
        %s463 = scalar_lea.sflag [#allocation3], 36
        // Predicated region
        $region109: #{tpu_custom_call.1} parent=11 // pred_check
          _
        $region110: #{tpu_custom_call.1} parent=11 // pred_check_branch
          %465 = sbr.rel target = $region112
        $region111: #{tpu_custom_call.1} parent=11 // pred_region
          %466 = sst [smem:[#allocation10]] [#allocation59]
          %467 = sst [smem:[#allocation11]] [#allocation58]
        $region112: #{tpu_custom_call.1} parent=11 // pred_fallthru
          _
        %469 = shalt.err (0)
        %s471 = sshll.u32 %s462, 4
        %s472 = int_to_ptr.vmem [resolvable:$true] %s471
        %474 = dma.hbm_to_vmem [thread:$0]  %s461, 16, %s472, %s463
        %s475 = sadd.s32 %s52, 25
        %s476 = sld [smem:[#allocation5 + %s475]]
        %s477 = smul.addr %s476, 16
        %s478 = scalar_lea.hbm %s1, %s477
        %s479 = scalar_lea.vmem [#allocation2], 5
        %s480 = scalar_lea.sflag [#allocation3], 5
        // Predicated region
        $region113: #{tpu_custom_call.1} parent=11 // pred_check
          _
        $region114: #{tpu_custom_call.1} parent=11 // pred_check_branch
          %482 = sbr.rel target = $region116
        $region115: #{tpu_custom_call.1} parent=11 // pred_region
          %483 = sst [smem:[#allocation10]] [#allocation61]
          %484 = sst [smem:[#allocation11]] [#allocation60]
        $region116: #{tpu_custom_call.1} parent=11 // pred_fallthru
          _
        %486 = shalt.err (0)
        %s488 = sshll.u32 %s479, 4
        %s489 = int_to_ptr.vmem [resolvable:$true] %s488
        %491 = dma.hbm_to_vmem [thread:$0]  %s478, 16, %s489, %s480
        %s492 = sadd.s32 %s52, 26
        %s493 = sld [smem:[#allocation5 + %s492]]
        %s494 = smul.addr %s493, 16
        %s495 = scalar_lea.hbm %s1, %s494
        %s496 = scalar_lea.vmem [#allocation2], 13
        %s497 = scalar_lea.sflag [#allocation3], 13
        // Predicated region
        $region117: #{tpu_custom_call.1} parent=11 // pred_check
          _
        $region118: #{tpu_custom_call.1} parent=11 // pred_check_branch
          %499 = sbr.rel target = $region120
        $region119: #{tpu_custom_call.1} parent=11 // pred_region
          %500 = sst [smem:[#allocation10]] [#allocation63]
          %501 = sst [smem:[#allocation11]] [#allocation62]
        $region120: #{tpu_custom_call.1} parent=11 // pred_fallthru
          _
        %503 = shalt.err (0)
        %s505 = sshll.u32 %s496, 4
        %s506 = int_to_ptr.vmem [resolvable:$true] %s505
        %508 = dma.hbm_to_vmem [thread:$0]  %s495, 16, %s506, %s497
        %s509 = sadd.s32 %s52, 27
        %s510 = sld [smem:[#allocation5 + %s509]]
        %s511 = smul.addr %s510, 16
        %s512 = scalar_lea.hbm %s1, %s511
        %s513 = scalar_lea.vmem [#allocation2], 21
        %s514 = scalar_lea.sflag [#allocation3], 21
        // Predicated region
        $region121: #{tpu_custom_call.1} parent=11 // pred_check
          _
        $region122: #{tpu_custom_call.1} parent=11 // pred_check_branch
          %516 = sbr.rel target = $region124
        $region123: #{tpu_custom_call.1} parent=11 // pred_region
          %517 = sst [smem:[#allocation10]] [#allocation65]
          %518 = sst [smem:[#allocation11]] [#allocation64]
        $region124: #{tpu_custom_call.1} parent=11 // pred_fallthru
          _
        %520 = shalt.err (0)
        %s522 = sshll.u32 %s513, 4
        %s523 = int_to_ptr.vmem [resolvable:$true] %s522
        %525 = dma.hbm_to_vmem [thread:$0]  %s512, 16, %s523, %s514
        %s526 = sadd.s32 %s52, 28
        %s527 = sld [smem:[#allocation5 + %s526]]
        %s528 = smul.addr %s527, 16
        %s529 = scalar_lea.hbm %s1, %s528
        %s530 = scalar_lea.vmem [#allocation2], 29
        %s531 = scalar_lea.sflag [#allocation3], 29
        // Predicated region
        $region125: #{tpu_custom_call.1} parent=11 // pred_check
          _
        $region126: #{tpu_custom_call.1} parent=11 // pred_check_branch
          %533 = sbr.rel target = $region128
        $region127: #{tpu_custom_call.1} parent=11 // pred_region
          %534 = sst [smem:[#allocation10]] [#allocation67]
          %535 = sst [smem:[#allocation11]] [#allocation66]
        $region128: #{tpu_custom_call.1} parent=11 // pred_fallthru
          _
        %537 = shalt.err (0)
        %s539 = sshll.u32 %s530, 4
        %s540 = int_to_ptr.vmem [resolvable:$true] %s539
        %542 = dma.hbm_to_vmem [thread:$0]  %s529, 16, %s540, %s531
        %s543 = sadd.s32 %s52, 29
        %s544 = sld [smem:[#allocation5 + %s543]]
        %s545 = smul.addr %s544, 16
        %s546 = scalar_lea.hbm %s1, %s545
        %s547 = scalar_lea.vmem [#allocation2], 37
        %s548 = scalar_lea.sflag [#allocation3], 37
        // Predicated region
        $region129: #{tpu_custom_call.1} parent=11 // pred_check
          _
        $region130: #{tpu_custom_call.1} parent=11 // pred_check_branch
          %550 = sbr.rel target = $region132
        $region131: #{tpu_custom_call.1} parent=11 // pred_region
          %551 = sst [smem:[#allocation10]] [#allocation69]
          %552 = sst [smem:[#allocation11]] [#allocation68]
        $region132: #{tpu_custom_call.1} parent=11 // pred_fallthru
          _
        %554 = shalt.err (0)
        %s556 = sshll.u32 %s547, 4
        %s557 = int_to_ptr.vmem [resolvable:$true] %s556
        %559 = dma.hbm_to_vmem [thread:$0]  %s546, 16, %s557, %s548
        %s560 = sadd.s32 %s52, 30
        %s561 = sld [smem:[#allocation5 + %s560]]
        %s562 = smul.addr %s561, 16
        %s563 = scalar_lea.hbm %s1, %s562
        %s564 = scalar_lea.vmem [#allocation2], 6
        %s565 = scalar_lea.sflag [#allocation3], 6
        // Predicated region
        $region133: #{tpu_custom_call.1} parent=11 // pred_check
          _
        $region134: #{tpu_custom_call.1} parent=11 // pred_check_branch
          %567 = sbr.rel target = $region136
        $region135: #{tpu_custom_call.1} parent=11 // pred_region
          %568 = sst [smem:[#allocation10]] [#allocation71]
          %569 = sst [smem:[#allocation11]] [#allocation70]
        $region136: #{tpu_custom_call.1} parent=11 // pred_fallthru
          _
        %571 = shalt.err (0)
        %s573 = sshll.u32 %s564, 4
        %s574 = int_to_ptr.vmem [resolvable:$true] %s573
        %576 = dma.hbm_to_vmem [thread:$0]  %s563, 16, %s574, %s565
        %s577 = sadd.s32 %s52, 31
        %s578 = sld [smem:[#allocation5 + %s577]]
        %s579 = smul.addr %s578, 16
        %s580 = scalar_lea.hbm %s1, %s579
        %s581 = scalar_lea.vmem [#allocation2], 14
        %s582 = scalar_lea.sflag [#allocation3], 14
        // Predicated region
        $region137: #{tpu_custom_call.1} parent=11 // pred_check
          _
        $region138: #{tpu_custom_call.1} parent=11 // pred_check_branch
          %584 = sbr.rel target = $region140
        $region139: #{tpu_custom_call.1} parent=11 // pred_region
          %585 = sst [smem:[#allocation10]] [#allocation73]
          %586 = sst [smem:[#allocation11]] [#allocation72]
        $region140: #{tpu_custom_call.1} parent=11 // pred_fallthru
          _
        %588 = shalt.err (0)
        %s590 = sshll.u32 %s581, 4
        %s591 = int_to_ptr.vmem [resolvable:$true] %s590
        %593 = dma.hbm_to_vmem [thread:$0]  %s580, 16, %s591, %s582
        %s594 = sadd.s32 %s52, 32
        %s595 = sld [smem:[#allocation5 + %s594]]
        %s596 = smul.addr %s595, 16
        %s597 = scalar_lea.hbm %s1, %s596
        %s598 = scalar_lea.vmem [#allocation2], 22
        %s599 = scalar_lea.sflag [#allocation3], 22
        // Predicated region
        $region141: #{tpu_custom_call.1} parent=11 // pred_check
          _
        $region142: #{tpu_custom_call.1} parent=11 // pred_check_branch
          %601 = sbr.rel target = $region144
        $region143: #{tpu_custom_call.1} parent=11 // pred_region
          %602 = sst [smem:[#allocation10]] [#allocation75]
          %603 = sst [smem:[#allocation11]] [#allocation74]
        $region144: #{tpu_custom_call.1} parent=11 // pred_fallthru
          _
        %605 = shalt.err (0)
        %s607 = sshll.u32 %s598, 4
        %s608 = int_to_ptr.vmem [resolvable:$true] %s607
        %610 = dma.hbm_to_vmem [thread:$0]  %s597, 16, %s608, %s599
        %s611 = sadd.s32 %s52, 33
        %s612 = sld [smem:[#allocation5 + %s611]]
        %s613 = smul.addr %s612, 16
        %s614 = scalar_lea.hbm %s1, %s613
        %s615 = scalar_lea.vmem [#allocation2], 30
        %s616 = scalar_lea.sflag [#allocation3], 30
        // Predicated region
        $region145: #{tpu_custom_call.1} parent=11 // pred_check
          _
        $region146: #{tpu_custom_call.1} parent=11 // pred_check_branch
          %618 = sbr.rel target = $region148
        $region147: #{tpu_custom_call.1} parent=11 // pred_region
          %619 = sst [smem:[#allocation10]] [#allocation77]
          %620 = sst [smem:[#allocation11]] [#allocation76]
        $region148: #{tpu_custom_call.1} parent=11 // pred_fallthru
          _
        %622 = shalt.err (0)
        %s624 = sshll.u32 %s615, 4
        %s625 = int_to_ptr.vmem [resolvable:$true] %s624
        %627 = dma.hbm_to_vmem [thread:$0]  %s614, 16, %s625, %s616
        %s628 = sadd.s32 %s52, 34
        %s629 = sld [smem:[#allocation5 + %s628]]
        %s630 = smul.addr %s629, 16
        %s631 = scalar_lea.hbm %s1, %s630
        %s632 = scalar_lea.vmem [#allocation2], 38
        %s633 = scalar_lea.sflag [#allocation3], 38
        // Predicated region
        $region149: #{tpu_custom_call.1} parent=11 // pred_check
          _
        $region150: #{tpu_custom_call.1} parent=11 // pred_check_branch
          %635 = sbr.rel target = $region152
        $region151: #{tpu_custom_call.1} parent=11 // pred_region
          %636 = sst [smem:[#allocation10]] [#allocation79]
          %637 = sst [smem:[#allocation11]] [#allocation78]
        $region152: #{tpu_custom_call.1} parent=11 // pred_fallthru
          _
        %639 = shalt.err (0)
        %s641 = sshll.u32 %s632, 4
        %s642 = int_to_ptr.vmem [resolvable:$true] %s641
        %644 = dma.hbm_to_vmem [thread:$0]  %s631, 16, %s642, %s633
        %s645 = sadd.s32 %s52, 35
        %s646 = sld [smem:[#allocation5 + %s645]]
        %s647 = smul.addr %s646, 16
        %s648 = scalar_lea.hbm %s1, %s647
        %s649 = scalar_lea.vmem [#allocation2], 7
        %s650 = scalar_lea.sflag [#allocation3], 7
        // Predicated region
        $region153: #{tpu_custom_call.1} parent=11 // pred_check
          _
        $region154: #{tpu_custom_call.1} parent=11 // pred_check_branch
          %652 = sbr.rel target = $region156
        $region155: #{tpu_custom_call.1} parent=11 // pred_region
          %653 = sst [smem:[#allocation10]] [#allocation81]
          %654 = sst [smem:[#allocation11]] [#allocation80]
        $region156: #{tpu_custom_call.1} parent=11 // pred_fallthru
          _
        %656 = shalt.err (0)
        %s658 = sshll.u32 %s649, 4
        %s659 = int_to_ptr.vmem [resolvable:$true] %s658
        %661 = dma.hbm_to_vmem [thread:$0]  %s648, 16, %s659, %s650
        %s662 = sadd.s32 %s52, 36
        %s663 = sld [smem:[#allocation5 + %s662]]
        %s664 = smul.addr %s663, 16
        %s665 = scalar_lea.hbm %s1, %s664
        %s666 = scalar_lea.vmem [#allocation2], 15
        %s667 = scalar_lea.sflag [#allocation3], 15
        // Predicated region
        $region157: #{tpu_custom_call.1} parent=11 // pred_check
          _
        $region158: #{tpu_custom_call.1} parent=11 // pred_check_branch
          %669 = sbr.rel target = $region160
        $region159: #{tpu_custom_call.1} parent=11 // pred_region
          %670 = sst [smem:[#allocation10]] [#allocation83]
          %671 = sst [smem:[#allocation11]] [#allocation82]
        $region160: #{tpu_custom_call.1} parent=11 // pred_fallthru
          _
        %673 = shalt.err (0)
        %s675 = sshll.u32 %s666, 4
        %s676 = int_to_ptr.vmem [resolvable:$true] %s675
        %678 = dma.hbm_to_vmem [thread:$0]  %s665, 16, %s676, %s667
        %s679 = sadd.s32 %s52, 37
        %s680 = sld [smem:[#allocation5 + %s679]]
        %s681 = smul.addr %s680, 16
        %s682 = scalar_lea.hbm %s1, %s681
        %s683 = scalar_lea.vmem [#allocation2], 23
        %s684 = scalar_lea.sflag [#allocation3], 23
        // Predicated region
        $region161: #{tpu_custom_call.1} parent=11 // pred_check
          _
        $region162: #{tpu_custom_call.1} parent=11 // pred_check_branch
          %686 = sbr.rel target = $region164
        $region163: #{tpu_custom_call.1} parent=11 // pred_region
          %687 = sst [smem:[#allocation10]] [#allocation85]
          %688 = sst [smem:[#allocation11]] [#allocation84]
        $region164: #{tpu_custom_call.1} parent=11 // pred_fallthru
          _
        %690 = shalt.err (0)
        %s692 = sshll.u32 %s683, 4
        %s693 = int_to_ptr.vmem [resolvable:$true] %s692
        %695 = dma.hbm_to_vmem [thread:$0]  %s682, 16, %s693, %s684
        %s696 = sadd.s32 %s52, 38
        %s697 = sld [smem:[#allocation5 + %s696]]
        %s698 = smul.addr %s697, 16
        %s699 = scalar_lea.hbm %s1, %s698
        %s700 = scalar_lea.vmem [#allocation2], 31
        %s701 = scalar_lea.sflag [#allocation3], 31
        // Predicated region
        $region165: #{tpu_custom_call.1} parent=11 // pred_check
          _
        $region166: #{tpu_custom_call.1} parent=11 // pred_check_branch
          %703 = sbr.rel target = $region168
        $region167: #{tpu_custom_call.1} parent=11 // pred_region
          %704 = sst [smem:[#allocation10]] [#allocation87]
          %705 = sst [smem:[#allocation11]] [#allocation86]
        $region168: #{tpu_custom_call.1} parent=11 // pred_fallthru
          _
        %707 = shalt.err (0)
        %s709 = sshll.u32 %s700, 4
        %s710 = int_to_ptr.vmem [resolvable:$true] %s709
        %712 = dma.hbm_to_vmem [thread:$0]  %s699, 16, %s710, %s701
        %s713 = sadd.s32 %s52, 39
        %s714 = sld [smem:[#allocation5 + %s713]]
        %s715 = smul.addr %s714, 16
        %s716 = scalar_lea.hbm %s1, %s715
        %s717 = scalar_lea.vmem [#allocation2], 39
        %s718 = scalar_lea.sflag [#allocation3], 39
        // Predicated region
        $region169: #{tpu_custom_call.1} parent=11 // pred_check
          _
        $region170: #{tpu_custom_call.1} parent=11 // pred_check_branch
          %720 = sbr.rel target = $region172
        $region171: #{tpu_custom_call.1} parent=11 // pred_region
          %721 = sst [smem:[#allocation10]] [#allocation89]
          %722 = sst [smem:[#allocation11]] [#allocation88]
        $region172: #{tpu_custom_call.1} parent=11 // pred_fallthru
          _
        %724 = shalt.err (0)
        %s726 = sshll.u32 %s717, 4
        %s727 = int_to_ptr.vmem [resolvable:$true] %s726
        %729 = dma.hbm_to_vmem [thread:$0]  %s716, 16, %s727, %s718
        %s730 = smul.u32 1, 1
        %s731 = sshll.u32 %s730, 4
        %732 = dma.done [#allocation3], %s731
        %s733 = sshll.u32 %s730, 4
        %734 = dma.done %s72, %s733
        %s735 = sshll.u32 %s730, 4
        %736 = dma.done %s89, %s735
        %s737 = sshll.u32 %s730, 4
        %738 = dma.done %s106, %s737
        %s739 = sshll.u32 %s730, 4
        %740 = dma.done %s123, %s739
        %s741 = sshll.u32 %s730, 4
        %742 = dma.done %s140, %s741
        %s743 = sshll.u32 %s730, 4
        %744 = dma.done %s157, %s743
        %s745 = sshll.u32 %s730, 4
        %746 = dma.done %s174, %s745
        %s747 = sshll.u32 %s730, 4
        %748 = dma.done %s191, %s747
        %s749 = sshll.u32 %s730, 4
        %750 = dma.done %s208, %s749
        %s751 = sshll.u32 %s730, 4
        %752 = dma.done %s225, %s751
        %s753 = sshll.u32 %s730, 4
        %754 = dma.done %s242, %s753
        %s755 = sshll.u32 %s730, 4
        %756 = dma.done %s259, %s755
        %s757 = sshll.u32 %s730, 4
        %758 = dma.done %s276, %s757
        %s759 = sshll.u32 %s730, 4
        %760 = dma.done %s293, %s759
        %s761 = sshll.u32 %s730, 4
        %762 = dma.done %s310, %s761
        %s763 = sshll.u32 %s730, 4
        %764 = dma.done %s327, %s763
        %s765 = sshll.u32 %s730, 4
        %766 = dma.done %s344, %s765
        %s767 = sshll.u32 %s730, 4
        %768 = dma.done %s361, %s767
        %s769 = sshll.u32 %s730, 4
        %770 = dma.done %s378, %s769
        %s771 = sshll.u32 %s730, 4
        %772 = dma.done %s395, %s771
        %s773 = sshll.u32 %s730, 4
        %774 = dma.done %s412, %s773
        %s775 = sshll.u32 %s730, 4
        %776 = dma.done %s429, %s775
        %s777 = sshll.u32 %s730, 4
        %778 = dma.done %s446, %s777
        %s779 = sshll.u32 %s730, 4
        %780 = dma.done %s463, %s779
        %s781 = sshll.u32 %s730, 4
        %782 = dma.done %s480, %s781
        %s783 = sshll.u32 %s730, 4
        %784 = dma.done %s497, %s783
        %s785 = sshll.u32 %s730, 4
        %786 = dma.done %s514, %s785
        %s787 = sshll.u32 %s730, 4
        %788 = dma.done %s531, %s787
        %s789 = sshll.u32 %s730, 4
        %790 = dma.done %s548, %s789
        %s791 = sshll.u32 %s730, 4
        %792 = dma.done %s565, %s791
        %s793 = sshll.u32 %s730, 4
        %794 = dma.done %s582, %s793
        %s795 = sshll.u32 %s730, 4
        %796 = dma.done %s599, %s795
        %s797 = sshll.u32 %s730, 4
        %798 = dma.done %s616, %s797
        %s799 = sshll.u32 %s730, 4
        %800 = dma.done %s633, %s799
        %s801 = sshll.u32 %s730, 4
        %802 = dma.done %s650, %s801
        %s803 = sshll.u32 %s730, 4
        %804 = dma.done %s667, %s803
        %s805 = sshll.u32 %s730, 4
        %806 = dma.done %s684, %s805
        %s807 = sshll.u32 %s730, 4
        %808 = dma.done %s701, %s807
        %s809 = sshll.u32 %s730, 4
        %810 = dma.done %s718, %s809
        %v811 = vld [vmem:[#allocation2] sm:$0xff]
        %v812 = vld [vmem:[#allocation2 + $0x8] sm:$0xff]
        %v813 = vadd.f32 %v811, %v812
        %v814 = vld [vmem:[#allocation2 + $0x10] sm:$0xff]
        %v815 = vadd.f32 %v813, %v814
        %v816 = vld [vmem:[#allocation2 + $0x18] sm:$0xff]
        %v817 = vadd.f32 %v815, %v816
        %v818 = vld [vmem:[#allocation2 + $0x20] sm:$0xff]
        %v819 = vadd.f32 %v817, %v818
        %v820 = vmul.f32 %v819, 0.2
        %v821 = vpack.c.bf16 %v820, %v820
        %822 = vst [vmem:[%s51] sm:$0xf] %v821
        %s823 = sand.u32 %s24, 1
        %s824 = scalar_lea.sflag [#allocation7], %s823
        %s825 = sand.u32 %s24, 1
        %s826 = smul.addr %s825, 4
        %s827 = scalar_lea.vmem [#allocation6], %s826
        // Predicated region
        $region173: #{tpu_custom_call.1} parent=11 // pred_check
          %p828 = pneg %p30
        $region174: #{tpu_custom_call.1} parent=11 // pred_check_branch
          %830 = sbr.rel (%p828) target = $region176
        $region175: #{tpu_custom_call.1} parent=11 // pred_region
          %s832 = ssub.s32 64, 64
          %833 = vsyncadd %s824, %s832
          %s834 = smul.addr %s15, 64
          %s835 = scalar_lea.hbm %s2, %s834
          %s837 = sshll.u32 %s827, 4
          %s838 = int_to_ptr.vmem [resolvable:$true] %s837
          %840 = dma.vmem_to_hbm [thread:$0]  %s838, 64, %s835, %s824
        $region176: #{tpu_custom_call.1} parent=11 // pred_fallthru
          _
      $region12: #{tpu_custom_call.1} parent=5 // pred_fallthru
        _
      %p841 = scmp.le.s32.totalorder 1, %s15
      // Predicated region
      $region177: #{tpu_custom_call.1} parent=5 // pred_check
        %p842 = pneg %p841
      $region178: #{tpu_custom_call.1} parent=5 // pred_check_branch
        %844 = sbr.rel (%p842) target = $region180
      $region179: #{tpu_custom_call.1} parent=5 // pred_region
        %s845 = ssub.s32 %s15, 1
        // Predicated region
        $region181: #{tpu_custom_call.1} parent=179 // pred_check
          %p846 = pneg %p36
        $region182: #{tpu_custom_call.1} parent=179 // pred_check_branch
          %848 = sbr.rel (%p846) target = $region184
        $region183: #{tpu_custom_call.1} parent=179 // pred_region
          %s849 = sand.u32 %s27, 1
          %s850 = scalar_lea.sflag [#allocation7], %s849
          %s851 = sand.u32 %s27, 1
          %s852 = smul.addr %s851, 4
          %s853 = scalar_lea.vmem [#allocation6], %s852
          %854 = dma.done %s850, 64
        $region184: #{tpu_custom_call.1} parent=179 // pred_fallthru
          _
      $region180: #{tpu_custom_call.1} parent=5 // pred_fallthru
        _
    $region6: #{tpu_custom_call.1} parent=1 // loop_footer
      %s19 = sadd.s32 1, %s15
    $region7: #{tpu_custom_call.1} parent=1 // loop_footer_branch
      %14 = sbr.rel target = $region3
    $region8: #{tpu_custom_call.1} parent=1 // loop_exit
      _
    %855 = vsyncpa [#allocation7], 1
    %s856 = scalar_lea.sflag [#allocation7], 1
    %857 = vsyncpa %s856, 1
  %858 = vsyncmov [#allocation3]
  %s859 = vpop.sfrf %858
  %p860 = scmp.eq.s32.totalorder %s859, 0
  %p861 = pneg %p860
  %863 = shalt.err (%p861)
  %s864 = scalar_lea.sflag [#allocation3], 1
  %865 = vsyncmov %s864
  %s866 = vpop.sfrf %865
  %p867 = scmp.eq.s32.totalorder %s866, 0
  %p868 = pneg %p867
  %870 = shalt.err (%p868)
  %s871 = scalar_lea.sflag [#allocation3], 2
  %872 = vsyncmov %s871
  %s873 = vpop.sfrf %872
  %p874 = scmp.eq.s32.totalorder %s873, 0
  %p875 = pneg %p874
  %877 = shalt.err (%p875)
  %s878 = scalar_lea.sflag [#allocation3], 3
  %879 = vsyncmov %s878
  %s880 = vpop.sfrf %879
  %p881 = scmp.eq.s32.totalorder %s880, 0
  %p882 = pneg %p881
  %884 = shalt.err (%p882)
  %s885 = scalar_lea.sflag [#allocation3], 4
  %886 = vsyncmov %s885
  %s887 = vpop.sfrf %886
  %p888 = scmp.eq.s32.totalorder %s887, 0
  %p889 = pneg %p888
  %891 = shalt.err (%p889)
  %s892 = scalar_lea.sflag [#allocation3], 5
  %893 = vsyncmov %s892
  %s894 = vpop.sfrf %893
  %p895 = scmp.eq.s32.totalorder %s894, 0
  %p896 = pneg %p895
  %898 = shalt.err (%p896)
  %s899 = scalar_lea.sflag [#allocation3], 6
  %900 = vsyncmov %s899
  %s901 = vpop.sfrf %900
  %p902 = scmp.eq.s32.totalorder %s901, 0
  %p903 = pneg %p902
  %905 = shalt.err (%p903)
  %s906 = scalar_lea.sflag [#allocation3], 7
  %907 = vsyncmov %s906
  %s908 = vpop.sfrf %907
  %p909 = scmp.eq.s32.totalorder %s908, 0
  %p910 = pneg %p909
  %912 = shalt.err (%p910)
  %s913 = scalar_lea.sflag [#allocation3], 8
  %914 = vsyncmov %s913
  %s915 = vpop.sfrf %914
  %p916 = scmp.eq.s32.totalorder %s915, 0
  %p917 = pneg %p916
  %919 = shalt.err (%p917)
  %s920 = scalar_lea.sflag [#allocation3], 9
  %921 = vsyncmov %s920
  %s922 = vpop.sfrf %921
  %p923 = scmp.eq.s32.totalorder %s922, 0
  %p924 = pneg %p923
  %926 = shalt.err (%p924)
  %s927 = scalar_lea.sflag [#allocation3], 10
  %928 = vsyncmov %s927
  %s929 = vpop.sfrf %928
  %p930 = scmp.eq.s32.totalorder %s929, 0
  %p931 = pneg %p930
  %933 = shalt.err (%p931)
  %s934 = scalar_lea.sflag [#allocation3], 11
  %935 = vsyncmov %s934
  %s936 = vpop.sfrf %935
  %p937 = scmp.eq.s32.totalorder %s936, 0
  %p938 = pneg %p937
  %940 = shalt.err (%p938)
  %s941 = scalar_lea.sflag [#allocation3], 12
  %942 = vsyncmov %s941
  %s943 = vpop.sfrf %942
  %p944 = scmp.eq.s32.totalorder %s943, 0
  %p945 = pneg %p944
  %947 = shalt.err (%p945)
  %s948 = scalar_lea.sflag [#allocation3], 13
  %949 = vsyncmov %s948
  %s950 = vpop.sfrf %949
  %p951 = scmp.eq.s32.totalorder %s950, 0
  %p952 = pneg %p951
  %954 = shalt.err (%p952)
  %s955 = scalar_lea.sflag [#allocation3], 14
  %956 = vsyncmov %s955
  %s957 = vpop.sfrf %956
  %p958 = scmp.eq.s32.totalorder %s957, 0
  %p959 = pneg %p958
  %961 = shalt.err (%p959)
  %s962 = scalar_lea.sflag [#allocation3], 15
  %963 = vsyncmov %s962
  %s964 = vpop.sfrf %963
  %p965 = scmp.eq.s32.totalorder %s964, 0
  %p966 = pneg %p965
  %968 = shalt.err (%p966)
  %s969 = scalar_lea.sflag [#allocation3], 16
  %970 = vsyncmov %s969
  %s971 = vpop.sfrf %970
  %p972 = scmp.eq.s32.totalorder %s971, 0
  %p973 = pneg %p972
  %975 = shalt.err (%p973)
  %s976 = scalar_lea.sflag [#allocation3], 17
  %977 = vsyncmov %s976
  %s978 = vpop.sfrf %977
  %p979 = scmp.eq.s32.totalorder %s978, 0
  %p980 = pneg %p979
  %982 = shalt.err (%p980)
  %s983 = scalar_lea.sflag [#allocation3], 18
  %984 = vsyncmov %s983
  %s985 = vpop.sfrf %984
  %p986 = scmp.eq.s32.totalorder %s985, 0
  %p987 = pneg %p986
  %989 = shalt.err (%p987)
  %s990 = scalar_lea.sflag [#allocation3], 19
  %991 = vsyncmov %s990
  %s992 = vpop.sfrf %991
  %p993 = scmp.eq.s32.totalorder %s992, 0
  %p994 = pneg %p993
  %996 = shalt.err (%p994)
  %s997 = scalar_lea.sflag [#allocation3], 20
  %998 = vsyncmov %s997
  %s999 = vpop.sfrf %998
  %p1000 = scmp.eq.s32.totalorder %s999, 0
  %p1001 = pneg %p1000
  %1003 = shalt.err (%p1001)
  %s1004 = scalar_lea.sflag [#allocation3], 21
  %1005 = vsyncmov %s1004
  %s1006 = vpop.sfrf %1005
  %p1007 = scmp.eq.s32.totalorder %s1006, 0
  %p1008 = pneg %p1007
  %1010 = shalt.err (%p1008)
  %s1011 = scalar_lea.sflag [#allocation3], 22
  %1012 = vsyncmov %s1011
  %s1013 = vpop.sfrf %1012
  %p1014 = scmp.eq.s32.totalorder %s1013, 0
  %p1015 = pneg %p1014
  %1017 = shalt.err (%p1015)
  %s1018 = scalar_lea.sflag [#allocation3], 23
  %1019 = vsyncmov %s1018
  %s1020 = vpop.sfrf %1019
  %p1021 = scmp.eq.s32.totalorder %s1020, 0
  %p1022 = pneg %p1021
  %1024 = shalt.err (%p1022)
  %s1025 = scalar_lea.sflag [#allocation3], 24
  %1026 = vsyncmov %s1025
  %s1027 = vpop.sfrf %1026
  %p1028 = scmp.eq.s32.totalorder %s1027, 0
  %p1029 = pneg %p1028
  %1031 = shalt.err (%p1029)
  %s1032 = scalar_lea.sflag [#allocation3], 25
  %1033 = vsyncmov %s1032
  %s1034 = vpop.sfrf %1033
  %p1035 = scmp.eq.s32.totalorder %s1034, 0
  %p1036 = pneg %p1035
  %1038 = shalt.err (%p1036)
  %s1039 = scalar_lea.sflag [#allocation3], 26
  %1040 = vsyncmov %s1039
  %s1041 = vpop.sfrf %1040
  %p1042 = scmp.eq.s32.totalorder %s1041, 0
  %p1043 = pneg %p1042
  %1045 = shalt.err (%p1043)
  %s1046 = scalar_lea.sflag [#allocation3], 27
  %1047 = vsyncmov %s1046
  %s1048 = vpop.sfrf %1047
  %p1049 = scmp.eq.s32.totalorder %s1048, 0
  %p1050 = pneg %p1049
  %1052 = shalt.err (%p1050)
  %s1053 = scalar_lea.sflag [#allocation3], 28
  %1054 = vsyncmov %s1053
  %s1055 = vpop.sfrf %1054
  %p1056 = scmp.eq.s32.totalorder %s1055, 0
  %p1057 = pneg %p1056
  %1059 = shalt.err (%p1057)
  %s1060 = scalar_lea.sflag [#allocation3], 29
  %1061 = vsyncmov %s1060
  %s1062 = vpop.sfrf %1061
  %p1063 = scmp.eq.s32.totalorder %s1062, 0
  %p1064 = pneg %p1063
  %1066 = shalt.err (%p1064)
  %s1067 = scalar_lea.sflag [#allocation3], 30
  %1068 = vsyncmov %s1067
  %s1069 = vpop.sfrf %1068
  %p1070 = scmp.eq.s32.totalorder %s1069, 0
  %p1071 = pneg %p1070
  %1073 = shalt.err (%p1071)
  %s1074 = scalar_lea.sflag [#allocation3], 31
  %1075 = vsyncmov %s1074
  %s1076 = vpop.sfrf %1075
  %p1077 = scmp.eq.s32.totalorder %s1076, 0
  %p1078 = pneg %p1077
  %1080 = shalt.err (%p1078)
  %s1081 = scalar_lea.sflag [#allocation3], 32
  %1082 = vsyncmov %s1081
  %s1083 = vpop.sfrf %1082
  %p1084 = scmp.eq.s32.totalorder %s1083, 0
  %p1085 = pneg %p1084
  %1087 = shalt.err (%p1085)
  %s1088 = scalar_lea.sflag [#allocation3], 33
  %1089 = vsyncmov %s1088
  %s1090 = vpop.sfrf %1089
  %p1091 = scmp.eq.s32.totalorder %s1090, 0
  %p1092 = pneg %p1091
  %1094 = shalt.err (%p1092)
  %s1095 = scalar_lea.sflag [#allocation3], 34
  %1096 = vsyncmov %s1095
  %s1097 = vpop.sfrf %1096
  %p1098 = scmp.eq.s32.totalorder %s1097, 0
  %p1099 = pneg %p1098
  %1101 = shalt.err (%p1099)
  %s1102 = scalar_lea.sflag [#allocation3], 35
  %1103 = vsyncmov %s1102
  %s1104 = vpop.sfrf %1103
  %p1105 = scmp.eq.s32.totalorder %s1104, 0
  %p1106 = pneg %p1105
  %1108 = shalt.err (%p1106)
  %s1109 = scalar_lea.sflag [#allocation3], 36
  %1110 = vsyncmov %s1109
  %s1111 = vpop.sfrf %1110
  %p1112 = scmp.eq.s32.totalorder %s1111, 0
  %p1113 = pneg %p1112
  %1115 = shalt.err (%p1113)
  %s1116 = scalar_lea.sflag [#allocation3], 37
  %1117 = vsyncmov %s1116
  %s1118 = vpop.sfrf %1117
  %p1119 = scmp.eq.s32.totalorder %s1118, 0
  %p1120 = pneg %p1119
  %1122 = shalt.err (%p1120)
  %s1123 = scalar_lea.sflag [#allocation3], 38
  %1124 = vsyncmov %s1123
  %s1125 = vpop.sfrf %1124
  %p1126 = scmp.eq.s32.totalorder %s1125, 0
  %p1127 = pneg %p1126
  %1129 = shalt.err (%p1127)
  %s1130 = scalar_lea.sflag [#allocation3], 39
  %1131 = vsyncmov %s1130
  %s1132 = vpop.sfrf %1131
  %p1133 = scmp.eq.s32.totalorder %s1132, 0
  %p1134 = pneg %p1133
  %1136 = shalt.err (%p1134)

</llo_original>
